<compile_context>
chip_gen: v7x
topology: tpu7x:2x2x1
jax: 0.10.0
libtpu: 0.0.40
codegen_flags: <defaults>
</compile_context>

<pallas_src>
import functools

import jax
import jax.numpy as jnp
import numpy as np
from jax.experimental import pallas as pl
from jax.experimental.pallas import tpu as pltpu


def _rnn_pe_kernel(pos_ref, inv_denom_ref, phase_ref, wih_ref, whh_ref,
                   bih_ref, bhh_ref, wmlp_ref, bmlp_ref, out_ref, *, T, TB):
    dim = wmlp_ref.shape[0]
    f32, bf16 = jnp.float32, jnp.bfloat16

    # ---- sinusoidal PE, batch-on-lanes, kept in vregs (no VMEM round trip) ----
    # cos(x) == sin(x + pi/2); phase / 1/denom are tiny host-precomputed (dim, 1) vectors.
    args = pos_ref[...] * inv_denom_ref[...] + phase_ref[...]          # (1,T*TB)*(dim,1)+(dim,1)
    table = jnp.sin(args)                                              # (dim, T*TB)

    # ---- hoisted input-to-hidden matmul: ONE MXU op, bf16 in / f32 accumulate ----
    gx_all = jnp.dot(wih_ref[...], table.astype(bf16),
                     preferred_element_type=f32)                       # (3*dim, T*TB)

    whh = whh_ref[...]                      # f32: recurrent path stays f32 (no error compounding)
    wmlp = wmlp_ref[...]                    # bf16
    bih, bhh, bmlp = bih_ref[...], bhh_ref[...], bmlp_ref[...]
    # Fold h-independent biases once; b_hn must stay inside r*(.) per the GRU definition.
    b_r = bih[0:dim] + bhh[0:dim]
    b_z = bih[dim:2 * dim] + bhh[dim:2 * dim]
    b_in = bih[2 * dim:3 * dim]
    b_hn = bhh[2 * dim:3 * dim]

    # ---- GRU recurrence, fully unrolled (T static). Critical path per step is only
    # gh = W_hh @ h plus gate VPU/EUP math on (dim, TB) tiles; the gx window slice, the
    # epilogue Linear and its store depend only on already-available values, so the
    # scheduler keeps them off the serial chain. Gates are sublane row blocks -> no lane
    # rotates inside the loop. ----
    h = jnp.zeros((dim, TB), dtype=f32)
    for t in range(T):
        gx = gx_all[:, t * TB:(t + 1) * TB]                            # h-independent window
        gh = jnp.dot(whh, h, preferred_element_type=f32)               # (3*dim, TB), f32
        r = jax.nn.sigmoid(gx[0:dim] + b_r + gh[0:dim])
        z = jax.nn.sigmoid(gx[dim:2 * dim] + b_z + gh[dim:2 * dim])
        n = jnp.tanh(gx[2 * dim:3 * dim] + b_in + r * (gh[2 * dim:3 * dim] + b_hn))
        h = (1.0 - z) * n + z * h                                      # (dim, TB), f32

        # Epilogue Linear(dim -> dim), fused per step (off the serial chain); stores land in a
        # lane-dense (dim, T*TB) output slab -> dense HBM writeback.
        y_t = jnp.dot(wmlp, h.astype(bf16), preferred_element_type=f32) + bmlp
        out_ref[:, t * TB:(t + 1) * TB] = y_t


def _padded_block_bytes(shape, dtype):
    """VMEM bytes for a block after (8/16, 128) tiling of the last two dims."""
    shape = tuple(int(s) for s in shape)
    if len(shape) == 1:
        shape = (1,) + shape
    itemsize = int(np.dtype(dtype).itemsize)
    lead = 1
    for s in shape[:-2]:
        lead *= s
    sub_tile = 8 * max(1, 4 // itemsize)            # f32: 8 sublanes, bf16: 16 (packed)
    sub = -(-shape[-2] // sub_tile) * sub_tile
    lane = -(-shape[-1] // 128) * 128
    return itemsize * lead * sub * lane


def rnn_positional_encoding(pos, denom, w_ih, w_hh, b_ih, b_hh, w_mlp, b_mlp, n_head):
    """Forward pass of RNNPositionalEncoding.  pos: (B, T) float32 -> (B, T, dim * n_head)."""
    B, T = pos.shape
    dim = w_mlp.shape[0]

    # Grid selection: one tile on single-core v5e/v6e (no per-step grid overhead); two
    # lane-aligned tiles only when the batch can feed both v7x TensorCores (batch lives on
    # lanes, so a sub-batch tile must be a multiple of 128).
    if B % 2 == 0 and (B // 2) % 128 == 0:
        TB = B // 2
    else:
        TB = B
    n_tiles = B // TB
    grid = (n_tiles,)

    # Batch-on-lanes, time-major flattening: column index = tile*T*TB + t*TB + b_local.
    pos_flat = (pos.astype(jnp.float32)
                .reshape(n_tiles, TB, T)
                .transpose(0, 2, 1)
                .reshape(1, B * T))
    inv_denom = (1.0 / denom).astype(jnp.float32).reshape(dim, 1)
    phase = ((jnp.arange(dim) % 2).astype(jnp.float32) * np.float32(np.pi / 2.0)).reshape(dim, 1)

    # Pre-cast the big-matmul weights to bf16 in the wrapper; keep the recurrent weight f32.
    wih_bf = w_ih.astype(jnp.bfloat16)
    wmlp_bf = w_mlp.astype(jnp.bfloat16)
    whh_f32 = w_hh.astype(jnp.float32)
    bih2 = b_ih.astype(jnp.float32).reshape(3 * dim, 1)
    bhh2 = b_hh.astype(jnp.float32).reshape(3 * dim, 1)
    bmlp2 = b_mlp.astype(jnp.float32).reshape(dim, 1)

    def _full(shape):
        nd = len(shape)
        return pl.BlockSpec(shape, lambda b: (0,) * nd)

    # VMEM budget: single x2 for double-buffering (counted once), capped below v7x's 64 MiB.
    blocks = [
        ((1, T * TB), jnp.float32), ((dim, 1), jnp.float32), ((dim, 1), jnp.float32),
        ((3 * dim, dim), jnp.bfloat16), ((3 * dim, dim), jnp.float32),
        ((3 * dim, 1), jnp.float32), ((3 * dim, 1), jnp.float32),
        ((dim, dim), jnp.bfloat16), ((dim, 1), jnp.float32),
        ((dim, T * TB), jnp.float32),
    ]
    vmem_bytes = 2 * sum(_padded_block_bytes(s, d) for s, d in blocks)
    vmem_limit = int(min(48 * 1024 * 1024, max(4 * 1024 * 1024, vmem_bytes)))

    grid_spec = pltpu.PrefetchScalarGridSpec(
        num_scalar_prefetch=0,
        grid=grid,
        in_specs=[
            pl.BlockSpec((1, T * TB), lambda b: (0, b)),   # positions (batch-on-lanes, flattened)
            _full((dim, 1)),                               # 1 / denom
            _full((dim, 1)),                               # phase (0 or pi/2)
            _full((3 * dim, dim)),                         # w_ih  (bf16, PyTorch layout)
            _full((3 * dim, dim)),                         # w_hh  (f32,  PyTorch layout)
            _full((3 * dim, 1)),                           # b_ih
            _full((3 * dim, 1)),                           # b_hh
            _full((dim, dim)),                             # w_mlp (bf16, PyTorch layout)
            _full((dim, 1)),                               # b_mlp
        ],
        out_specs=pl.BlockSpec((dim, T * TB), lambda b: (0, b)),   # lane-dense output slab
    )

    y2d = pl.pallas_call(
        functools.partial(_rnn_pe_kernel, T=T, TB=TB),
        out_shape=jax.ShapeDtypeStruct((dim, B * T), jnp.float32),
        grid_spec=grid_spec,
        compiler_params=pltpu.CompilerParams(
            dimension_semantics=("parallel",),             # batch tiles are independent
            vmem_limit_bytes=vmem_limit,
        ),
    )(pos_flat, inv_denom, phase, wih_bf, whh_f32, bih2, bhh2, wmlp_bf, bmlp2)

    # XLA layout plumbing outside the kernel: un-permute the lane-dense slab back to (B, T, dim),
    # then replicate across heads (== torch.cat([y] * n_head, dim=2)) so the kernel only writes
    # 1/n_head of the output bytes.
    y = y2d.reshape(dim, n_tiles, T, TB).transpose(1, 3, 2, 0).reshape(B, T, dim)
    return jnp.broadcast_to(y[:, :, None, :], (B, T, n_head, dim)).reshape(B, T, n_head * dim)


def reference(pos, denom, w_ih, w_hh, b_ih, b_hh, w_mlp, b_mlp, n_head, *, match_kernel=True):
    """Pure-JAX reference matching the PyTorch module semantics.

    match_kernel=True mirrors the kernel's precision (bf16-in/f32-accum for the input and MLP
    matmuls, strict f32 for the recurrent matmul); match_kernel=False is strict f32 throughout.
    """
    dim = w_mlp.shape[0]
    B, T = pos.shape
    if match_kernel:
        mm_x = lambda a, b: jnp.dot(a.astype(jnp.bfloat16), b.astype(jnp.bfloat16),
                                    preferred_element_type=jnp.float32)
    else:
        mm_x = lambda a, b: jnp.dot(a, b, precision=jax.lax.Precision.HIGHEST)
    mm_h = lambda a, b: jnp.dot(a, b, precision=jax.lax.Precision.HIGHEST)

    args = pos[:, :, None] / denom[None, None, :]
    idx = jnp.arange(dim)
    table = jnp.where(idx % 2 == 0, jnp.sin(args), jnp.cos(args))      # (B, T, dim)

    def step(h, x_t):
        gx = mm_x(x_t, w_ih.T) + b_ih
        gh = mm_h(h, w_hh.T) + b_hh
        r = jax.nn.sigmoid(gx[:, :dim] + gh[:, :dim])
        z = jax.nn.sigmoid(gx[:, dim:2 * dim] + gh[:, dim:2 * dim])
        n = jnp.tanh(gx[:, 2 * dim:] + r * gh[:, 2 * dim:])
        h_new = (1.0 - z) * n + z * h
        return h_new, h_new

    h0 = jnp.zeros((B, dim), jnp.float32)
    _, hs = jax.lax.scan(step, h0, jnp.swapaxes(table, 0, 1))          # scan over T
    hs = jnp.swapaxes(hs, 0, 1)                                        # (B, T, dim)
    y = mm_x(hs.reshape(-1, dim), w_mlp.T).reshape(B, T, dim) + b_mlp
    return jnp.concatenate([y] * n_head, axis=-1)


if __name__ == "__main__":
    B, T = 16, 12
    d_model, n_head, max_pos = 32, 4, 10000
    dim = d_model // n_head              # 8

    key = jax.random.PRNGKey(0)
    k_pos, k1, k2, k3, k4, k5, k6 = jax.random.split(key, 7)

    # batch_positions: e.g. day-of-year timestamps, shape (B, T)
    pos = jax.random.uniform(k_pos, (B, T), jnp.float32, 0.0, 365.0)

    # PositionalEncoder denominator: max_pos^(2*(i//2)/dim)
    i = jnp.arange(dim, dtype=jnp.float32)
    denom = jnp.power(float(max_pos), 2.0 * jnp.floor(i / 2.0) / dim).astype(jnp.float32)

    # Deterministic parameter init (uniform(-1/sqrt(dim), 1/sqrt(dim)), PyTorch-native layouts)
    bound = float(1.0 / np.sqrt(dim))
    w_ih = jax.random.uniform(k1, (3 * dim, dim), jnp.float32, -bound, bound)
    w_hh = jax.random.uniform(k2, (3 * dim, dim), jnp.float32, -bound, bound)
    b_ih = jax.random.uniform(k3, (3 * dim,), jnp.float32, -bound, bound)
    b_hh = jax.random.uniform(k4, (3 * dim,), jnp.float32, -bound, bound)
    w_mlp = jax.random.uniform(k5, (dim, dim), jnp.float32, -bound, bound)
    b_mlp = jax.random.uniform(k6, (dim,), jnp.float32, -bound, bound)

    out = rnn_positional_encoding(pos, denom, w_ih, w_hh, b_ih, b_hh, w_mlp, b_mlp, n_head)
    out = jax.block_until_ready(out)
    assert out.shape == (B, T, d_model)

    # Structural check vs a reference using the kernel's exact precision convention.
    ref_matched = reference(pos, denom, w_ih, w_hh, b_ih, b_hh, w_mlp, b_mlp, n_head,
                            match_kernel=True)
    np.testing.assert_allclose(np.asarray(out), np.asarray(ref_matched), atol=2e-2, rtol=2e-2)

    # PyTorch-fidelity check vs strict-f32 matmuls (documents the bf16 relaxation on the two
    # non-recurrent matmuls; the recurrence itself is f32 in the kernel).
    ref_f32 = reference(pos, denom, w_ih, w_hh, b_ih, b_hh, w_mlp, b_mlp, n_head,
                        match_kernel=False)
    np.testing.assert_allclose(np.asarray(out), np.asarray(ref_f32), atol=5e-2, rtol=5e-2)

    print("KERNEL_OK")
</pallas_src>

<mosaic_0001>
module attributes {stable_mosaic.version = 11 : i64} {
  func.func @_rnn_pe_kernel(%arg0: i32, %arg1: memref<1x192xf32, #tpu.memory_space<vmem>>, %arg2: memref<8x1xf32, #tpu.memory_space<vmem>>, %arg3: memref<8x1xf32, #tpu.memory_space<vmem>>, %arg4: memref<24x8xbf16, #tpu.memory_space<vmem>>, %arg5: memref<24x8xf32, #tpu.memory_space<vmem>>, %arg6: memref<24x1xf32, #tpu.memory_space<vmem>>, %arg7: memref<24x1xf32, #tpu.memory_space<vmem>>, %arg8: memref<8x8xbf16, #tpu.memory_space<vmem>>, %arg9: memref<8x1xf32, #tpu.memory_space<vmem>>, %arg10: memref<8x192xf32, #tpu.memory_space<vmem>>) attributes {dimension_semantics = [#tpu.dimension_semantics<parallel>], iteration_bounds = array<i64: 1>, scalar_prefetch = 0 : i64, scratch_operands = 0 : i64, tpu.core_type = #tpu.core_type<tc>, window_params = [{transform_indices = @transform_0, window_bounds = array<i64: 1, 192>}, {pipeline_mode = #tpu.pipeline_mode<synchronous>, transform_indices = @transform_1, window_bounds = array<i64: 8, 1>}, {pipeline_mode = #tpu.pipeline_mode<synchronous>, transform_indices = @transform_2, window_bounds = array<i64: 8, 1>}, {pipeline_mode = #tpu.pipeline_mode<synchronous>, transform_indices = @transform_3, window_bounds = array<i64: 24, 8>}, {pipeline_mode = #tpu.pipeline_mode<synchronous>, transform_indices = @transform_4, window_bounds = array<i64: 24, 8>}, {pipeline_mode = #tpu.pipeline_mode<synchronous>, transform_indices = @transform_5, window_bounds = array<i64: 24, 1>}, {pipeline_mode = #tpu.pipeline_mode<synchronous>, transform_indices = @transform_6, window_bounds = array<i64: 24, 1>}, {pipeline_mode = #tpu.pipeline_mode<synchronous>, transform_indices = @transform_7, window_bounds = array<i64: 8, 8>}, {pipeline_mode = #tpu.pipeline_mode<synchronous>, transform_indices = @transform_8, window_bounds = array<i64: 8, 1>}, {transform_indices = @transform_9, window_bounds = array<i64: 8, 192>}]} {
    %c0 = arith.constant 0 : index
    %c0_0 = arith.constant 0 : index
    %0 = vector.load %arg1[%c0, %c0_0] : memref<1x192xf32, #tpu.memory_space<vmem>>, vector<1x192xf32>
    %c0_1 = arith.constant 0 : index
    %c0_2 = arith.constant 0 : index
    %1 = vector.load %arg2[%c0_1, %c0_2] : memref<8x1xf32, #tpu.memory_space<vmem>>, vector<8x1xf32>
    %2 = vector.broadcast %0 : vector<1x192xf32> to vector<8x192xf32>
    %3 = vector.broadcast %1 : vector<8x1xf32> to vector<8x192xf32>
    %4 = arith.mulf %2, %3 : vector<8x192xf32>
    %c0_3 = arith.constant 0 : index
    %c0_4 = arith.constant 0 : index
    %5 = vector.load %arg3[%c0_3, %c0_4] : memref<8x1xf32, #tpu.memory_space<vmem>>, vector<8x1xf32>
    %6 = vector.broadcast %5 : vector<8x1xf32> to vector<8x192xf32>
    %7 = arith.addf %4, %6 : vector<8x192xf32>
    %8 = math.sin %7 : vector<8x192xf32>
    %c0_5 = arith.constant 0 : index
    %c0_6 = arith.constant 0 : index
    %9 = vector.load %arg4[%c0_5, %c0_6] : memref<24x8xbf16, #tpu.memory_space<vmem>>, vector<24x8xbf16>
    %10 = arith.truncf %8 : vector<8x192xf32> to vector<8x192xbf16>
    %cst = arith.constant dense<0.000000e+00> : vector<24x192xf32>
    %11 = tpu.matmul %9, %10, %cst {dimension_numbers = #tpu.dot_dimension_numbers<[1], [0], [0], [1], [0, 0, 1, 1], [], []>} : vector<24x8xbf16>, vector<8x192xbf16>, vector<24x192xf32> -> vector<24x192xf32>
    %c0_7 = arith.constant 0 : index
    %c0_8 = arith.constant 0 : index
    %12 = vector.load %arg5[%c0_7, %c0_8] : memref<24x8xf32, #tpu.memory_space<vmem>>, vector<24x8xf32>
    %c0_9 = arith.constant 0 : index
    %c0_10 = arith.constant 0 : index
    %13 = vector.load %arg8[%c0_9, %c0_10] : memref<8x8xbf16, #tpu.memory_space<vmem>>, vector<8x8xbf16>
    %c0_11 = arith.constant 0 : index
    %c0_12 = arith.constant 0 : index
    %14 = vector.load %arg6[%c0_11, %c0_12] : memref<24x1xf32, #tpu.memory_space<vmem>>, vector<24x1xf32>
    %c0_13 = arith.constant 0 : index
    %c0_14 = arith.constant 0 : index
    %15 = vector.load %arg7[%c0_13, %c0_14] : memref<24x1xf32, #tpu.memory_space<vmem>>, vector<24x1xf32>
    %c0_15 = arith.constant 0 : index
    %c0_16 = arith.constant 0 : index
    %16 = vector.load %arg9[%c0_15, %c0_16] : memref<8x1xf32, #tpu.memory_space<vmem>>, vector<8x1xf32>
    %17 = vector.extract_strided_slice %14 {offsets = [0, 0], sizes = [8, 1], strides = [1, 1]} : vector<24x1xf32> to vector<8x1xf32>
    %18 = vector.extract_strided_slice %15 {offsets = [0, 0], sizes = [8, 1], strides = [1, 1]} : vector<24x1xf32> to vector<8x1xf32>
    %19 = arith.addf %17, %18 : vector<8x1xf32>
    %20 = vector.extract_strided_slice %14 {offsets = [8, 0], sizes = [8, 1], strides = [1, 1]} : vector<24x1xf32> to vector<8x1xf32>
    %21 = vector.extract_strided_slice %15 {offsets = [8, 0], sizes = [8, 1], strides = [1, 1]} : vector<24x1xf32> to vector<8x1xf32>
    %22 = arith.addf %20, %21 : vector<8x1xf32>
    %23 = vector.extract_strided_slice %14 {offsets = [16, 0], sizes = [8, 1], strides = [1, 1]} : vector<24x1xf32> to vector<8x1xf32>
    %24 = vector.extract_strided_slice %15 {offsets = [16, 0], sizes = [8, 1], strides = [1, 1]} : vector<24x1xf32> to vector<8x1xf32>
    %cst_17 = arith.constant 0.000000e+00 : f32
    %25 = vector.broadcast %cst_17 : f32 to vector<8x16xf32>
    %26 = vector.extract_strided_slice %11 {offsets = [0, 0], sizes = [24, 16], strides = [1, 1]} : vector<24x192xf32> to vector<24x16xf32>
    %cst_18 = arith.constant dense<0.000000e+00> : vector<24x16xf32>
    %27 = tpu.matmul %12, %25, %cst_18 {dimension_numbers = #tpu.dot_dimension_numbers<[1], [0], [0], [1], [0, 0, 1, 1], [], []>} : vector<24x8xf32>, vector<8x16xf32>, vector<24x16xf32> -> vector<24x16xf32>
    %28 = vector.extract_strided_slice %26 {offsets = [0, 0], sizes = [8, 16], strides = [1, 1]} : vector<24x16xf32> to vector<8x16xf32>
    %29 = vector.broadcast %19 : vector<8x1xf32> to vector<8x16xf32>
    %30 = arith.addf %28, %29 : vector<8x16xf32>
    %31 = vector.extract_strided_slice %27 {offsets = [0, 0], sizes = [8, 16], strides = [1, 1]} : vector<24x16xf32> to vector<8x16xf32>
    %32 = arith.addf %30, %31 : vector<8x16xf32>
    %33 = arith.negf %32 : vector<8x16xf32>
    %34 = math.exp %33 : vector<8x16xf32>
    %cst_19 = arith.constant 1.000000e+00 : f32
    %35 = vector.broadcast %cst_19 : f32 to vector<8x16xf32>
    %36 = arith.addf %35, %34 : vector<8x16xf32>
    %37 = arith.divf %35, %36 : vector<8x16xf32>
    %38 = vector.extract_strided_slice %26 {offsets = [8, 0], sizes = [8, 16], strides = [1, 1]} : vector<24x16xf32> to vector<8x16xf32>
    %39 = vector.broadcast %22 : vector<8x1xf32> to vector<8x16xf32>
    %40 = arith.addf %38, %39 : vector<8x16xf32>
    %41 = vector.extract_strided_slice %27 {offsets = [8, 0], sizes = [8, 16], strides = [1, 1]} : vector<24x16xf32> to vector<8x16xf32>
    %42 = arith.addf %40, %41 : vector<8x16xf32>
    %43 = arith.negf %42 : vector<8x16xf32>
    %44 = math.exp %43 : vector<8x16xf32>
    %cst_20 = arith.constant 1.000000e+00 : f32
    %45 = vector.broadcast %cst_20 : f32 to vector<8x16xf32>
    %46 = arith.addf %45, %44 : vector<8x16xf32>
    %47 = arith.divf %45, %46 : vector<8x16xf32>
    %48 = vector.extract_strided_slice %26 {offsets = [16, 0], sizes = [8, 16], strides = [1, 1]} : vector<24x16xf32> to vector<8x16xf32>
    %49 = vector.broadcast %23 : vector<8x1xf32> to vector<8x16xf32>
    %50 = arith.addf %48, %49 : vector<8x16xf32>
    %51 = vector.extract_strided_slice %27 {offsets = [16, 0], sizes = [8, 16], strides = [1, 1]} : vector<24x16xf32> to vector<8x16xf32>
    %52 = vector.broadcast %24 : vector<8x1xf32> to vector<8x16xf32>
    %53 = arith.addf %51, %52 : vector<8x16xf32>
    %54 = arith.mulf %37, %53 : vector<8x16xf32>
    %55 = arith.addf %50, %54 : vector<8x16xf32>
    %56 = math.tanh %55 : vector<8x16xf32>
    %cst_21 = arith.constant 1.000000e+00 : f32
    %57 = vector.broadcast %cst_21 : f32 to vector<8x16xf32>
    %58 = arith.subf %57, %47 : vector<8x16xf32>
    %59 = arith.mulf %58, %56 : vector<8x16xf32>
    %60 = arith.mulf %47, %25 : vector<8x16xf32>
    %61 = arith.addf %59, %60 : vector<8x16xf32>
    %62 = arith.truncf %61 : vector<8x16xf32> to vector<8x16xbf16>
    %cst_22 = arith.constant dense<0.000000e+00> : vector<8x16xf32>
    %63 = tpu.matmul %13, %62, %cst_22 {dimension_numbers = #tpu.dot_dimension_numbers<[1], [0], [0], [1], [0, 0, 1, 1], [], []>} : vector<8x8xbf16>, vector<8x16xbf16>, vector<8x16xf32> -> vector<8x16xf32>
    %64 = vector.broadcast %16 : vector<8x1xf32> to vector<8x16xf32>
    %65 = arith.addf %63, %64 : vector<8x16xf32>
    %c0_23 = arith.constant 0 : index
    %c0_24 = arith.constant 0 : index
    %66 = vector.load %arg10[%c0_23, %c0_24] : memref<8x192xf32, #tpu.memory_space<vmem>>, vector<8x16xf32>
    tpu.vector_store %arg10[%c0_23, %c0_24], %65 {strides = array<i32>} : memref<8x192xf32, #tpu.memory_space<vmem>>, vector<8x16xf32>,
    %67 = vector.extract_strided_slice %11 {offsets = [0, 16], sizes = [24, 16], strides = [1, 1]} : vector<24x192xf32> to vector<24x16xf32>
    %cst_25 = arith.constant dense<0.000000e+00> : vector<24x16xf32>
    %68 = tpu.matmul %12, %61, %cst_25 {dimension_numbers = #tpu.dot_dimension_numbers<[1], [0], [0], [1], [0, 0, 1, 1], [], []>} : vector<24x8xf32>, vector<8x16xf32>, vector<24x16xf32> -> vector<24x16xf32>
    %69 = vector.extract_strided_slice %67 {offsets = [0, 0], sizes = [8, 16], strides = [1, 1]} : vector<24x16xf32> to vector<8x16xf32>
    %70 = vector.broadcast %19 : vector<8x1xf32> to vector<8x16xf32>
    %71 = arith.addf %69, %70 : vector<8x16xf32>
    %72 = vector.extract_strided_slice %68 {offsets = [0, 0], sizes = [8, 16], strides = [1, 1]} : vector<24x16xf32> to vector<8x16xf32>
    %73 = arith.addf %71, %72 : vector<8x16xf32>
    %74 = arith.negf %73 : vector<8x16xf32>
    %75 = math.exp %74 : vector<8x16xf32>
    %cst_26 = arith.constant 1.000000e+00 : f32
    %76 = vector.broadcast %cst_26 : f32 to vector<8x16xf32>
    %77 = arith.addf %76, %75 : vector<8x16xf32>
    %78 = arith.divf %76, %77 : vector<8x16xf32>
    %79 = vector.extract_strided_slice %67 {offsets = [8, 0], sizes = [8, 16], strides = [1, 1]} : vector<24x16xf32> to vector<8x16xf32>
    %80 = vector.broadcast %22 : vector<8x1xf32> to vector<8x16xf32>
    %81 = arith.addf %79, %80 : vector<8x16xf32>
    %82 = vector.extract_strided_slice %68 {offsets = [8, 0], sizes = [8, 16], strides = [1, 1]} : vector<24x16xf32> to vector<8x16xf32>
    %83 = arith.addf %81, %82 : vector<8x16xf32>
    %84 = arith.negf %83 : vector<8x16xf32>
    %85 = math.exp %84 : vector<8x16xf32>
    %cst_27 = arith.constant 1.000000e+00 : f32
    %86 = vector.broadcast %cst_27 : f32 to vector<8x16xf32>
    %87 = arith.addf %86, %85 : vector<8x16xf32>
    %88 = arith.divf %86, %87 : vector<8x16xf32>
    %89 = vector.extract_strided_slice %67 {offsets = [16, 0], sizes = [8, 16], strides = [1, 1]} : vector<24x16xf32> to vector<8x16xf32>
    %90 = vector.broadcast %23 : vector<8x1xf32> to vector<8x16xf32>
    %91 = arith.addf %89, %90 : vector<8x16xf32>
    %92 = vector.extract_strided_slice %68 {offsets = [16, 0], sizes = [8, 16], strides = [1, 1]} : vector<24x16xf32> to vector<8x16xf32>
    %93 = vector.broadcast %24 : vector<8x1xf32> to vector<8x16xf32>
    %94 = arith.addf %92, %93 : vector<8x16xf32>
    %95 = arith.mulf %78, %94 : vector<8x16xf32>
    %96 = arith.addf %91, %95 : vector<8x16xf32>
    %97 = math.tanh %96 : vector<8x16xf32>
    %cst_28 = arith.constant 1.000000e+00 : f32
    %98 = vector.broadcast %cst_28 : f32 to vector<8x16xf32>
    %99 = arith.subf %98, %88 : vector<8x16xf32>
    %100 = arith.mulf %99, %97 : vector<8x16xf32>
    %101 = arith.mulf %88, %61 : vector<8x16xf32>
    %102 = arith.addf %100, %101 : vector<8x16xf32>
    %103 = arith.truncf %102 : vector<8x16xf32> to vector<8x16xbf16>
    %cst_29 = arith.constant dense<0.000000e+00> : vector<8x16xf32>
    %104 = tpu.matmul %13, %103, %cst_29 {dimension_numbers = #tpu.dot_dimension_numbers<[1], [0], [0], [1], [0, 0, 1, 1], [], []>} : vector<8x8xbf16>, vector<8x16xbf16>, vector<8x16xf32> -> vector<8x16xf32>
    %105 = vector.broadcast %16 : vector<8x1xf32> to vector<8x16xf32>
    %106 = arith.addf %104, %105 : vector<8x16xf32>
    %c0_30 = arith.constant 0 : index
    %c16 = arith.constant 16 : index
    %107 = vector.load %arg10[%c0_30, %c16] : memref<8x192xf32, #tpu.memory_space<vmem>>, vector<8x16xf32>
    tpu.vector_store %arg10[%c0_30, %c16], %106 {strides = array<i32>} : memref<8x192xf32, #tpu.memory_space<vmem>>, vector<8x16xf32>,
    %108 = vector.extract_strided_slice %11 {offsets = [0, 32], sizes = [24, 16], strides = [1, 1]} : vector<24x192xf32> to vector<24x16xf32>
    %cst_31 = arith.constant dense<0.000000e+00> : vector<24x16xf32>
    %109 = tpu.matmul %12, %102, %cst_31 {dimension_numbers = #tpu.dot_dimension_numbers<[1], [0], [0], [1], [0, 0, 1, 1], [], []>} : vector<24x8xf32>, vector<8x16xf32>, vector<24x16xf32> -> vector<24x16xf32>
    %110 = vector.extract_strided_slice %108 {offsets = [0, 0], sizes = [8, 16], strides = [1, 1]} : vector<24x16xf32> to vector<8x16xf32>
    %111 = vector.broadcast %19 : vector<8x1xf32> to vector<8x16xf32>
    %112 = arith.addf %110, %111 : vector<8x16xf32>
    %113 = vector.extract_strided_slice %109 {offsets = [0, 0], sizes = [8, 16], strides = [1, 1]} : vector<24x16xf32> to vector<8x16xf32>
    %114 = arith.addf %112, %113 : vector<8x16xf32>
    %115 = arith.negf %114 : vector<8x16xf32>
    %116 = math.exp %115 : vector<8x16xf32>
    %cst_32 = arith.constant 1.000000e+00 : f32
    %117 = vector.broadcast %cst_32 : f32 to vector<8x16xf32>
    %118 = arith.addf %117, %116 : vector<8x16xf32>
    %119 = arith.divf %117, %118 : vector<8x16xf32>
    %120 = vector.extract_strided_slice %108 {offsets = [8, 0], sizes = [8, 16], strides = [1, 1]} : vector<24x16xf32> to vector<8x16xf32>
    %121 = vector.broadcast %22 : vector<8x1xf32> to vector<8x16xf32>
    %122 = arith.addf %120, %121 : vector<8x16xf32>
    %123 = vector.extract_strided_slice %109 {offsets = [8, 0], sizes = [8, 16], strides = [1, 1]} : vector<24x16xf32> to vector<8x16xf32>
    %124 = arith.addf %122, %123 : vector<8x16xf32>
    %125 = arith.negf %124 : vector<8x16xf32>
    %126 = math.exp %125 : vector<8x16xf32>
    %cst_33 = arith.constant 1.000000e+00 : f32
    %127 = vector.broadcast %cst_33 : f32 to vector<8x16xf32>
    %128 = arith.addf %127, %126 : vector<8x16xf32>
    %129 = arith.divf %127, %128 : vector<8x16xf32>
    %130 = vector.extract_strided_slice %108 {offsets = [16, 0], sizes = [8, 16], strides = [1, 1]} : vector<24x16xf32> to vector<8x16xf32>
    %131 = vector.broadcast %23 : vector<8x1xf32> to vector<8x16xf32>
    %132 = arith.addf %130, %131 : vector<8x16xf32>
    %133 = vector.extract_strided_slice %109 {offsets = [16, 0], sizes = [8, 16], strides = [1, 1]} : vector<24x16xf32> to vector<8x16xf32>
    %134 = vector.broadcast %24 : vector<8x1xf32> to vector<8x16xf32>
    %135 = arith.addf %133, %134 : vector<8x16xf32>
    %136 = arith.mulf %119, %135 : vector<8x16xf32>
    %137 = arith.addf %132, %136 : vector<8x16xf32>
    %138 = math.tanh %137 : vector<8x16xf32>
    %cst_34 = arith.constant 1.000000e+00 : f32
    %139 = vector.broadcast %cst_34 : f32 to vector<8x16xf32>
    %140 = arith.subf %139, %129 : vector<8x16xf32>
    %141 = arith.mulf %140, %138 : vector<8x16xf32>
    %142 = arith.mulf %129, %102 : vector<8x16xf32>
    %143 = arith.addf %141, %142 : vector<8x16xf32>
    %144 = arith.truncf %143 : vector<8x16xf32> to vector<8x16xbf16>
    %cst_35 = arith.constant dense<0.000000e+00> : vector<8x16xf32>
    %145 = tpu.matmul %13, %144, %cst_35 {dimension_numbers = #tpu.dot_dimension_numbers<[1], [0], [0], [1], [0, 0, 1, 1], [], []>} : vector<8x8xbf16>, vector<8x16xbf16>, vector<8x16xf32> -> vector<8x16xf32>
    %146 = vector.broadcast %16 : vector<8x1xf32> to vector<8x16xf32>
    %147 = arith.addf %145, %146 : vector<8x16xf32>
    %c0_36 = arith.constant 0 : index
    %c32 = arith.constant 32 : index
    %148 = vector.load %arg10[%c0_36, %c32] : memref<8x192xf32, #tpu.memory_space<vmem>>, vector<8x16xf32>
    tpu.vector_store %arg10[%c0_36, %c32], %147 {strides = array<i32>} : memref<8x192xf32, #tpu.memory_space<vmem>>, vector<8x16xf32>,
    %149 = vector.extract_strided_slice %11 {offsets = [0, 48], sizes = [24, 16], strides = [1, 1]} : vector<24x192xf32> to vector<24x16xf32>
    %cst_37 = arith.constant dense<0.000000e+00> : vector<24x16xf32>
    %150 = tpu.matmul %12, %143, %cst_37 {dimension_numbers = #tpu.dot_dimension_numbers<[1], [0], [0], [1], [0, 0, 1, 1], [], []>} : vector<24x8xf32>, vector<8x16xf32>, vector<24x16xf32> -> vector<24x16xf32>
    %151 = vector.extract_strided_slice %149 {offsets = [0, 0], sizes = [8, 16], strides = [1, 1]} : vector<24x16xf32> to vector<8x16xf32>
    %152 = vector.broadcast %19 : vector<8x1xf32> to vector<8x16xf32>
    %153 = arith.addf %151, %152 : vector<8x16xf32>
    %154 = vector.extract_strided_slice %150 {offsets = [0, 0], sizes = [8, 16], strides = [1, 1]} : vector<24x16xf32> to vector<8x16xf32>
    %155 = arith.addf %153, %154 : vector<8x16xf32>
    %156 = arith.negf %155 : vector<8x16xf32>
    %157 = math.exp %156 : vector<8x16xf32>
    %cst_38 = arith.constant 1.000000e+00 : f32
    %158 = vector.broadcast %cst_38 : f32 to vector<8x16xf32>
    %159 = arith.addf %158, %157 : vector<8x16xf32>
    %160 = arith.divf %158, %159 : vector<8x16xf32>
    %161 = vector.extract_strided_slice %149 {offsets = [8, 0], sizes = [8, 16], strides = [1, 1]} : vector<24x16xf32> to vector<8x16xf32>
    %162 = vector.broadcast %22 : vector<8x1xf32> to vector<8x16xf32>
    %163 = arith.addf %161, %162 : vector<8x16xf32>
    %164 = vector.extract_strided_slice %150 {offsets = [8, 0], sizes = [8, 16], strides = [1, 1]} : vector<24x16xf32> to vector<8x16xf32>
    %165 = arith.addf %163, %164 : vector<8x16xf32>
    %166 = arith.negf %165 : vector<8x16xf32>
    %167 = math.exp %166 : vector<8x16xf32>
    %cst_39 = arith.constant 1.000000e+00 : f32
    %168 = vector.broadcast %cst_39 : f32 to vector<8x16xf32>
    %169 = arith.addf %168, %167 : vector<8x16xf32>
    %170 = arith.divf %168, %169 : vector<8x16xf32>
    %171 = vector.extract_strided_slice %149 {offsets = [16, 0], sizes = [8, 16], strides = [1, 1]} : vector<24x16xf32> to vector<8x16xf32>
    %172 = vector.broadcast %23 : vector<8x1xf32> to vector<8x16xf32>
    %173 = arith.addf %171, %172 : vector<8x16xf32>
    %174 = vector.extract_strided_slice %150 {offsets = [16, 0], sizes = [8, 16], strides = [1, 1]} : vector<24x16xf32> to vector<8x16xf32>
    %175 = vector.broadcast %24 : vector<8x1xf32> to vector<8x16xf32>
    %176 = arith.addf %174, %175 : vector<8x16xf32>
    %177 = arith.mulf %160, %176 : vector<8x16xf32>
    %178 = arith.addf %173, %177 : vector<8x16xf32>
    %179 = math.tanh %178 : vector<8x16xf32>
    %cst_40 = arith.constant 1.000000e+00 : f32
    %180 = vector.broadcast %cst_40 : f32 to vector<8x16xf32>
    %181 = arith.subf %180, %170 : vector<8x16xf32>
    %182 = arith.mulf %181, %179 : vector<8x16xf32>
    %183 = arith.mulf %170, %143 : vector<8x16xf32>
    %184 = arith.addf %182, %183 : vector<8x16xf32>
    %185 = arith.truncf %184 : vector<8x16xf32> to vector<8x16xbf16>
    %cst_41 = arith.constant dense<0.000000e+00> : vector<8x16xf32>
    %186 = tpu.matmul %13, %185, %cst_41 {dimension_numbers = #tpu.dot_dimension_numbers<[1], [0], [0], [1], [0, 0, 1, 1], [], []>} : vector<8x8xbf16>, vector<8x16xbf16>, vector<8x16xf32> -> vector<8x16xf32>
    %187 = vector.broadcast %16 : vector<8x1xf32> to vector<8x16xf32>
    %188 = arith.addf %186, %187 : vector<8x16xf32>
    %c0_42 = arith.constant 0 : index
    %c48 = arith.constant 48 : index
    %189 = vector.load %arg10[%c0_42, %c48] : memref<8x192xf32, #tpu.memory_space<vmem>>, vector<8x16xf32>
    tpu.vector_store %arg10[%c0_42, %c48], %188 {strides = array<i32>} : memref<8x192xf32, #tpu.memory_space<vmem>>, vector<8x16xf32>,
    %190 = vector.extract_strided_slice %11 {offsets = [0, 64], sizes = [24, 16], strides = [1, 1]} : vector<24x192xf32> to vector<24x16xf32>
    %cst_43 = arith.constant dense<0.000000e+00> : vector<24x16xf32>
    %191 = tpu.matmul %12, %184, %cst_43 {dimension_numbers = #tpu.dot_dimension_numbers<[1], [0], [0], [1], [0, 0, 1, 1], [], []>} : vector<24x8xf32>, vector<8x16xf32>, vector<24x16xf32> -> vector<24x16xf32>
    %192 = vector.extract_strided_slice %190 {offsets = [0, 0], sizes = [8, 16], strides = [1, 1]} : vector<24x16xf32> to vector<8x16xf32>
    %193 = vector.broadcast %19 : vector<8x1xf32> to vector<8x16xf32>
    %194 = arith.addf %192, %193 : vector<8x16xf32>
    %195 = vector.extract_strided_slice %191 {offsets = [0, 0], sizes = [8, 16], strides = [1, 1]} : vector<24x16xf32> to vector<8x16xf32>
    %196 = arith.addf %194, %195 : vector<8x16xf32>
    %197 = arith.negf %196 : vector<8x16xf32>
    %198 = math.exp %197 : vector<8x16xf32>
    %cst_44 = arith.constant 1.000000e+00 : f32
    %199 = vector.broadcast %cst_44 : f32 to vector<8x16xf32>
    %200 = arith.addf %199, %198 : vector<8x16xf32>
    %201 = arith.divf %199, %200 : vector<8x16xf32>
    %202 = vector.extract_strided_slice %190 {offsets = [8, 0], sizes = [8, 16], strides = [1, 1]} : vector<24x16xf32> to vector<8x16xf32>
    %203 = vector.broadcast %22 : vector<8x1xf32> to vector<8x16xf32>
    %204 = arith.addf %202, %203 : vector<8x16xf32>
    %205 = vector.extract_strided_slice %191 {offsets = [8, 0], sizes = [8, 16], strides = [1, 1]} : vector<24x16xf32> to vector<8x16xf32>
    %206 = arith.addf %204, %205 : vector<8x16xf32>
    %207 = arith.negf %206 : vector<8x16xf32>
    %208 = math.exp %207 : vector<8x16xf32>
    %cst_45 = arith.constant 1.000000e+00 : f32
    %209 = vector.broadcast %cst_45 : f32 to vector<8x16xf32>
    %210 = arith.addf %209, %208 : vector<8x16xf32>
    %211 = arith.divf %209, %210 : vector<8x16xf32>
    %212 = vector.extract_strided_slice %190 {offsets = [16, 0], sizes = [8, 16], strides = [1, 1]} : vector<24x16xf32> to vector<8x16xf32>
    %213 = vector.broadcast %23 : vector<8x1xf32> to vector<8x16xf32>
    %214 = arith.addf %212, %213 : vector<8x16xf32>
    %215 = vector.extract_strided_slice %191 {offsets = [16, 0], sizes = [8, 16], strides = [1, 1]} : vector<24x16xf32> to vector<8x16xf32>
    %216 = vector.broadcast %24 : vector<8x1xf32> to vector<8x16xf32>
    %217 = arith.addf %215, %216 : vector<8x16xf32>
    %218 = arith.mulf %201, %217 : vector<8x16xf32>
    %219 = arith.addf %214, %218 : vector<8x16xf32>
    %220 = math.tanh %219 : vector<8x16xf32>
    %cst_46 = arith.constant 1.000000e+00 : f32
    %221 = vector.broadcast %cst_46 : f32 to vector<8x16xf32>
    %222 = arith.subf %221, %211 : vector<8x16xf32>
    %223 = arith.mulf %222, %220 : vector<8x16xf32>
    %224 = arith.mulf %211, %184 : vector<8x16xf32>
    %225 = arith.addf %223, %224 : vector<8x16xf32>
    %226 = arith.truncf %225 : vector<8x16xf32> to vector<8x16xbf16>
    %cst_47 = arith.constant dense<0.000000e+00> : vector<8x16xf32>
    %227 = tpu.matmul %13, %226, %cst_47 {dimension_numbers = #tpu.dot_dimension_numbers<[1], [0], [0], [1], [0, 0, 1, 1], [], []>} : vector<8x8xbf16>, vector<8x16xbf16>, vector<8x16xf32> -> vector<8x16xf32>
    %228 = vector.broadcast %16 : vector<8x1xf32> to vector<8x16xf32>
    %229 = arith.addf %227, %228 : vector<8x16xf32>
    %c0_48 = arith.constant 0 : index
    %c64 = arith.constant 64 : index
    %230 = vector.load %arg10[%c0_48, %c64] : memref<8x192xf32, #tpu.memory_space<vmem>>, vector<8x16xf32>
    tpu.vector_store %arg10[%c0_48, %c64], %229 {strides = array<i32>} : memref<8x192xf32, #tpu.memory_space<vmem>>, vector<8x16xf32>,
    %231 = vector.extract_strided_slice %11 {offsets = [0, 80], sizes = [24, 16], strides = [1, 1]} : vector<24x192xf32> to vector<24x16xf32>
    %cst_49 = arith.constant dense<0.000000e+00> : vector<24x16xf32>
    %232 = tpu.matmul %12, %225, %cst_49 {dimension_numbers = #tpu.dot_dimension_numbers<[1], [0], [0], [1], [0, 0, 1, 1], [], []>} : vector<24x8xf32>, vector<8x16xf32>, vector<24x16xf32> -> vector<24x16xf32>
    %233 = vector.extract_strided_slice %231 {offsets = [0, 0], sizes = [8, 16], strides = [1, 1]} : vector<24x16xf32> to vector<8x16xf32>
    %234 = vector.broadcast %19 : vector<8x1xf32> to vector<8x16xf32>
    %235 = arith.addf %233, %234 : vector<8x16xf32>
    %236 = vector.extract_strided_slice %232 {offsets = [0, 0], sizes = [8, 16], strides = [1, 1]} : vector<24x16xf32> to vector<8x16xf32>
    %237 = arith.addf %235, %236 : vector<8x16xf32>
    %238 = arith.negf %237 : vector<8x16xf32>
    %239 = math.exp %238 : vector<8x16xf32>
    %cst_50 = arith.constant 1.000000e+00 : f32
    %240 = vector.broadcast %cst_50 : f32 to vector<8x16xf32>
    %241 = arith.addf %240, %239 : vector<8x16xf32>
    %242 = arith.divf %240, %241 : vector<8x16xf32>
    %243 = vector.extract_strided_slice %231 {offsets = [8, 0], sizes = [8, 16], strides = [1, 1]} : vector<24x16xf32> to vector<8x16xf32>
    %244 = vector.broadcast %22 : vector<8x1xf32> to vector<8x16xf32>
    %245 = arith.addf %243, %244 : vector<8x16xf32>
    %246 = vector.extract_strided_slice %232 {offsets = [8, 0], sizes = [8, 16], strides = [1, 1]} : vector<24x16xf32> to vector<8x16xf32>
    %247 = arith.addf %245, %246 : vector<8x16xf32>
    %248 = arith.negf %247 : vector<8x16xf32>
    %249 = math.exp %248 : vector<8x16xf32>
    %cst_51 = arith.constant 1.000000e+00 : f32
    %250 = vector.broadcast %cst_51 : f32 to vector<8x16xf32>
    %251 = arith.addf %250, %249 : vector<8x16xf32>
    %252 = arith.divf %250, %251 : vector<8x16xf32>
    %253 = vector.extract_strided_slice %231 {offsets = [16, 0], sizes = [8, 16], strides = [1, 1]} : vector<24x16xf32> to vector<8x16xf32>
    %254 = vector.broadcast %23 : vector<8x1xf32> to vector<8x16xf32>
    %255 = arith.addf %253, %254 : vector<8x16xf32>
    %256 = vector.extract_strided_slice %232 {offsets = [16, 0], sizes = [8, 16], strides = [1, 1]} : vector<24x16xf32> to vector<8x16xf32>
    %257 = vector.broadcast %24 : vector<8x1xf32> to vector<8x16xf32>
    %258 = arith.addf %256, %257 : vector<8x16xf32>
    %259 = arith.mulf %242, %258 : vector<8x16xf32>
    %260 = arith.addf %255, %259 : vector<8x16xf32>
    %261 = math.tanh %260 : vector<8x16xf32>
    %cst_52 = arith.constant 1.000000e+00 : f32
    %262 = vector.broadcast %cst_52 : f32 to vector<8x16xf32>
    %263 = arith.subf %262, %252 : vector<8x16xf32>
    %264 = arith.mulf %263, %261 : vector<8x16xf32>
    %265 = arith.mulf %252, %225 : vector<8x16xf32>
    %266 = arith.addf %264, %265 : vector<8x16xf32>
    %267 = arith.truncf %266 : vector<8x16xf32> to vector<8x16xbf16>
    %cst_53 = arith.constant dense<0.000000e+00> : vector<8x16xf32>
    %268 = tpu.matmul %13, %267, %cst_53 {dimension_numbers = #tpu.dot_dimension_numbers<[1], [0], [0], [1], [0, 0, 1, 1], [], []>} : vector<8x8xbf16>, vector<8x16xbf16>, vector<8x16xf32> -> vector<8x16xf32>
    %269 = vector.broadcast %16 : vector<8x1xf32> to vector<8x16xf32>
    %270 = arith.addf %268, %269 : vector<8x16xf32>
    %c0_54 = arith.constant 0 : index
    %c80 = arith.constant 80 : index
    %271 = vector.load %arg10[%c0_54, %c80] : memref<8x192xf32, #tpu.memory_space<vmem>>, vector<8x16xf32>
    tpu.vector_store %arg10[%c0_54, %c80], %270 {strides = array<i32>} : memref<8x192xf32, #tpu.memory_space<vmem>>, vector<8x16xf32>,
    %272 = vector.extract_strided_slice %11 {offsets = [0, 96], sizes = [24, 16], strides = [1, 1]} : vector<24x192xf32> to vector<24x16xf32>
    %cst_55 = arith.constant dense<0.000000e+00> : vector<24x16xf32>
    %273 = tpu.matmul %12, %266, %cst_55 {dimension_numbers = #tpu.dot_dimension_numbers<[1], [0], [0], [1], [0, 0, 1, 1], [], []>} : vector<24x8xf32>, vector<8x16xf32>, vector<24x16xf32> -> vector<24x16xf32>
    %274 = vector.extract_strided_slice %272 {offsets = [0, 0], sizes = [8, 16], strides = [1, 1]} : vector<24x16xf32> to vector<8x16xf32>
    %275 = vector.broadcast %19 : vector<8x1xf32> to vector<8x16xf32>
    %276 = arith.addf %274, %275 : vector<8x16xf32>
    %277 = vector.extract_strided_slice %273 {offsets = [0, 0], sizes = [8, 16], strides = [1, 1]} : vector<24x16xf32> to vector<8x16xf32>
    %278 = arith.addf %276, %277 : vector<8x16xf32>
    %279 = arith.negf %278 : vector<8x16xf32>
    %280 = math.exp %279 : vector<8x16xf32>
    %cst_56 = arith.constant 1.000000e+00 : f32
    %281 = vector.broadcast %cst_56 : f32 to vector<8x16xf32>
    %282 = arith.addf %281, %280 : vector<8x16xf32>
    %283 = arith.divf %281, %282 : vector<8x16xf32>
    %284 = vector.extract_strided_slice %272 {offsets = [8, 0], sizes = [8, 16], strides = [1, 1]} : vector<24x16xf32> to vector<8x16xf32>
    %285 = vector.broadcast %22 : vector<8x1xf32> to vector<8x16xf32>
    %286 = arith.addf %284, %285 : vector<8x16xf32>
    %287 = vector.extract_strided_slice %273 {offsets = [8, 0], sizes = [8, 16], strides = [1, 1]} : vector<24x16xf32> to vector<8x16xf32>
    %288 = arith.addf %286, %287 : vector<8x16xf32>
    %289 = arith.negf %288 : vector<8x16xf32>
    %290 = math.exp %289 : vector<8x16xf32>
    %cst_57 = arith.constant 1.000000e+00 : f32
    %291 = vector.broadcast %cst_57 : f32 to vector<8x16xf32>
    %292 = arith.addf %291, %290 : vector<8x16xf32>
    %293 = arith.divf %291, %292 : vector<8x16xf32>
    %294 = vector.extract_strided_slice %272 {offsets = [16, 0], sizes = [8, 16], strides = [1, 1]} : vector<24x16xf32> to vector<8x16xf32>
    %295 = vector.broadcast %23 : vector<8x1xf32> to vector<8x16xf32>
    %296 = arith.addf %294, %295 : vector<8x16xf32>
    %297 = vector.extract_strided_slice %273 {offsets = [16, 0], sizes = [8, 16], strides = [1, 1]} : vector<24x16xf32> to vector<8x16xf32>
    %298 = vector.broadcast %24 : vector<8x1xf32> to vector<8x16xf32>
    %299 = arith.addf %297, %298 : vector<8x16xf32>
    %300 = arith.mulf %283, %299 : vector<8x16xf32>
    %301 = arith.addf %296, %300 : vector<8x16xf32>
    %302 = math.tanh %301 : vector<8x16xf32>
    %cst_58 = arith.constant 1.000000e+00 : f32
    %303 = vector.broadcast %cst_58 : f32 to vector<8x16xf32>
    %304 = arith.subf %303, %293 : vector<8x16xf32>
    %305 = arith.mulf %304, %302 : vector<8x16xf32>
    %306 = arith.mulf %293, %266 : vector<8x16xf32>
    %307 = arith.addf %305, %306 : vector<8x16xf32>
    %308 = arith.truncf %307 : vector<8x16xf32> to vector<8x16xbf16>
    %cst_59 = arith.constant dense<0.000000e+00> : vector<8x16xf32>
    %309 = tpu.matmul %13, %308, %cst_59 {dimension_numbers = #tpu.dot_dimension_numbers<[1], [0], [0], [1], [0, 0, 1, 1], [], []>} : vector<8x8xbf16>, vector<8x16xbf16>, vector<8x16xf32> -> vector<8x16xf32>
    %310 = vector.broadcast %16 : vector<8x1xf32> to vector<8x16xf32>
    %311 = arith.addf %309, %310 : vector<8x16xf32>
    %c0_60 = arith.constant 0 : index
    %c96 = arith.constant 96 : index
    %312 = vector.load %arg10[%c0_60, %c96] : memref<8x192xf32, #tpu.memory_space<vmem>>, vector<8x16xf32>
    tpu.vector_store %arg10[%c0_60, %c96], %311 {strides = array<i32>} : memref<8x192xf32, #tpu.memory_space<vmem>>, vector<8x16xf32>,
    %313 = vector.extract_strided_slice %11 {offsets = [0, 112], sizes = [24, 16], strides = [1, 1]} : vector<24x192xf32> to vector<24x16xf32>
    %cst_61 = arith.constant dense<0.000000e+00> : vector<24x16xf32>
    %314 = tpu.matmul %12, %307, %cst_61 {dimension_numbers = #tpu.dot_dimension_numbers<[1], [0], [0], [1], [0, 0, 1, 1], [], []>} : vector<24x8xf32>, vector<8x16xf32>, vector<24x16xf32> -> vector<24x16xf32>
    %315 = vector.extract_strided_slice %313 {offsets = [0, 0], sizes = [8, 16], strides = [1, 1]} : vector<24x16xf32> to vector<8x16xf32>
    %316 = vector.broadcast %19 : vector<8x1xf32> to vector<8x16xf32>
    %317 = arith.addf %315, %316 : vector<8x16xf32>
    %318 = vector.extract_strided_slice %314 {offsets = [0, 0], sizes = [8, 16], strides = [1, 1]} : vector<24x16xf32> to vector<8x16xf32>
    %319 = arith.addf %317, %318 : vector<8x16xf32>
    %320 = arith.negf %319 : vector<8x16xf32>
    %321 = math.exp %320 : vector<8x16xf32>
    %cst_62 = arith.constant 1.000000e+00 : f32
    %322 = vector.broadcast %cst_62 : f32 to vector<8x16xf32>
    %323 = arith.addf %322, %321 : vector<8x16xf32>
    %324 = arith.divf %322, %323 : vector<8x16xf32>
    %325 = vector.extract_strided_slice %313 {offsets = [8, 0], sizes = [8, 16], strides = [1, 1]} : vector<24x16xf32> to vector<8x16xf32>
    %326 = vector.broadcast %22 : vector<8x1xf32> to vector<8x16xf32>
    %327 = arith.addf %325, %326 : vector<8x16xf32>
    %328 = vector.extract_strided_slice %314 {offsets = [8, 0], sizes = [8, 16], strides = [1, 1]} : vector<24x16xf32> to vector<8x16xf32>
    %329 = arith.addf %327, %328 : vector<8x16xf32>
    %330 = arith.negf %329 : vector<8x16xf32>
    %331 = math.exp %330 : vector<8x16xf32>
    %cst_63 = arith.constant 1.000000e+00 : f32
    %332 = vector.broadcast %cst_63 : f32 to vector<8x16xf32>
    %333 = arith.addf %332, %331 : vector<8x16xf32>
    %334 = arith.divf %332, %333 : vector<8x16xf32>
    %335 = vector.extract_strided_slice %313 {offsets = [16, 0], sizes = [8, 16], strides = [1, 1]} : vector<24x16xf32> to vector<8x16xf32>
    %336 = vector.broadcast %23 : vector<8x1xf32> to vector<8x16xf32>
    %337 = arith.addf %335, %336 : vector<8x16xf32>
    %338 = vector.extract_strided_slice %314 {offsets = [16, 0], sizes = [8, 16], strides = [1, 1]} : vector<24x16xf32> to vector<8x16xf32>
    %339 = vector.broadcast %24 : vector<8x1xf32> to vector<8x16xf32>
    %340 = arith.addf %338, %339 : vector<8x16xf32>
    %341 = arith.mulf %324, %340 : vector<8x16xf32>
    %342 = arith.addf %337, %341 : vector<8x16xf32>
    %343 = math.tanh %342 : vector<8x16xf32>
    %cst_64 = arith.constant 1.000000e+00 : f32
    %344 = vector.broadcast %cst_64 : f32 to vector<8x16xf32>
    %345 = arith.subf %344, %334 : vector<8x16xf32>
    %346 = arith.mulf %345, %343 : vector<8x16xf32>
    %347 = arith.mulf %334, %307 : vector<8x16xf32>
    %348 = arith.addf %346, %347 : vector<8x16xf32>
    %349 = arith.truncf %348 : vector<8x16xf32> to vector<8x16xbf16>
    %cst_65 = arith.constant dense<0.000000e+00> : vector<8x16xf32>
    %350 = tpu.matmul %13, %349, %cst_65 {dimension_numbers = #tpu.dot_dimension_numbers<[1], [0], [0], [1], [0, 0, 1, 1], [], []>} : vector<8x8xbf16>, vector<8x16xbf16>, vector<8x16xf32> -> vector<8x16xf32>
    %351 = vector.broadcast %16 : vector<8x1xf32> to vector<8x16xf32>
    %352 = arith.addf %350, %351 : vector<8x16xf32>
    %c0_66 = arith.constant 0 : index
    %c112 = arith.constant 112 : index
    %353 = vector.load %arg10[%c0_66, %c112] : memref<8x192xf32, #tpu.memory_space<vmem>>, vector<8x16xf32>
    tpu.vector_store %arg10[%c0_66, %c112], %352 {strides = array<i32>} : memref<8x192xf32, #tpu.memory_space<vmem>>, vector<8x16xf32>,
    %354 = vector.extract_strided_slice %11 {offsets = [0, 128], sizes = [24, 16], strides = [1, 1]} : vector<24x192xf32> to vector<24x16xf32>
    %cst_67 = arith.constant dense<0.000000e+00> : vector<24x16xf32>
    %355 = tpu.matmul %12, %348, %cst_67 {dimension_numbers = #tpu.dot_dimension_numbers<[1], [0], [0], [1], [0, 0, 1, 1], [], []>} : vector<24x8xf32>, vector<8x16xf32>, vector<24x16xf32> -> vector<24x16xf32>
    %356 = vector.extract_strided_slice %354 {offsets = [0, 0], sizes = [8, 16], strides = [1, 1]} : vector<24x16xf32> to vector<8x16xf32>
    %357 = vector.broadcast %19 : vector<8x1xf32> to vector<8x16xf32>
    %358 = arith.addf %356, %357 : vector<8x16xf32>
    %359 = vector.extract_strided_slice %355 {offsets = [0, 0], sizes = [8, 16], strides = [1, 1]} : vector<24x16xf32> to vector<8x16xf32>
    %360 = arith.addf %358, %359 : vector<8x16xf32>
    %361 = arith.negf %360 : vector<8x16xf32>
    %362 = math.exp %361 : vector<8x16xf32>
    %cst_68 = arith.constant 1.000000e+00 : f32
    %363 = vector.broadcast %cst_68 : f32 to vector<8x16xf32>
    %364 = arith.addf %363, %362 : vector<8x16xf32>
    %365 = arith.divf %363, %364 : vector<8x16xf32>
    %366 = vector.extract_strided_slice %354 {offsets = [8, 0], sizes = [8, 16], strides = [1, 1]} : vector<24x16xf32> to vector<8x16xf32>
    %367 = vector.broadcast %22 : vector<8x1xf32> to vector<8x16xf32>
    %368 = arith.addf %366, %367 : vector<8x16xf32>
    %369 = vector.extract_strided_slice %355 {offsets = [8, 0], sizes = [8, 16], strides = [1, 1]} : vector<24x16xf32> to vector<8x16xf32>
    %370 = arith.addf %368, %369 : vector<8x16xf32>
    %371 = arith.negf %370 : vector<8x16xf32>
    %372 = math.exp %371 : vector<8x16xf32>
    %cst_69 = arith.constant 1.000000e+00 : f32
    %373 = vector.broadcast %cst_69 : f32 to vector<8x16xf32>
    %374 = arith.addf %373, %372 : vector<8x16xf32>
    %375 = arith.divf %373, %374 : vector<8x16xf32>
    %376 = vector.extract_strided_slice %354 {offsets = [16, 0], sizes = [8, 16], strides = [1, 1]} : vector<24x16xf32> to vector<8x16xf32>
    %377 = vector.broadcast %23 : vector<8x1xf32> to vector<8x16xf32>
    %378 = arith.addf %376, %377 : vector<8x16xf32>
    %379 = vector.extract_strided_slice %355 {offsets = [16, 0], sizes = [8, 16], strides = [1, 1]} : vector<24x16xf32> to vector<8x16xf32>
    %380 = vector.broadcast %24 : vector<8x1xf32> to vector<8x16xf32>
    %381 = arith.addf %379, %380 : vector<8x16xf32>
    %382 = arith.mulf %365, %381 : vector<8x16xf32>
    %383 = arith.addf %378, %382 : vector<8x16xf32>
    %384 = math.tanh %383 : vector<8x16xf32>
    %cst_70 = arith.constant 1.000000e+00 : f32
    %385 = vector.broadcast %cst_70 : f32 to vector<8x16xf32>
    %386 = arith.subf %385, %375 : vector<8x16xf32>
    %387 = arith.mulf %386, %384 : vector<8x16xf32>
    %388 = arith.mulf %375, %348 : vector<8x16xf32>
    %389 = arith.addf %387, %388 : vector<8x16xf32>
    %390 = arith.truncf %389 : vector<8x16xf32> to vector<8x16xbf16>
    %cst_71 = arith.constant dense<0.000000e+00> : vector<8x16xf32>
    %391 = tpu.matmul %13, %390, %cst_71 {dimension_numbers = #tpu.dot_dimension_numbers<[1], [0], [0], [1], [0, 0, 1, 1], [], []>} : vector<8x8xbf16>, vector<8x16xbf16>, vector<8x16xf32> -> vector<8x16xf32>
    %392 = vector.broadcast %16 : vector<8x1xf32> to vector<8x16xf32>
    %393 = arith.addf %391, %392 : vector<8x16xf32>
    %c0_72 = arith.constant 0 : index
    %c128 = arith.constant 128 : index
    %394 = vector.load %arg10[%c0_72, %c128] : memref<8x192xf32, #tpu.memory_space<vmem>>, vector<8x16xf32>
    tpu.vector_store %arg10[%c0_72, %c128], %393 {strides = array<i32>} : memref<8x192xf32, #tpu.memory_space<vmem>>, vector<8x16xf32>,
    %395 = vector.extract_strided_slice %11 {offsets = [0, 144], sizes = [24, 16], strides = [1, 1]} : vector<24x192xf32> to vector<24x16xf32>
    %cst_73 = arith.constant dense<0.000000e+00> : vector<24x16xf32>
    %396 = tpu.matmul %12, %389, %cst_73 {dimension_numbers = #tpu.dot_dimension_numbers<[1], [0], [0], [1], [0, 0, 1, 1], [], []>} : vector<24x8xf32>, vector<8x16xf32>, vector<24x16xf32> -> vector<24x16xf32>
    %397 = vector.extract_strided_slice %395 {offsets = [0, 0], sizes = [8, 16], strides = [1, 1]} : vector<24x16xf32> to vector<8x16xf32>
    %398 = vector.broadcast %19 : vector<8x1xf32> to vector<8x16xf32>
    %399 = arith.addf %397, %398 : vector<8x16xf32>
    %400 = vector.extract_strided_slice %396 {offsets = [0, 0], sizes = [8, 16], strides = [1, 1]} : vector<24x16xf32> to vector<8x16xf32>
    %401 = arith.addf %399, %400 : vector<8x16xf32>
    %402 = arith.negf %401 : vector<8x16xf32>
    %403 = math.exp %402 : vector<8x16xf32>
    %cst_74 = arith.constant 1.000000e+00 : f32
    %404 = vector.broadcast %cst_74 : f32 to vector<8x16xf32>
    %405 = arith.addf %404, %403 : vector<8x16xf32>
    %406 = arith.divf %404, %405 : vector<8x16xf32>
    %407 = vector.extract_strided_slice %395 {offsets = [8, 0], sizes = [8, 16], strides = [1, 1]} : vector<24x16xf32> to vector<8x16xf32>
    %408 = vector.broadcast %22 : vector<8x1xf32> to vector<8x16xf32>
    %409 = arith.addf %407, %408 : vector<8x16xf32>
    %410 = vector.extract_strided_slice %396 {offsets = [8, 0], sizes = [8, 16], strides = [1, 1]} : vector<24x16xf32> to vector<8x16xf32>
    %411 = arith.addf %409, %410 : vector<8x16xf32>
    %412 = arith.negf %411 : vector<8x16xf32>
    %413 = math.exp %412 : vector<8x16xf32>
    %cst_75 = arith.constant 1.000000e+00 : f32
    %414 = vector.broadcast %cst_75 : f32 to vector<8x16xf32>
    %415 = arith.addf %414, %413 : vector<8x16xf32>
    %416 = arith.divf %414, %415 : vector<8x16xf32>
    %417 = vector.extract_strided_slice %395 {offsets = [16, 0], sizes = [8, 16], strides = [1, 1]} : vector<24x16xf32> to vector<8x16xf32>
    %418 = vector.broadcast %23 : vector<8x1xf32> to vector<8x16xf32>
    %419 = arith.addf %417, %418 : vector<8x16xf32>
    %420 = vector.extract_strided_slice %396 {offsets = [16, 0], sizes = [8, 16], strides = [1, 1]} : vector<24x16xf32> to vector<8x16xf32>
    %421 = vector.broadcast %24 : vector<8x1xf32> to vector<8x16xf32>
    %422 = arith.addf %420, %421 : vector<8x16xf32>
    %423 = arith.mulf %406, %422 : vector<8x16xf32>
    %424 = arith.addf %419, %423 : vector<8x16xf32>
    %425 = math.tanh %424 : vector<8x16xf32>
    %cst_76 = arith.constant 1.000000e+00 : f32
    %426 = vector.broadcast %cst_76 : f32 to vector<8x16xf32>
    %427 = arith.subf %426, %416 : vector<8x16xf32>
    %428 = arith.mulf %427, %425 : vector<8x16xf32>
    %429 = arith.mulf %416, %389 : vector<8x16xf32>
    %430 = arith.addf %428, %429 : vector<8x16xf32>
    %431 = arith.truncf %430 : vector<8x16xf32> to vector<8x16xbf16>
    %cst_77 = arith.constant dense<0.000000e+00> : vector<8x16xf32>
    %432 = tpu.matmul %13, %431, %cst_77 {dimension_numbers = #tpu.dot_dimension_numbers<[1], [0], [0], [1], [0, 0, 1, 1], [], []>} : vector<8x8xbf16>, vector<8x16xbf16>, vector<8x16xf32> -> vector<8x16xf32>
    %433 = vector.broadcast %16 : vector<8x1xf32> to vector<8x16xf32>
    %434 = arith.addf %432, %433 : vector<8x16xf32>
    %c0_78 = arith.constant 0 : index
    %c144 = arith.constant 144 : index
    %435 = vector.load %arg10[%c0_78, %c144] : memref<8x192xf32, #tpu.memory_space<vmem>>, vector<8x16xf32>
    tpu.vector_store %arg10[%c0_78, %c144], %434 {strides = array<i32>} : memref<8x192xf32, #tpu.memory_space<vmem>>, vector<8x16xf32>,
    %436 = vector.extract_strided_slice %11 {offsets = [0, 160], sizes = [24, 16], strides = [1, 1]} : vector<24x192xf32> to vector<24x16xf32>
    %cst_79 = arith.constant dense<0.000000e+00> : vector<24x16xf32>
    %437 = tpu.matmul %12, %430, %cst_79 {dimension_numbers = #tpu.dot_dimension_numbers<[1], [0], [0], [1], [0, 0, 1, 1], [], []>} : vector<24x8xf32>, vector<8x16xf32>, vector<24x16xf32> -> vector<24x16xf32>
    %438 = vector.extract_strided_slice %436 {offsets = [0, 0], sizes = [8, 16], strides = [1, 1]} : vector<24x16xf32> to vector<8x16xf32>
    %439 = vector.broadcast %19 : vector<8x1xf32> to vector<8x16xf32>
    %440 = arith.addf %438, %439 : vector<8x16xf32>
    %441 = vector.extract_strided_slice %437 {offsets = [0, 0], sizes = [8, 16], strides = [1, 1]} : vector<24x16xf32> to vector<8x16xf32>
    %442 = arith.addf %440, %441 : vector<8x16xf32>
    %443 = arith.negf %442 : vector<8x16xf32>
    %444 = math.exp %443 : vector<8x16xf32>
    %cst_80 = arith.constant 1.000000e+00 : f32
    %445 = vector.broadcast %cst_80 : f32 to vector<8x16xf32>
    %446 = arith.addf %445, %444 : vector<8x16xf32>
    %447 = arith.divf %445, %446 : vector<8x16xf32>
    %448 = vector.extract_strided_slice %436 {offsets = [8, 0], sizes = [8, 16], strides = [1, 1]} : vector<24x16xf32> to vector<8x16xf32>
    %449 = vector.broadcast %22 : vector<8x1xf32> to vector<8x16xf32>
    %450 = arith.addf %448, %449 : vector<8x16xf32>
    %451 = vector.extract_strided_slice %437 {offsets = [8, 0], sizes = [8, 16], strides = [1, 1]} : vector<24x16xf32> to vector<8x16xf32>
    %452 = arith.addf %450, %451 : vector<8x16xf32>
    %453 = arith.negf %452 : vector<8x16xf32>
    %454 = math.exp %453 : vector<8x16xf32>
    %cst_81 = arith.constant 1.000000e+00 : f32
    %455 = vector.broadcast %cst_81 : f32 to vector<8x16xf32>
    %456 = arith.addf %455, %454 : vector<8x16xf32>
    %457 = arith.divf %455, %456 : vector<8x16xf32>
    %458 = vector.extract_strided_slice %436 {offsets = [16, 0], sizes = [8, 16], strides = [1, 1]} : vector<24x16xf32> to vector<8x16xf32>
    %459 = vector.broadcast %23 : vector<8x1xf32> to vector<8x16xf32>
    %460 = arith.addf %458, %459 : vector<8x16xf32>
    %461 = vector.extract_strided_slice %437 {offsets = [16, 0], sizes = [8, 16], strides = [1, 1]} : vector<24x16xf32> to vector<8x16xf32>
    %462 = vector.broadcast %24 : vector<8x1xf32> to vector<8x16xf32>
    %463 = arith.addf %461, %462 : vector<8x16xf32>
    %464 = arith.mulf %447, %463 : vector<8x16xf32>
    %465 = arith.addf %460, %464 : vector<8x16xf32>
    %466 = math.tanh %465 : vector<8x16xf32>
    %cst_82 = arith.constant 1.000000e+00 : f32
    %467 = vector.broadcast %cst_82 : f32 to vector<8x16xf32>
    %468 = arith.subf %467, %457 : vector<8x16xf32>
    %469 = arith.mulf %468, %466 : vector<8x16xf32>
    %470 = arith.mulf %457, %430 : vector<8x16xf32>
    %471 = arith.addf %469, %470 : vector<8x16xf32>
    %472 = arith.truncf %471 : vector<8x16xf32> to vector<8x16xbf16>
    %cst_83 = arith.constant dense<0.000000e+00> : vector<8x16xf32>
    %473 = tpu.matmul %13, %472, %cst_83 {dimension_numbers = #tpu.dot_dimension_numbers<[1], [0], [0], [1], [0, 0, 1, 1], [], []>} : vector<8x8xbf16>, vector<8x16xbf16>, vector<8x16xf32> -> vector<8x16xf32>
    %474 = vector.broadcast %16 : vector<8x1xf32> to vector<8x16xf32>
    %475 = arith.addf %473, %474 : vector<8x16xf32>
    %c0_84 = arith.constant 0 : index
    %c160 = arith.constant 160 : index
    %476 = vector.load %arg10[%c0_84, %c160] : memref<8x192xf32, #tpu.memory_space<vmem>>, vector<8x16xf32>
    tpu.vector_store %arg10[%c0_84, %c160], %475 {strides = array<i32>} : memref<8x192xf32, #tpu.memory_space<vmem>>, vector<8x16xf32>,
    %477 = vector.extract_strided_slice %11 {offsets = [0, 176], sizes = [24, 16], strides = [1, 1]} : vector<24x192xf32> to vector<24x16xf32>
    %cst_85 = arith.constant dense<0.000000e+00> : vector<24x16xf32>
    %478 = tpu.matmul %12, %471, %cst_85 {dimension_numbers = #tpu.dot_dimension_numbers<[1], [0], [0], [1], [0, 0, 1, 1], [], []>} : vector<24x8xf32>, vector<8x16xf32>, vector<24x16xf32> -> vector<24x16xf32>
    %479 = vector.extract_strided_slice %477 {offsets = [0, 0], sizes = [8, 16], strides = [1, 1]} : vector<24x16xf32> to vector<8x16xf32>
    %480 = vector.broadcast %19 : vector<8x1xf32> to vector<8x16xf32>
    %481 = arith.addf %479, %480 : vector<8x16xf32>
    %482 = vector.extract_strided_slice %478 {offsets = [0, 0], sizes = [8, 16], strides = [1, 1]} : vector<24x16xf32> to vector<8x16xf32>
    %483 = arith.addf %481, %482 : vector<8x16xf32>
    %484 = arith.negf %483 : vector<8x16xf32>
    %485 = math.exp %484 : vector<8x16xf32>
    %cst_86 = arith.constant 1.000000e+00 : f32
    %486 = vector.broadcast %cst_86 : f32 to vector<8x16xf32>
    %487 = arith.addf %486, %485 : vector<8x16xf32>
    %488 = arith.divf %486, %487 : vector<8x16xf32>
    %489 = vector.extract_strided_slice %477 {offsets = [8, 0], sizes = [8, 16], strides = [1, 1]} : vector<24x16xf32> to vector<8x16xf32>
    %490 = vector.broadcast %22 : vector<8x1xf32> to vector<8x16xf32>
    %491 = arith.addf %489, %490 : vector<8x16xf32>
    %492 = vector.extract_strided_slice %478 {offsets = [8, 0], sizes = [8, 16], strides = [1, 1]} : vector<24x16xf32> to vector<8x16xf32>
    %493 = arith.addf %491, %492 : vector<8x16xf32>
    %494 = arith.negf %493 : vector<8x16xf32>
    %495 = math.exp %494 : vector<8x16xf32>
    %cst_87 = arith.constant 1.000000e+00 : f32
    %496 = vector.broadcast %cst_87 : f32 to vector<8x16xf32>
    %497 = arith.addf %496, %495 : vector<8x16xf32>
    %498 = arith.divf %496, %497 : vector<8x16xf32>
    %499 = vector.extract_strided_slice %477 {offsets = [16, 0], sizes = [8, 16], strides = [1, 1]} : vector<24x16xf32> to vector<8x16xf32>
    %500 = vector.broadcast %23 : vector<8x1xf32> to vector<8x16xf32>
    %501 = arith.addf %499, %500 : vector<8x16xf32>
    %502 = vector.extract_strided_slice %478 {offsets = [16, 0], sizes = [8, 16], strides = [1, 1]} : vector<24x16xf32> to vector<8x16xf32>
    %503 = vector.broadcast %24 : vector<8x1xf32> to vector<8x16xf32>
    %504 = arith.addf %502, %503 : vector<8x16xf32>
    %505 = arith.mulf %488, %504 : vector<8x16xf32>
    %506 = arith.addf %501, %505 : vector<8x16xf32>
    %507 = math.tanh %506 : vector<8x16xf32>
    %cst_88 = arith.constant 1.000000e+00 : f32
    %508 = vector.broadcast %cst_88 : f32 to vector<8x16xf32>
    %509 = arith.subf %508, %498 : vector<8x16xf32>
    %510 = arith.mulf %509, %507 : vector<8x16xf32>
    %511 = arith.mulf %498, %471 : vector<8x16xf32>
    %512 = arith.addf %510, %511 : vector<8x16xf32>
    %513 = arith.truncf %512 : vector<8x16xf32> to vector<8x16xbf16>
    %cst_89 = arith.constant dense<0.000000e+00> : vector<8x16xf32>
    %514 = tpu.matmul %13, %513, %cst_89 {dimension_numbers = #tpu.dot_dimension_numbers<[1], [0], [0], [1], [0, 0, 1, 1], [], []>} : vector<8x8xbf16>, vector<8x16xbf16>, vector<8x16xf32> -> vector<8x16xf32>
    %515 = vector.broadcast %16 : vector<8x1xf32> to vector<8x16xf32>
    %516 = arith.addf %514, %515 : vector<8x16xf32>
    %c0_90 = arith.constant 0 : index
    %c176 = arith.constant 176 : index
    %517 = vector.load %arg10[%c0_90, %c176] : memref<8x192xf32, #tpu.memory_space<vmem>>, vector<8x16xf32>
    tpu.vector_store %arg10[%c0_90, %c176], %516 {strides = array<i32>} : memref<8x192xf32, #tpu.memory_space<vmem>>, vector<8x16xf32>,
    return
  }
  func.func @transform_0(%arg0: i32) -> (i32, i32) {
    %c0_i32 = arith.constant 0 : i32
    %c0_i32_0 = arith.constant 0 : i32
    return %c0_i32, %arg0 : i32, i32
  }
  func.func @transform_1(%arg0: i32) -> (i32, i32) {
    %c0_i32 = arith.constant 0 : i32
    %c0_i32_0 = arith.constant 0 : i32
    %c0_i32_1 = arith.constant 0 : i32
    return %c0_i32, %c0_i32_0 : i32, i32
  }
  func.func @transform_2(%arg0: i32) -> (i32, i32) {
    %c0_i32 = arith.constant 0 : i32
    %c0_i32_0 = arith.constant 0 : i32
    %c0_i32_1 = arith.constant 0 : i32
    return %c0_i32, %c0_i32_0 : i32, i32
  }
  func.func @transform_3(%arg0: i32) -> (i32, i32) {
    %c0_i32 = arith.constant 0 : i32
    %c0_i32_0 = arith.constant 0 : i32
    %c0_i32_1 = arith.constant 0 : i32
    return %c0_i32, %c0_i32_0 : i32, i32
  }
  func.func @transform_4(%arg0: i32) -> (i32, i32) {
    %c0_i32 = arith.constant 0 : i32
    %c0_i32_0 = arith.constant 0 : i32
    %c0_i32_1 = arith.constant 0 : i32
    return %c0_i32, %c0_i32_0 : i32, i32
  }
  func.func @transform_5(%arg0: i32) -> (i32, i32) {
    %c0_i32 = arith.constant 0 : i32
    %c0_i32_0 = arith.constant 0 : i32
    %c0_i32_1 = arith.constant 0 : i32
    return %c0_i32, %c0_i32_0 : i32, i32
  }
  func.func @transform_6(%arg0: i32) -> (i32, i32) {
    %c0_i32 = arith.constant 0 : i32
    %c0_i32_0 = arith.constant 0 : i32
    %c0_i32_1 = arith.constant 0 : i32
    return %c0_i32, %c0_i32_0 : i32, i32
  }
  func.func @transform_7(%arg0: i32) -> (i32, i32) {
    %c0_i32 = arith.constant 0 : i32
    %c0_i32_0 = arith.constant 0 : i32
    %c0_i32_1 = arith.constant 0 : i32
    return %c0_i32, %c0_i32_0 : i32, i32
  }
  func.func @transform_8(%arg0: i32) -> (i32, i32) {
    %c0_i32 = arith.constant 0 : i32
    %c0_i32_0 = arith.constant 0 : i32
    %c0_i32_1 = arith.constant 0 : i32
    return %c0_i32, %c0_i32_0 : i32, i32
  }
  func.func @transform_9(%arg0: i32) -> (i32, i32) {
    %c0_i32 = arith.constant 0 : i32
    %c0_i32_0 = arith.constant 0 : i32
    return %c0_i32, %arg0 : i32, i32
  }
}

</mosaic_0001>

<llo_original>
// kernel: tpu_custom_call.1
$region0: #{tpu_custom_call.1}
  #allocation0 [shape = 'u32[]', space=smem, size = 0x4, offset = 0x4, fixed_abs, tag = 'smem constant byte address 0x4 - core index']
  #allocation1 [shape = 'u32[144,128]{1,0:T(1,128)}', space=vmem, size = 0x12000, scoped, tag = 'internal scratch']
  %s0 = inlined_call_operand.vmem [shape: f32[1,192], index: 0, kind: input, shape index: {}]
  %s1 = inlined_call_operand.vmem [shape: f32[8,1], index: 1, kind: input, shape index: {}]
  %s2 = inlined_call_operand.vmem [shape: f32[8,1], index: 2, kind: input, shape index: {}]
  %s3 = inlined_call_operand.vmem [shape: bf16[24,8], index: 3, kind: input, shape index: {}]
  %s4 = inlined_call_operand.vmem [shape: f32[24,8], index: 4, kind: input, shape index: {}]
  %s5 = inlined_call_operand.vmem [shape: f32[24,1], index: 5, kind: input, shape index: {}]
  %s6 = inlined_call_operand.vmem [shape: f32[24,1], index: 6, kind: input, shape index: {}]
  %s7 = inlined_call_operand.vmem [shape: bf16[8,8], index: 7, kind: input, shape index: {}]
  %s8 = inlined_call_operand.vmem [shape: f32[8,1], index: 8, kind: input, shape index: {}]
  %s9 = inlined_call_operand.hbm [shape: f32[8,192], index: 9, kind: output, shape index: {}]
  %s10 = sld [smem:[#allocation0]]
  $region46: #{tpu_custom_call.1} parent=0
    _
  %s12 = ssub.s32 1, %s10
  %s13 = scalar_select 0, %s12, %s10
  $region1: #{tpu_custom_call.1} parent=0
    #allocation2 [shape = 'u8[8192]{0}', space=vmem, size = 0x2000, scoped, tag = 'output window, operand 0, single buffered']
    #allocation3 [shape = 's32[1]{0}', space=sflag, size = 0x4, scoped, tag = 'scoped memory for tpu_custom_call.1']
    %14 = vsyncpa [#allocation3], 0
    // Predicated region
    $region2: #{tpu_custom_call.1} parent=1 // pred_check
      _
    $region3: #{tpu_custom_call.1} parent=1 // pred_check_branch
      %16 = sbr.rel (0) target = $region5
    $region4: #{tpu_custom_call.1} parent=1 // pred_region
      _
    $region5: #{tpu_custom_call.1} parent=1 // pred_fallthru
      _
    // Predicated region
    $region6: #{tpu_custom_call.1} parent=1 // pred_check
      _
    $region7: #{tpu_custom_call.1} parent=1 // pred_check_branch
      %18 = sbr.rel (0) target = $region9
    $region8: #{tpu_custom_call.1} parent=1 // pred_region
      _
    $region9: #{tpu_custom_call.1} parent=1 // pred_fallthru
      _
    // Predicated region
    $region10: #{tpu_custom_call.1} parent=1 // pred_check
      _
    $region11: #{tpu_custom_call.1} parent=1 // pred_check_branch
      %20 = sbr.rel (0) target = $region13
    $region12: #{tpu_custom_call.1} parent=1 // pred_region
      _
    $region13: #{tpu_custom_call.1} parent=1 // pred_fallthru
      _
    // Predicated region
    $region14: #{tpu_custom_call.1} parent=1 // pred_check
      _
    $region15: #{tpu_custom_call.1} parent=1 // pred_check_branch
      %22 = sbr.rel (0) target = $region17
    $region16: #{tpu_custom_call.1} parent=1 // pred_region
      _
    $region17: #{tpu_custom_call.1} parent=1 // pred_fallthru
      _
    // Predicated region
    $region18: #{tpu_custom_call.1} parent=1 // pred_check
      _
    $region19: #{tpu_custom_call.1} parent=1 // pred_check_branch
      %24 = sbr.rel (0) target = $region21
    $region20: #{tpu_custom_call.1} parent=1 // pred_region
      _
    $region21: #{tpu_custom_call.1} parent=1 // pred_fallthru
      _
    // Predicated region
    $region22: #{tpu_custom_call.1} parent=1 // pred_check
      _
    $region23: #{tpu_custom_call.1} parent=1 // pred_check_branch
      %26 = sbr.rel (0) target = $region25
    $region24: #{tpu_custom_call.1} parent=1 // pred_region
      _
    $region25: #{tpu_custom_call.1} parent=1 // pred_fallthru
      _
    // Predicated region
    $region26: #{tpu_custom_call.1} parent=1 // pred_check
      _
    $region27: #{tpu_custom_call.1} parent=1 // pred_check_branch
      %28 = sbr.rel (0) target = $region29
    $region28: #{tpu_custom_call.1} parent=1 // pred_region
      _
    $region29: #{tpu_custom_call.1} parent=1 // pred_fallthru
      _
    // Predicated region
    $region30: #{tpu_custom_call.1} parent=1 // pred_check
      _
    $region31: #{tpu_custom_call.1} parent=1 // pred_check_branch
      %30 = sbr.rel (0) target = $region33
    $region32: #{tpu_custom_call.1} parent=1 // pred_region
      _
    $region33: #{tpu_custom_call.1} parent=1 // pred_fallthru
      _
    // Predicated region
    $region34: #{tpu_custom_call.1} parent=1 // pred_check
      _
    $region35: #{tpu_custom_call.1} parent=1 // pred_check_branch
      %32 = sbr.rel (0) target = $region37
    $region36: #{tpu_custom_call.1} parent=1 // pred_region
      _
    $region37: #{tpu_custom_call.1} parent=1 // pred_fallthru
      _
    %v34 = vld [vmem:[%s0] sm:$0x3]
    %v35 = vld [vmem:[%s1] sm:$0xff]
    %v37 = vlaneseq
    %v38 = vshrl.u32 %v37, 7
    %v39 = vsub.s32 0, %v38
    %v40 = vrot.slane %v34, %v39
    %v41 = vlaneseq
    %v42 = vshrl.u32 %v41, 7
    %v43 = vsub.s32 1, %v42
    %v44 = vrot.slane %v34, %v43
    %48 = vset.pattern.permute.xlu0 0
    %49 = vperm.xlu0 %48, %v35
    %v50 = vpop.permute.xlu0 %49
    %v52 = vmul.f32 %v40, %v50
    %v53 = vmul.f32 %v44, %v50
    %v54 = vld [vmem:[%s2] sm:$0xff]
    %56 = vset.pattern.permute.xlu0 0
    %57 = vperm.xlu0 %56, %v54
    %v58 = vpop.permute.xlu0 %57
    %v60 = vadd.f32 %v52, %v58
    %v61 = vadd.f32 %v53, %v58
    %v62 = vand.u32 2147483647, %v60
    %vm63 = vcmp.le.f32.partialorder %v62, 0.7853982
    %vm64 = vcmp.lt.s32.totalorder %v60, 0
    %v65 = vand.u32 %v60, 2139095040
    %v66 = vshrl.u32 %v65, 23
    %v67 = vsub.s32 %v66, 127
    %v68 = vand.u32 2147483647, %v60
    %v69 = vand.u32 %v68, 8388607
    %v70 = vor.u32 %v69, 8388608
    %v71 = vsub.s32 0, %v70
    %v72 = vadd.s32 %v67, 1
    %vm73 = vcmp.gt.s32.totalorder %v72, 0
    %v74 = vsel %vm73, %v72, 0
    %v75 = vshrl.u32 %v74, 5
    %v76 = vand.u32 %v74, 31
    %v77 = vsub.s32 32, %v76
    %v78 = vshrl.u32 683565275, %v77
    %v79 = vshll.u32 683565275, %v76
    %v80 = vshrl.u32 2475754826, %v77
    %v81 = vor.u32 %v79, %v80
    %v82 = vshll.u32 2475754826, %v76
    %v83 = vshrl.u32 2131351028, %v77
    %v84 = vor.u32 %v82, %v83
    %v85 = vshll.u32 2131351028, %v76
    %v86 = vshrl.u32 2102212464, %v77
    %v87 = vor.u32 %v85, %v86
    %v88 = vshll.u32 2102212464, %v76
    %v89 = vshrl.u32 920167782, %v77
    %v90 = vor.u32 %v88, %v89
    %v91 = vshll.u32 920167782, %v76
    %v92 = vshrl.u32 1326507024, %v77
    %v93 = vor.u32 %v91, %v92
    %vm94 = vcmp.lt.s32.totalorder %v75, 1
    %vm95 = vcmp.lt.s32.totalorder %v75, 2
    %vm96 = vcmp.lt.s32.totalorder %v75, 3
    %vm97 = vcmp.lt.s32.totalorder %v75, 4
    %v98 = vsel %vm94, %v78, %v81
    %v99 = vsel %vm97, %v87, 2102212464
    %v100 = vsel %vm96, %v84, %v99
    %v101 = vsel %vm95, %v98, %v100
    %v102 = vsel %vm94, %v81, %v84
    %v103 = vsel %vm97, %v90, 920167782
    %v104 = vsel %vm96, %v87, %v103
    %v105 = vsel %vm95, %v102, %v104
    %v106 = vsel %vm94, %v84, %v87
    %v107 = vsel %vm97, %v93, 1326507024
    %v108 = vsel %vm96, %v90, %v107
    %v109 = vsel %vm95, %v106, %v108
    %v110 = vshll.u32 %v70, 8
    %v111 = vmul.u32.u64.compose %v110, %v109
    %v112 = vextract.low.u32 %v111
    %v113 = vextract.high.u32 %v111
    %v114 = vmul.u32.u64.compose %v110, %v105
    %v115 = vextract.low.u32 %v114
    %v116 = vextract.high.u32 %v114
    %v117 = vmul.u32 %v110, %v101
    %v118 = vadd.s32 %v113, %v115
    %vm119 = vc.u32 %v113, %v115
    %v120 = vadd.s32 %v116, 1
    %v121 = vsel %vm119, %v120, %v116
    %v122 = vadd.s32 %v117, %v121
    %v123 = vadd.s32 %v122, 536870912
    %v124 = vshrl.u32 %v123, 30
    %v125 = vshll.u32 %v124, 30
    %v126 = vsub.s32 %v122, %v125
    %vm127 = vcmp.lt.s32.totalorder %v126, 0
    %v128 = vsub.s32 0, %v126
    %v129 = vsel %vm127, %v128, %v126
    %v130 = vclz %v129
    %v131 = vsub.s32 %v130, 2
    %vm132 = vcmp.gt.s32.totalorder 0, %v131
    %v133 = vsel %vm132, 0, %v131
    %v134 = vsub.s32 32, %v133
    %v135 = vshll.u32 %v126, %v133
    %v136 = vshrl.u32 %v118, %v134
    %v137 = vor.u32 %v135, %v136
    %v138 = vsub.s32 4294967266, %v133
    %v139 = vadd.s32 %v138, 127
    %v140 = vshll.u32 %v139, 23
    %v141 = vor.u32 4788187, %v140
    %v142 = vand.u32 2147483647, %v141
    %v144 = vcvt.s32.f32 %v137
    %v145 = vmul.f32 %v144, %v142
    %v146 = vxor.u32 %v145, 2147483648
    %v147 = vsel %vm64, %v146, %v145
    %v148 = vsub.s32 4, %v124
    %v149 = vsel %vm64, %v148, %v124
    %v150 = vsel %vm63, %v60, %v147
    %v151 = vsel %vm63, 0, %v149
    %v152 = vcosq.f32.pop %v150
    %v153 = vsinq.f32.pop %v150
    %vm154 = vweird.f32 %v60
    %v155 = vadd.s32 %v151, 3
    %v156 = vand.u32 %v155, 3
    %vm157 = vcmp.lt.s32.totalorder %v156, 2
    %vm158 = vcmp.eq.s32.totalorder %v156, 0
    %v159 = vxor.u32 %v153, 2147483648
    %v160 = vsel %vm158, %v152, %v159
    %vm161 = vcmp.eq.s32.totalorder %v156, 2
    %v162 = vxor.u32 %v152, 2147483648
    %v163 = vsel %vm161, %v162, %v153
    %v164 = vsel %vm157, %v160, %v163
    %v165 = vsel %vm154, nan, %v164
    %v166 = vand.u32 2147483647, %v61
    %vm167 = vcmp.le.f32.partialorder %v166, 0.7853982
    %vm168 = vcmp.lt.s32.totalorder %v61, 0
    %v169 = vand.u32 %v61, 2139095040
    %v170 = vshrl.u32 %v169, 23
    %v171 = vsub.s32 %v170, 127
    %v172 = vand.u32 2147483647, %v61
    %v173 = vand.u32 %v172, 8388607
    %v174 = vor.u32 %v173, 8388608
    %v175 = vsub.s32 0, %v174
    %v176 = vadd.s32 %v171, 1
    %vm177 = vcmp.gt.s32.totalorder %v176, 0
    %v178 = vsel %vm177, %v176, 0
    %v179 = vshrl.u32 %v178, 5
    %v180 = vand.u32 %v178, 31
    %v181 = vsub.s32 32, %v180
    %v182 = vshrl.u32 683565275, %v181
    %v183 = vshll.u32 683565275, %v180
    %v184 = vshrl.u32 2475754826, %v181
    %v185 = vor.u32 %v183, %v184
    %v186 = vshll.u32 2475754826, %v180
    %v187 = vshrl.u32 2131351028, %v181
    %v188 = vor.u32 %v186, %v187
    %v189 = vshll.u32 2131351028, %v180
    %v190 = vshrl.u32 2102212464, %v181
    %v191 = vor.u32 %v189, %v190
    %v192 = vshll.u32 2102212464, %v180
    %v193 = vshrl.u32 920167782, %v181
    %v194 = vor.u32 %v192, %v193
    %v195 = vshll.u32 920167782, %v180
    %v196 = vshrl.u32 1326507024, %v181
    %v197 = vor.u32 %v195, %v196
    %vm198 = vcmp.lt.s32.totalorder %v179, 1
    %vm199 = vcmp.lt.s32.totalorder %v179, 2
    %vm200 = vcmp.lt.s32.totalorder %v179, 3
    %vm201 = vcmp.lt.s32.totalorder %v179, 4
    %v202 = vsel %vm198, %v182, %v185
    %v203 = vsel %vm201, %v191, 2102212464
    %v204 = vsel %vm200, %v188, %v203
    %v205 = vsel %vm199, %v202, %v204
    %v206 = vsel %vm198, %v185, %v188
    %v207 = vsel %vm201, %v194, 920167782
    %v208 = vsel %vm200, %v191, %v207
    %v209 = vsel %vm199, %v206, %v208
    %v210 = vsel %vm198, %v188, %v191
    %v211 = vsel %vm201, %v197, 1326507024
    %v212 = vsel %vm200, %v194, %v211
    %v213 = vsel %vm199, %v210, %v212
    %v214 = vshll.u32 %v174, 8
    %v215 = vmul.u32.u64.compose %v214, %v213
    %v216 = vextract.low.u32 %v215
    %v217 = vextract.high.u32 %v215
    %v218 = vmul.u32.u64.compose %v214, %v209
    %v219 = vextract.low.u32 %v218
    %v220 = vextract.high.u32 %v218
    %v221 = vmul.u32 %v214, %v205
    %v222 = vadd.s32 %v217, %v219
    %vm223 = vc.u32 %v217, %v219
    %v224 = vadd.s32 %v220, 1
    %v225 = vsel %vm223, %v224, %v220
    %v226 = vadd.s32 %v221, %v225
    %v227 = vadd.s32 %v226, 536870912
    %v228 = vshrl.u32 %v227, 30
    %v229 = vshll.u32 %v228, 30
    %v230 = vsub.s32 %v226, %v229
    %vm231 = vcmp.lt.s32.totalorder %v230, 0
    %v232 = vsub.s32 0, %v230
    %v233 = vsel %vm231, %v232, %v230
    %v234 = vclz %v233
    %v235 = vsub.s32 %v234, 2
    %vm236 = vcmp.gt.s32.totalorder 0, %v235
    %v237 = vsel %vm236, 0, %v235
    %v238 = vsub.s32 32, %v237
    %v239 = vshll.u32 %v230, %v237
    %v240 = vshrl.u32 %v222, %v238
    %v241 = vor.u32 %v239, %v240
    %v242 = vsub.s32 4294967266, %v237
    %v243 = vadd.s32 %v242, 127
    %v244 = vshll.u32 %v243, 23
    %v245 = vor.u32 4788187, %v244
    %v246 = vand.u32 2147483647, %v245
    %v248 = vcvt.s32.f32 %v241
    %v249 = vmul.f32 %v248, %v246
    %v250 = vxor.u32 %v249, 2147483648
    %v251 = vsel %vm168, %v250, %v249
    %v252 = vsub.s32 4, %v228
    %v253 = vsel %vm168, %v252, %v228
    %v254 = vsel %vm167, %v61, %v251
    %v255 = vsel %vm167, 0, %v253
    %v256 = vcosq.f32.pop %v254
    %v257 = vsinq.f32.pop %v254
    %vm258 = vweird.f32 %v61
    %v259 = vadd.s32 %v255, 3
    %v260 = vand.u32 %v259, 3
    %vm261 = vcmp.lt.s32.totalorder %v260, 2
    %vm262 = vcmp.eq.s32.totalorder %v260, 0
    %v263 = vxor.u32 %v257, 2147483648
    %v264 = vsel %vm262, %v256, %v263
    %vm265 = vcmp.eq.s32.totalorder %v260, 2
    %v266 = vxor.u32 %v256, 2147483648
    %v267 = vsel %vm265, %v266, %v257
    %v268 = vsel %vm261, %v264, %v267
    %v269 = vsel %vm258, nan, %v268
    %v270 = vld [vmem:[%s3] sm:$0xf]
    %v271 = vld [vmem:[%s3 + $0x4] sm:$0xf]
    %v272 = vld [vmem:[%s3 + $0x8] sm:$0xf]
    %v273 = vpack.c.bf16 %v165, %v165
    %v274 = vpack.c.bf16 %v269, %v269
    %v278 = vunpack.c.l.b16 %v270
    %v279 = vunpack.c.l.b16 %v271
    %v280 = vunpack.c.l.b16 %v272
    %v281 = vpack.c.b16 %v279, %v278
    %v282 = vpack.c.b16 %v280, %v280
    %vm283 = vcmask 64512
    %v285 = vsel %vm283, %v281, 0
    %v288 = vsel %vm283, %v282, 0
    %vm290 = vcmask 1043456
    %v292 = vsel %vm290, %v273, 0
    %v295 = vsel %vm290, %v274, 0
    %297 = vmatprep.subr.bf16.mxu0 %v295
    %298 = vmatpush1.bf16.msra.mxu0 %v292
    %299 = vmatprep.subr.bf16.mxu0 0
    %300 = vmatpush1.bf16.msra.mxu0 0
    %301 = vmatprep.subr.bf16.mxu0 0
    %302 = vmatpush1.bf16.msra.mxu0 0
    %303 = vmatprep.subr.bf16.mxu0 0
    %304 = vmatpush1.bf16.msra.mxu0 0
    %305 = vmatprep.subr.bf16.mxu0 0
    %306 = vmatpush1.bf16.msra.mxu0 0
    %307 = vmatprep.subr.bf16.mxu0 0
    %308 = vmatpush1.bf16.msra.mxu0 0
    %309 = vmatprep.subr.bf16.mxu0 0
    %310 = vmatpush1.bf16.msra.mxu0 0
    %311 = vmatprep.subr.bf16.mxu0 0
    %312 = vmatpush1.bf16.msra.mxu0 0
    %313 = vmatprep.subr.bf16.mxu0 0
    %314 = vmatpush1.bf16.msra.mxu0 0
    %315 = vmatprep.subr.bf16.mxu0 0
    %316 = vmatpush1.bf16.msra.mxu0 0
    %317 = vmatprep.subr.bf16.mxu0 0
    %318 = vmatpush1.bf16.msra.mxu0 0
    %319 = vmatprep.subr.bf16.mxu0 0
    %320 = vmatpush1.bf16.msra.mxu0 0
    %321 = vmatprep.subr.bf16.mxu0 0
    %322 = vmatpush1.bf16.msra.mxu0 0
    %323 = vmatprep.subr.bf16.mxu0 0
    %324 = vmatpush1.bf16.msra.mxu0 0
    %325 = vmatprep.subr.bf16.mxu0 0
    %326 = vmatpush1.bf16.msra.mxu0 0
    %327 = vmatprep.subr.bf16.mxu0 0
    %328 = vmatpush1.bf16.msra.mxu0 0
    %329 = vmatprep.mubr.bf16.mxu0 0
    %330 = vmatmul.mubr.bf16.gmra.mrb[0].mxu0 %v285
    %v331 = vpop.f32.mrb[0].mxu0
    %v332 = vadd.f32 0.0, %v331
    %v333 = vpop.f32.mrb[0].mxu0
    %v334 = vadd.f32 0.0, %v333
    %v335 = vpop.f32.mrb[0].mxu0
    %v336 = vadd.f32 0.0, %v335
    %v337 = vpop.f32.mrb[0].mxu0
    %v338 = vadd.f32 0.0, %v337
    %339 = vmatprep.mubr.bf16.mxu0 0
    %340 = vmatmul.mubr.bf16.gmra.mrb[0].mxu0 %v288
    %v341 = vpop.f32.mrb[0].mxu0
    %v342 = vadd.f32 0.0, %v341
    %v343 = vpop.f32.mrb[0].mxu0
    %v344 = vadd.f32 0.0, %v343
    %v345 = vpop.f32.mrb[0].mxu0
    %v346 = vpop.f32.mrb[0].mxu0
    %347 = vdwg.mxu0
    %v348 = vld [vmem:[%s4] sm:$0xff]
    %v349 = vld [vmem:[%s4 + $0x8] sm:$0xff]
    %v350 = vld [vmem:[%s4 + $0x10] sm:$0xff]
    %v351 = vld [vmem:[%s7] sm:$0xf]
    %v352 = vld [vmem:[%s5] sm:$0xff]
    %v353 = vld [vmem:[%s5 + $0x8] sm:$0xff]
    %v354 = vld [vmem:[%s5 + $0x10] sm:$0xff]
    %v355 = vld [vmem:[%s6] sm:$0xff]
    %v356 = vld [vmem:[%s6 + $0x8] sm:$0xff]
    %v357 = vld [vmem:[%s6 + $0x10] sm:$0xff]
    %v358 = vld [vmem:[%s8] sm:$0xff]
    %v359 = vadd.f32 %v352, %v355
    %v360 = vadd.f32 %v353, %v356
    %v362 = vsel %vm283, %v348, 0
    %v365 = vsel %vm283, %v349, 0
    %v368 = vsel %vm283, %v350, 0
    %370 = vmatprep.subr.mxu0 0.0
    %371 = vmatpush1.msra.mxu0 0.0
    %372 = vmatprep.subr.mxu0 0.0
    %373 = vmatpush1.msra.mxu0 0.0
    %374 = vmatprep.subr.mxu0 0.0
    %375 = vmatpush1.msra.mxu0 0.0
    %376 = vmatprep.subr.mxu0 0.0
    %377 = vmatpush1.msra.mxu0 0.0
    %378 = vmatprep.subr.mxu0 0.0
    %379 = vmatpush1.msra.mxu0 0.0
    %380 = vmatprep.subr.mxu0 0.0
    %381 = vmatpush1.msra.mxu0 0.0
    %382 = vmatprep.subr.mxu0 0.0
    %383 = vmatpush1.msra.mxu0 0.0
    %384 = vmatprep.subr.mxu0 0.0
    %385 = vmatpush1.msra.mxu0 0.0
    %386 = vmatprep.subr.mxu0 0.0
    %387 = vmatpush1.msra.mxu0 0.0
    %388 = vmatprep.subr.mxu0 0.0
    %389 = vmatpush1.msra.mxu0 0.0
    %390 = vmatprep.subr.mxu0 0.0
    %391 = vmatpush1.msra.mxu0 0.0
    %392 = vmatprep.subr.mxu0 0.0
    %393 = vmatpush1.msra.mxu0 0.0
    %394 = vmatprep.subr.mxu0 0.0
    %395 = vmatpush1.msra.mxu0 0.0
    %396 = vmatprep.subr.mxu0 0.0
    %397 = vmatpush1.msra.mxu0 0.0
    %398 = vmatprep.subr.mxu0 0.0
    %399 = vmatpush1.msra.mxu0 0.0
    %400 = vmatprep.subr.mxu0 0.0
    %401 = vmatpush1.msra.mxu0 0.0
    %402 = vmatprep.subr.mxu0 0.0
    %403 = vmatpush1.msra.mxu0 0.0
    %404 = vmatprep.subr.mxu0 0.0
    %405 = vmatpush1.msra.mxu0 0.0
    %406 = vmatprep.subr.mxu0 0.0
    %407 = vmatpush1.msra.mxu0 0.0
    %408 = vmatprep.subr.mxu0 0.0
    %409 = vmatpush1.msra.mxu0 0.0
    %410 = vmatprep.subr.mxu0 0.0
    %411 = vmatpush1.msra.mxu0 0.0
    %412 = vmatprep.subr.mxu0 0.0
    %413 = vmatpush1.msra.mxu0 0.0
    %414 = vmatprep.subr.mxu0 0.0
    %415 = vmatpush1.msra.mxu0 0.0
    %416 = vmatprep.subr.mxu0 0.0
    %417 = vmatpush1.msra.mxu0 0.0
    %418 = vmatprep.subr.mxu0 0.0
    %419 = vmatpush1.msra.mxu0 0.0
    %420 = vmatprep.subr.mxu0 0.0
    %421 = vmatpush1.msra.mxu0 0.0
    %422 = vmatprep.subr.mxu0 0.0
    %423 = vmatpush1.msra.mxu0 0.0
    %424 = vmatprep.subr.mxu0 0.0
    %425 = vmatpush1.msra.mxu0 0.0
    %426 = vmatprep.subr.mxu0 0.0
    %427 = vmatpush1.msra.mxu0 0.0
    %428 = vmatprep.subr.mxu0 0.0
    %429 = vmatpush1.msra.mxu0 0.0
    %430 = vmatprep.subr.mxu0 0.0
    %431 = vmatpush1.msra.mxu0 0.0
    %432 = vmatprep.subr.mxu0 0.0
    %433 = vmatpush1.msra.mxu0 0.0
    %434 = vmatprep.mubr.f32.mxu0 0.0
    %435 = vmatmul.mubr.f32.gmra.mrb[0].mxu0 %v362
    %v436 = vpop.f32.mrb[0].mxu0
    %v437 = vadd.f32 0.0, %v436
    %v438 = vpop.f32.mrb[0].mxu0
    %439 = vmatprep.mubr.f32.mxu0 0.0
    %440 = vmatmul.mubr.f32.gmra.mrb[0].mxu0 %v365
    %v441 = vpop.f32.mrb[0].mxu0
    %v442 = vadd.f32 0.0, %v441
    %v443 = vpop.f32.mrb[0].mxu0
    %444 = vmatprep.mubr.f32.mxu0 0.0
    %445 = vmatmul.mubr.f32.gmra.mrb[0].mxu0 %v368
    %v446 = vpop.f32.mrb[0].mxu0
    %v447 = vadd.f32 0.0, %v446
    %v448 = vpop.f32.mrb[0].mxu0
    %449 = vdwg.mxu0
    %451 = vset.pattern.permute.xlu0 0
    %452 = vperm.xlu0 %451, %v359
    %v453 = vpop.permute.xlu0 %452
    %v455 = vadd.f32 %v332, %v453
    %v456 = vadd.f32 %v455, %v437
    %v457 = vxor.u32 %v456, 2147483648
    %v458 = vmul.f32 %v457, 1.442695
    %v459 = vpow.pop %v458
    %v460 = vadd.f32 %v459, 1.0
    %v461 = vrcp.pop %v460
    %v462 = vmul.f32 1.0, %v461
    %464 = vset.pattern.permute.xlu0 0
    %465 = vperm.xlu0 %464, %v360
    %v466 = vpop.permute.xlu0 %465
    %v468 = vadd.f32 %v336, %v466
    %v469 = vadd.f32 %v468, %v442
    %v470 = vxor.u32 %v469, 2147483648
    %v471 = vmul.f32 %v470, 1.442695
    %v472 = vpow.pop %v471
    %v473 = vadd.f32 %v472, 1.0
    %v474 = vrcp.pop %v473
    %v475 = vmul.f32 1.0, %v474
    %477 = vset.pattern.permute.xlu0 0
    %478 = vperm.xlu0 %477, %v354
    %v479 = vpop.permute.xlu0 %478
    %v481 = vadd.f32 %v342, %v479
    %483 = vset.pattern.permute.xlu0 0
    %484 = vperm.xlu0 %483, %v357
    %v485 = vpop.permute.xlu0 %484
    %v487 = vadd.f32 %v447, %v485
    %v488 = vmul.f32 %v462, %v487
    %v489 = vadd.f32 %v481, %v488
    %v490 = vtanh.pop %v489
    %v491 = vsub.f32 1.0, %v475
    %v492 = vmul.f32 %v491, %v490
    %v493 = vmul.f32 %v475, 0.0
    %v494 = vadd.f32 %v492, %v493
    %v495 = vpack.c.bf16 %v494, %v494
    %497 = vset.pattern.permute.xlu0 0
    %498 = vperm.xlu0 %497, %v358
    %v499 = vpop.permute.xlu0 %498
    %v502 = vsel %vm283, %v351, 0
    %v505 = vsel %vm290, %v495, 0
    %507 = vmatprep.subr.bf16.mxu0 0
    %508 = vmatpush1.bf16.msra.mxu0 %v505
    %509 = vmatprep.subr.bf16.mxu0 0
    %510 = vmatpush1.bf16.msra.mxu0 0
    %511 = vmatprep.subr.bf16.mxu0 0
    %512 = vmatpush1.bf16.msra.mxu0 0
    %513 = vmatprep.subr.bf16.mxu0 0
    %514 = vmatpush1.bf16.msra.mxu0 0
    %515 = vmatprep.subr.bf16.mxu0 0
    %516 = vmatpush1.bf16.msra.mxu0 0
    %517 = vmatprep.subr.bf16.mxu0 0
    %518 = vmatpush1.bf16.msra.mxu0 0
    %519 = vmatprep.subr.bf16.mxu0 0
    %520 = vmatpush1.bf16.msra.mxu0 0
    %521 = vmatprep.subr.bf16.mxu0 0
    %522 = vmatpush1.bf16.msra.mxu0 0
    %523 = vmatprep.subr.bf16.mxu0 0
    %524 = vmatpush1.bf16.msra.mxu0 0
    %525 = vmatprep.subr.bf16.mxu0 0
    %526 = vmatpush1.bf16.msra.mxu0 0
    %527 = vmatprep.subr.bf16.mxu0 0
    %528 = vmatpush1.bf16.msra.mxu0 0
    %529 = vmatprep.subr.bf16.mxu0 0
    %530 = vmatpush1.bf16.msra.mxu0 0
    %531 = vmatprep.subr.bf16.mxu0 0
    %532 = vmatpush1.bf16.msra.mxu0 0
    %533 = vmatprep.subr.bf16.mxu0 0
    %534 = vmatpush1.bf16.msra.mxu0 0
    %535 = vmatprep.subr.bf16.mxu0 0
    %536 = vmatpush1.bf16.msra.mxu0 0
    %537 = vmatprep.subr.bf16.mxu0 0
    %538 = vmatpush1.bf16.msra.mxu0 0
    %539 = vmatprep.mubr.bf16.mxu0 0
    %540 = vmatmul.mubr.bf16.gmra.mrb[0].mxu0 %v502
    %v541 = vpop.f32.mrb[0].mxu0
    %v542 = vadd.f32 %v499, %v541
    %v543 = vpop.f32.mrb[0].mxu0
    %v544 = vpop.f32.mrb[0].mxu0
    %v545 = vpop.f32.mrb[0].mxu0
    %546 = vdwg.mxu0
    %vm547 = vcmask 130048
    %548 = vst.msk [vmem:[#allocation2] sm:$0xff] %vm547, %v542
    %549 = vmatprep.subr.mxu0 0.0
    %550 = vmatpush1.msra.mxu0 %v494
    %551 = vmatprep.subr.mxu0 0.0
    %552 = vmatpush1.msra.mxu0 0.0
    %553 = vmatprep.subr.mxu0 0.0
    %554 = vmatpush1.msra.mxu0 0.0
    %555 = vmatprep.subr.mxu0 0.0
    %556 = vmatpush1.msra.mxu0 0.0
    %557 = vmatprep.subr.mxu0 0.0
    %558 = vmatpush1.msra.mxu0 0.0
    %559 = vmatprep.subr.mxu0 0.0
    %560 = vmatpush1.msra.mxu0 0.0
    %561 = vmatprep.subr.mxu0 0.0
    %562 = vmatpush1.msra.mxu0 0.0
    %563 = vmatprep.subr.mxu0 0.0
    %564 = vmatpush1.msra.mxu0 0.0
    %565 = vmatprep.subr.mxu0 0.0
    %566 = vmatpush1.msra.mxu0 0.0
    %567 = vmatprep.subr.mxu0 0.0
    %568 = vmatpush1.msra.mxu0 0.0
    %569 = vmatprep.subr.mxu0 0.0
    %570 = vmatpush1.msra.mxu0 0.0
    %571 = vmatprep.subr.mxu0 0.0
    %572 = vmatpush1.msra.mxu0 0.0
    %573 = vmatprep.subr.mxu0 0.0
    %574 = vmatpush1.msra.mxu0 0.0
    %575 = vmatprep.subr.mxu0 0.0
    %576 = vmatpush1.msra.mxu0 0.0
    %577 = vmatprep.subr.mxu0 0.0
    %578 = vmatpush1.msra.mxu0 0.0
    %579 = vmatprep.subr.mxu0 0.0
    %580 = vmatpush1.msra.mxu0 0.0
    %581 = vmatprep.subr.mxu0 0.0
    %582 = vmatpush1.msra.mxu0 0.0
    %583 = vmatprep.subr.mxu0 0.0
    %584 = vmatpush1.msra.mxu0 0.0
    %585 = vmatprep.subr.mxu0 0.0
    %586 = vmatpush1.msra.mxu0 0.0
    %587 = vmatprep.subr.mxu0 0.0
    %588 = vmatpush1.msra.mxu0 0.0
    %589 = vmatprep.subr.mxu0 0.0
    %590 = vmatpush1.msra.mxu0 0.0
    %591 = vmatprep.subr.mxu0 0.0
    %592 = vmatpush1.msra.mxu0 0.0
    %593 = vmatprep.subr.mxu0 0.0
    %594 = vmatpush1.msra.mxu0 0.0
    %595 = vmatprep.subr.mxu0 0.0
    %596 = vmatpush1.msra.mxu0 0.0
    %597 = vmatprep.subr.mxu0 0.0
    %598 = vmatpush1.msra.mxu0 0.0
    %599 = vmatprep.subr.mxu0 0.0
    %600 = vmatpush1.msra.mxu0 0.0
    %601 = vmatprep.subr.mxu0 0.0
    %602 = vmatpush1.msra.mxu0 0.0
    %603 = vmatprep.subr.mxu0 0.0
    %604 = vmatpush1.msra.mxu0 0.0
    %605 = vmatprep.subr.mxu0 0.0
    %606 = vmatpush1.msra.mxu0 0.0
    %607 = vmatprep.subr.mxu0 0.0
    %608 = vmatpush1.msra.mxu0 0.0
    %609 = vmatprep.subr.mxu0 0.0
    %610 = vmatpush1.msra.mxu0 0.0
    %611 = vmatprep.subr.mxu0 0.0
    %612 = vmatpush1.msra.mxu0 0.0
    %613 = vmatprep.mubr.f32.mxu0 0.0
    %614 = vmatmul.mubr.f32.gmra.mrb[0].mxu0 %v362
    %v615 = vpop.f32.mrb[0].mxu0
    %v616 = vadd.f32 0.0, %v615
    %v617 = vpop.f32.mrb[0].mxu0
    %618 = vmatprep.mubr.f32.mxu0 0.0
    %619 = vmatmul.mubr.f32.gmra.mrb[0].mxu0 %v365
    %v620 = vpop.f32.mrb[0].mxu0
    %v621 = vadd.f32 0.0, %v620
    %v622 = vpop.f32.mrb[0].mxu0
    %623 = vmatprep.mubr.f32.mxu0 0.0
    %624 = vmatmul.mubr.f32.gmra.mrb[0].mxu0 %v368
    %v625 = vpop.f32.mrb[0].mxu0
    %v626 = vadd.f32 0.0, %v625
    %v627 = vpop.f32.mrb[0].mxu0
    %628 = vdwg.mxu0
    %630 = vrot.lane.b32.xlu0 %v616, 16
    %v631 = vpop.permute.xlu0 %630
    %v633 = vadd.f32 %v455, %v631
    %v634 = vxor.u32 %v633, 2147483648
    %v635 = vmul.f32 %v634, 1.442695
    %v636 = vpow.pop %v635
    %v637 = vadd.f32 %v636, 1.0
    %v638 = vrcp.pop %v637
    %v639 = vmul.f32 1.0, %v638
    %641 = vrot.lane.b32.xlu0 %v621, 16
    %v642 = vpop.permute.xlu0 %641
    %v644 = vadd.f32 %v468, %v642
    %v645 = vxor.u32 %v644, 2147483648
    %v646 = vmul.f32 %v645, 1.442695
    %v647 = vpow.pop %v646
    %v648 = vadd.f32 %v647, 1.0
    %v649 = vrcp.pop %v648
    %v650 = vmul.f32 1.0, %v649
    %v651 = vadd.f32 %v626, %v485
    %653 = vrot.lane.b32.xlu0 %v651, 16
    %v654 = vpop.permute.xlu0 %653
    %v656 = vmul.f32 %v639, %v654
    %v657 = vadd.f32 %v481, %v656
    %v658 = vtanh.pop %v657
    %v659 = vsub.f32 1.0, %v650
    %v660 = vmul.f32 %v659, %v658
    %662 = vrot.lane.b32.xlu0 %v494, 16
    %v663 = vpop.permute.xlu0 %662
    %v665 = vmul.f32 %v650, %v663
    %v666 = vadd.f32 %v660, %v665
    %v667 = vpack.c.bf16 %v666, %v666
    %669 = vrot.lane.b32.xlu0 %v667, 112
    %v670 = vpop.permute.xlu0 %669
    %v672 = vsel %vm290, %v670, 0
    %674 = vmatprep.subr.bf16.mxu0 0
    %675 = vmatpush1.bf16.msra.mxu0 %v672
    %676 = vmatprep.subr.bf16.mxu0 0
    %677 = vmatpush1.bf16.msra.mxu0 0
    %678 = vmatprep.subr.bf16.mxu0 0
    %679 = vmatpush1.bf16.msra.mxu0 0
    %680 = vmatprep.subr.bf16.mxu0 0
    %681 = vmatpush1.bf16.msra.mxu0 0
    %682 = vmatprep.subr.bf16.mxu0 0
    %683 = vmatpush1.bf16.msra.mxu0 0
    %684 = vmatprep.subr.bf16.mxu0 0
    %685 = vmatpush1.bf16.msra.mxu0 0
    %686 = vmatprep.subr.bf16.mxu0 0
    %687 = vmatpush1.bf16.msra.mxu0 0
    %688 = vmatprep.subr.bf16.mxu0 0
    %689 = vmatpush1.bf16.msra.mxu0 0
    %690 = vmatprep.subr.bf16.mxu0 0
    %691 = vmatpush1.bf16.msra.mxu0 0
    %692 = vmatprep.subr.bf16.mxu0 0
    %693 = vmatpush1.bf16.msra.mxu0 0
    %694 = vmatprep.subr.bf16.mxu0 0
    %695 = vmatpush1.bf16.msra.mxu0 0
    %696 = vmatprep.subr.bf16.mxu0 0
    %697 = vmatpush1.bf16.msra.mxu0 0
    %698 = vmatprep.subr.bf16.mxu0 0
    %699 = vmatpush1.bf16.msra.mxu0 0
    %700 = vmatprep.subr.bf16.mxu0 0
    %701 = vmatpush1.bf16.msra.mxu0 0
    %702 = vmatprep.subr.bf16.mxu0 0
    %703 = vmatpush1.bf16.msra.mxu0 0
    %704 = vmatprep.subr.bf16.mxu0 0
    %705 = vmatpush1.bf16.msra.mxu0 0
    %706 = vmatprep.mubr.bf16.mxu0 0
    %707 = vmatmul.mubr.bf16.gmra.mrb[0].mxu0 %v502
    %v708 = vpop.f32.mrb[0].mxu0
    %v709 = vadd.f32 %v499, %v708
    %v710 = vpop.f32.mrb[0].mxu0
    %v711 = vpop.f32.mrb[0].mxu0
    %v712 = vpop.f32.mrb[0].mxu0
    %713 = vdwg.mxu0
    %715 = vrot.lane.b32.xlu0 %v709, 16
    %v716 = vpop.permute.xlu0 %715
    %vm718 = vcmask 261248
    %719 = vst.msk [vmem:[#allocation2] sm:$0xff] %vm718, %v716
    %721 = vrot.lane.b32.xlu0 %v666, 112
    %v722 = vpop.permute.xlu0 %721
    %724 = vmatprep.subr.mxu0 0.0
    %725 = vmatpush1.msra.mxu0 %v722
    %726 = vmatprep.subr.mxu0 0.0
    %727 = vmatpush1.msra.mxu0 0.0
    %728 = vmatprep.subr.mxu0 0.0
    %729 = vmatpush1.msra.mxu0 0.0
    %730 = vmatprep.subr.mxu0 0.0
    %731 = vmatpush1.msra.mxu0 0.0
    %732 = vmatprep.subr.mxu0 0.0
    %733 = vmatpush1.msra.mxu0 0.0
    %734 = vmatprep.subr.mxu0 0.0
    %735 = vmatpush1.msra.mxu0 0.0
    %736 = vmatprep.subr.mxu0 0.0
    %737 = vmatpush1.msra.mxu0 0.0
    %738 = vmatprep.subr.mxu0 0.0
    %739 = vmatpush1.msra.mxu0 0.0
    %740 = vmatprep.subr.mxu0 0.0
    %741 = vmatpush1.msra.mxu0 0.0
    %742 = vmatprep.subr.mxu0 0.0
    %743 = vmatpush1.msra.mxu0 0.0
    %744 = vmatprep.subr.mxu0 0.0
    %745 = vmatpush1.msra.mxu0 0.0
    %746 = vmatprep.subr.mxu0 0.0
    %747 = vmatpush1.msra.mxu0 0.0
    %748 = vmatprep.subr.mxu0 0.0
    %749 = vmatpush1.msra.mxu0 0.0
    %750 = vmatprep.subr.mxu0 0.0
    %751 = vmatpush1.msra.mxu0 0.0
    %752 = vmatprep.subr.mxu0 0.0
    %753 = vmatpush1.msra.mxu0 0.0
    %754 = vmatprep.subr.mxu0 0.0
    %755 = vmatpush1.msra.mxu0 0.0
    %756 = vmatprep.subr.mxu0 0.0
    %757 = vmatpush1.msra.mxu0 0.0
    %758 = vmatprep.subr.mxu0 0.0
    %759 = vmatpush1.msra.mxu0 0.0
    %760 = vmatprep.subr.mxu0 0.0
    %761 = vmatpush1.msra.mxu0 0.0
    %762 = vmatprep.subr.mxu0 0.0
    %763 = vmatpush1.msra.mxu0 0.0
    %764 = vmatprep.subr.mxu0 0.0
    %765 = vmatpush1.msra.mxu0 0.0
    %766 = vmatprep.subr.mxu0 0.0
    %767 = vmatpush1.msra.mxu0 0.0
    %768 = vmatprep.subr.mxu0 0.0
    %769 = vmatpush1.msra.mxu0 0.0
    %770 = vmatprep.subr.mxu0 0.0
    %771 = vmatpush1.msra.mxu0 0.0
    %772 = vmatprep.subr.mxu0 0.0
    %773 = vmatpush1.msra.mxu0 0.0
    %774 = vmatprep.subr.mxu0 0.0
    %775 = vmatpush1.msra.mxu0 0.0
    %776 = vmatprep.subr.mxu0 0.0
    %777 = vmatpush1.msra.mxu0 0.0
    %778 = vmatprep.subr.mxu0 0.0
    %779 = vmatpush1.msra.mxu0 0.0
    %780 = vmatprep.subr.mxu0 0.0
    %781 = vmatpush1.msra.mxu0 0.0
    %782 = vmatprep.subr.mxu0 0.0
    %783 = vmatpush1.msra.mxu0 0.0
    %784 = vmatprep.subr.mxu0 0.0
    %785 = vmatpush1.msra.mxu0 0.0
    %786 = vmatprep.subr.mxu0 0.0
    %787 = vmatpush1.msra.mxu0 0.0
    %788 = vmatprep.mubr.f32.mxu0 0.0
    %789 = vmatmul.mubr.f32.gmra.mrb[0].mxu0 %v362
    %v790 = vpop.f32.mrb[0].mxu0
    %v791 = vadd.f32 0.0, %v790
    %v792 = vpop.f32.mrb[0].mxu0
    %793 = vmatprep.mubr.f32.mxu0 0.0
    %794 = vmatmul.mubr.f32.gmra.mrb[0].mxu0 %v365
    %v795 = vpop.f32.mrb[0].mxu0
    %v796 = vadd.f32 0.0, %v795
    %v797 = vpop.f32.mrb[0].mxu0
    %798 = vmatprep.mubr.f32.mxu0 0.0
    %799 = vmatmul.mubr.f32.gmra.mrb[0].mxu0 %v368
    %v800 = vpop.f32.mrb[0].mxu0
    %v801 = vadd.f32 0.0, %v800
    %v802 = vpop.f32.mrb[0].mxu0
    %803 = vdwg.mxu0
    %805 = vrot.lane.b32.xlu0 %v791, 32
    %v806 = vpop.permute.xlu0 %805
    %v808 = vadd.f32 %v455, %v806
    %v809 = vxor.u32 %v808, 2147483648
    %v810 = vmul.f32 %v809, 1.442695
    %v811 = vpow.pop %v810
    %v812 = vadd.f32 %v811, 1.0
    %v813 = vrcp.pop %v812
    %v814 = vmul.f32 1.0, %v813
    %816 = vrot.lane.b32.xlu0 %v796, 32
    %v817 = vpop.permute.xlu0 %816
    %v819 = vadd.f32 %v468, %v817
    %v820 = vxor.u32 %v819, 2147483648
    %v821 = vmul.f32 %v820, 1.442695
    %v822 = vpow.pop %v821
    %v823 = vadd.f32 %v822, 1.0
    %v824 = vrcp.pop %v823
    %v825 = vmul.f32 1.0, %v824
    %v826 = vadd.f32 %v801, %v485
    %828 = vrot.lane.b32.xlu0 %v826, 32
    %v829 = vpop.permute.xlu0 %828
    %v831 = vmul.f32 %v814, %v829
    %v832 = vadd.f32 %v481, %v831
    %v833 = vtanh.pop %v832
    %v834 = vsub.f32 1.0, %v825
    %v835 = vmul.f32 %v834, %v833
    %836 = vrot.lane.b32.xlu0 %v666, 16
    %v837 = vpop.permute.xlu0 %836
    %v839 = vmul.f32 %v825, %v837
    %v840 = vadd.f32 %v835, %v839
    %v841 = vpack.c.bf16 %v840, %v840
    %843 = vrot.lane.b32.xlu0 %v841, 96
    %v844 = vpop.permute.xlu0 %843
    %v846 = vsel %vm290, %v844, 0
    %848 = vmatprep.subr.bf16.mxu0 0
    %849 = vmatpush1.bf16.msra.mxu0 %v846
    %850 = vmatprep.subr.bf16.mxu0 0
    %851 = vmatpush1.bf16.msra.mxu0 0
    %852 = vmatprep.subr.bf16.mxu0 0
    %853 = vmatpush1.bf16.msra.mxu0 0
    %854 = vmatprep.subr.bf16.mxu0 0
    %855 = vmatpush1.bf16.msra.mxu0 0
    %856 = vmatprep.subr.bf16.mxu0 0
    %857 = vmatpush1.bf16.msra.mxu0 0
    %858 = vmatprep.subr.bf16.mxu0 0
    %859 = vmatpush1.bf16.msra.mxu0 0
    %860 = vmatprep.subr.bf16.mxu0 0
    %861 = vmatpush1.bf16.msra.mxu0 0
    %862 = vmatprep.subr.bf16.mxu0 0
    %863 = vmatpush1.bf16.msra.mxu0 0
    %864 = vmatprep.subr.bf16.mxu0 0
    %865 = vmatpush1.bf16.msra.mxu0 0
    %866 = vmatprep.subr.bf16.mxu0 0
    %867 = vmatpush1.bf16.msra.mxu0 0
    %868 = vmatprep.subr.bf16.mxu0 0
    %869 = vmatpush1.bf16.msra.mxu0 0
    %870 = vmatprep.subr.bf16.mxu0 0
    %871 = vmatpush1.bf16.msra.mxu0 0
    %872 = vmatprep.subr.bf16.mxu0 0
    %873 = vmatpush1.bf16.msra.mxu0 0
    %874 = vmatprep.subr.bf16.mxu0 0
    %875 = vmatpush1.bf16.msra.mxu0 0
    %876 = vmatprep.subr.bf16.mxu0 0
    %877 = vmatpush1.bf16.msra.mxu0 0
    %878 = vmatprep.subr.bf16.mxu0 0
    %879 = vmatpush1.bf16.msra.mxu0 0
    %880 = vmatprep.mubr.bf16.mxu0 0
    %881 = vmatmul.mubr.bf16.gmra.mrb[0].mxu0 %v502
    %v882 = vpop.f32.mrb[0].mxu0
    %v883 = vadd.f32 %v499, %v882
    %v884 = vpop.f32.mrb[0].mxu0
    %v885 = vpop.f32.mrb[0].mxu0
    %v886 = vpop.f32.mrb[0].mxu0
    %887 = vdwg.mxu0
    %889 = vrot.lane.b32.xlu0 %v883, 32
    %v890 = vpop.permute.xlu0 %889
    %vm892 = vcmask 392448
    %893 = vst.msk [vmem:[#allocation2] sm:$0xff] %vm892, %v890
    %895 = vrot.lane.b32.xlu0 %v840, 96
    %v896 = vpop.permute.xlu0 %895
    %898 = vmatprep.subr.mxu0 0.0
    %899 = vmatpush1.msra.mxu0 %v896
    %900 = vmatprep.subr.mxu0 0.0
    %901 = vmatpush1.msra.mxu0 0.0
    %902 = vmatprep.subr.mxu0 0.0
    %903 = vmatpush1.msra.mxu0 0.0
    %904 = vmatprep.subr.mxu0 0.0
    %905 = vmatpush1.msra.mxu0 0.0
    %906 = vmatprep.subr.mxu0 0.0
    %907 = vmatpush1.msra.mxu0 0.0
    %908 = vmatprep.subr.mxu0 0.0
    %909 = vmatpush1.msra.mxu0 0.0
    %910 = vmatprep.subr.mxu0 0.0
    %911 = vmatpush1.msra.mxu0 0.0
    %912 = vmatprep.subr.mxu0 0.0
    %913 = vmatpush1.msra.mxu0 0.0
    %914 = vmatprep.subr.mxu0 0.0
    %915 = vmatpush1.msra.mxu0 0.0
    %916 = vmatprep.subr.mxu0 0.0
    %917 = vmatpush1.msra.mxu0 0.0
    %918 = vmatprep.subr.mxu0 0.0
    %919 = vmatpush1.msra.mxu0 0.0
    %920 = vmatprep.subr.mxu0 0.0
    %921 = vmatpush1.msra.mxu0 0.0
    %922 = vmatprep.subr.mxu0 0.0
    %923 = vmatpush1.msra.mxu0 0.0
    %924 = vmatprep.subr.mxu0 0.0
    %925 = vmatpush1.msra.mxu0 0.0
    %926 = vmatprep.subr.mxu0 0.0
    %927 = vmatpush1.msra.mxu0 0.0
    %928 = vmatprep.subr.mxu0 0.0
    %929 = vmatpush1.msra.mxu0 0.0
    %930 = vmatprep.subr.mxu0 0.0
    %931 = vmatpush1.msra.mxu0 0.0
    %932 = vmatprep.subr.mxu0 0.0
    %933 = vmatpush1.msra.mxu0 0.0
    %934 = vmatprep.subr.mxu0 0.0
    %935 = vmatpush1.msra.mxu0 0.0
    %936 = vmatprep.subr.mxu0 0.0
    %937 = vmatpush1.msra.mxu0 0.0
    %938 = vmatprep.subr.mxu0 0.0
    %939 = vmatpush1.msra.mxu0 0.0
    %940 = vmatprep.subr.mxu0 0.0
    %941 = vmatpush1.msra.mxu0 0.0
    %942 = vmatprep.subr.mxu0 0.0
    %943 = vmatpush1.msra.mxu0 0.0
    %944 = vmatprep.subr.mxu0 0.0
    %945 = vmatpush1.msra.mxu0 0.0
    %946 = vmatprep.subr.mxu0 0.0
    %947 = vmatpush1.msra.mxu0 0.0
    %948 = vmatprep.subr.mxu0 0.0
    %949 = vmatpush1.msra.mxu0 0.0
    %950 = vmatprep.subr.mxu0 0.0
    %951 = vmatpush1.msra.mxu0 0.0
    %952 = vmatprep.subr.mxu0 0.0
    %953 = vmatpush1.msra.mxu0 0.0
    %954 = vmatprep.subr.mxu0 0.0
    %955 = vmatpush1.msra.mxu0 0.0
    %956 = vmatprep.subr.mxu0 0.0
    %957 = vmatpush1.msra.mxu0 0.0
    %958 = vmatprep.subr.mxu0 0.0
    %959 = vmatpush1.msra.mxu0 0.0
    %960 = vmatprep.subr.mxu0 0.0
    %961 = vmatpush1.msra.mxu0 0.0
    %962 = vmatprep.mubr.f32.mxu0 0.0
    %963 = vmatmul.mubr.f32.gmra.mrb[0].mxu0 %v362
    %v964 = vpop.f32.mrb[0].mxu0
    %v965 = vadd.f32 0.0, %v964
    %v966 = vpop.f32.mrb[0].mxu0
    %967 = vmatprep.mubr.f32.mxu0 0.0
    %968 = vmatmul.mubr.f32.gmra.mrb[0].mxu0 %v365
    %v969 = vpop.f32.mrb[0].mxu0
    %v970 = vadd.f32 0.0, %v969
    %v971 = vpop.f32.mrb[0].mxu0
    %972 = vmatprep.mubr.f32.mxu0 0.0
    %973 = vmatmul.mubr.f32.gmra.mrb[0].mxu0 %v368
    %v974 = vpop.f32.mrb[0].mxu0
    %v975 = vadd.f32 0.0, %v974
    %v976 = vpop.f32.mrb[0].mxu0
    %977 = vdwg.mxu0
    %979 = vrot.lane.b32.xlu0 %v965, 48
    %v980 = vpop.permute.xlu0 %979
    %v982 = vadd.f32 %v455, %v980
    %v983 = vxor.u32 %v982, 2147483648
    %v984 = vmul.f32 %v983, 1.442695
    %v985 = vpow.pop %v984
    %v986 = vadd.f32 %v985, 1.0
    %v987 = vrcp.pop %v986
    %v988 = vmul.f32 1.0, %v987
    %990 = vrot.lane.b32.xlu0 %v970, 48
    %v991 = vpop.permute.xlu0 %990
    %v993 = vadd.f32 %v468, %v991
    %v994 = vxor.u32 %v993, 2147483648
    %v995 = vmul.f32 %v994, 1.442695
    %v996 = vpow.pop %v995
    %v997 = vadd.f32 %v996, 1.0
    %v998 = vrcp.pop %v997
    %v999 = vmul.f32 1.0, %v998
    %v1000 = vadd.f32 %v975, %v485
    %1002 = vrot.lane.b32.xlu0 %v1000, 48
    %v1003 = vpop.permute.xlu0 %1002
    %v1005 = vmul.f32 %v988, %v1003
    %v1006 = vadd.f32 %v481, %v1005
    %v1007 = vtanh.pop %v1006
    %v1008 = vsub.f32 1.0, %v999
    %v1009 = vmul.f32 %v1008, %v1007
    %1010 = vrot.lane.b32.xlu0 %v840, 16
    %v1011 = vpop.permute.xlu0 %1010
    %v1013 = vmul.f32 %v999, %v1011
    %v1014 = vadd.f32 %v1009, %v1013
    %v1015 = vpack.c.bf16 %v1014, %v1014
    %1017 = vrot.lane.b32.xlu0 %v1015, 80
    %v1018 = vpop.permute.xlu0 %1017
    %v1020 = vsel %vm290, %v1018, 0
    %1022 = vmatprep.subr.bf16.mxu0 0
    %1023 = vmatpush1.bf16.msra.mxu0 %v1020
    %1024 = vmatprep.subr.bf16.mxu0 0
    %1025 = vmatpush1.bf16.msra.mxu0 0
    %1026 = vmatprep.subr.bf16.mxu0 0
    %1027 = vmatpush1.bf16.msra.mxu0 0
    %1028 = vmatprep.subr.bf16.mxu0 0
    %1029 = vmatpush1.bf16.msra.mxu0 0
    %1030 = vmatprep.subr.bf16.mxu0 0
    %1031 = vmatpush1.bf16.msra.mxu0 0
    %1032 = vmatprep.subr.bf16.mxu0 0
    %1033 = vmatpush1.bf16.msra.mxu0 0
    %1034 = vmatprep.subr.bf16.mxu0 0
    %1035 = vmatpush1.bf16.msra.mxu0 0
    %1036 = vmatprep.subr.bf16.mxu0 0
    %1037 = vmatpush1.bf16.msra.mxu0 0
    %1038 = vmatprep.subr.bf16.mxu0 0
    %1039 = vmatpush1.bf16.msra.mxu0 0
    %1040 = vmatprep.subr.bf16.mxu0 0
    %1041 = vmatpush1.bf16.msra.mxu0 0
    %1042 = vmatprep.subr.bf16.mxu0 0
    %1043 = vmatpush1.bf16.msra.mxu0 0
    %1044 = vmatprep.subr.bf16.mxu0 0
    %1045 = vmatpush1.bf16.msra.mxu0 0
    %1046 = vmatprep.subr.bf16.mxu0 0
    %1047 = vmatpush1.bf16.msra.mxu0 0
    %1048 = vmatprep.subr.bf16.mxu0 0
    %1049 = vmatpush1.bf16.msra.mxu0 0
    %1050 = vmatprep.subr.bf16.mxu0 0
    %1051 = vmatpush1.bf16.msra.mxu0 0
    %1052 = vmatprep.subr.bf16.mxu0 0
    %1053 = vmatpush1.bf16.msra.mxu0 0
    %1054 = vmatprep.mubr.bf16.mxu0 0
    %1055 = vmatmul.mubr.bf16.gmra.mrb[0].mxu0 %v502
    %v1056 = vpop.f32.mrb[0].mxu0
    %v1057 = vadd.f32 %v499, %v1056
    %v1058 = vpop.f32.mrb[0].mxu0
    %v1059 = vpop.f32.mrb[0].mxu0
    %v1060 = vpop.f32.mrb[0].mxu0
    %1061 = vdwg.mxu0
    %1063 = vrot.lane.b32.xlu0 %v1057, 48
    %v1064 = vpop.permute.xlu0 %1063
    %vm1066 = vcmask 523648
    %1067 = vst.msk [vmem:[#allocation2] sm:$0xff] %vm1066, %v1064
    %1069 = vrot.lane.b32.xlu0 %v1014, 80
    %v1070 = vpop.permute.xlu0 %1069
    %1072 = vmatprep.subr.mxu0 0.0
    %1073 = vmatpush1.msra.mxu0 %v1070
    %1074 = vmatprep.subr.mxu0 0.0
    %1075 = vmatpush1.msra.mxu0 0.0
    %1076 = vmatprep.subr.mxu0 0.0
    %1077 = vmatpush1.msra.mxu0 0.0
    %1078 = vmatprep.subr.mxu0 0.0
    %1079 = vmatpush1.msra.mxu0 0.0
    %1080 = vmatprep.subr.mxu0 0.0
    %1081 = vmatpush1.msra.mxu0 0.0
    %1082 = vmatprep.subr.mxu0 0.0
    %1083 = vmatpush1.msra.mxu0 0.0
    %1084 = vmatprep.subr.mxu0 0.0
    %1085 = vmatpush1.msra.mxu0 0.0
    %1086 = vmatprep.subr.mxu0 0.0
    %1087 = vmatpush1.msra.mxu0 0.0
    %1088 = vmatprep.subr.mxu0 0.0
    %1089 = vmatpush1.msra.mxu0 0.0
    %1090 = vmatprep.subr.mxu0 0.0
    %1091 = vmatpush1.msra.mxu0 0.0
    %1092 = vmatprep.subr.mxu0 0.0
    %1093 = vmatpush1.msra.mxu0 0.0
    %1094 = vmatprep.subr.mxu0 0.0
    %1095 = vmatpush1.msra.mxu0 0.0
    %1096 = vmatprep.subr.mxu0 0.0
    %1097 = vmatpush1.msra.mxu0 0.0
    %1098 = vmatprep.subr.mxu0 0.0
    %1099 = vmatpush1.msra.mxu0 0.0
    %1100 = vmatprep.subr.mxu0 0.0
    %1101 = vmatpush1.msra.mxu0 0.0
    %1102 = vmatprep.subr.mxu0 0.0
    %1103 = vmatpush1.msra.mxu0 0.0
    %1104 = vmatprep.subr.mxu0 0.0
    %1105 = vmatpush1.msra.mxu0 0.0
    %1106 = vmatprep.subr.mxu0 0.0
    %1107 = vmatpush1.msra.mxu0 0.0
    %1108 = vmatprep.subr.mxu0 0.0
    %1109 = vmatpush1.msra.mxu0 0.0
    %1110 = vmatprep.subr.mxu0 0.0
    %1111 = vmatpush1.msra.mxu0 0.0
    %1112 = vmatprep.subr.mxu0 0.0
    %1113 = vmatpush1.msra.mxu0 0.0
    %1114 = vmatprep.subr.mxu0 0.0
    %1115 = vmatpush1.msra.mxu0 0.0
    %1116 = vmatprep.subr.mxu0 0.0
    %1117 = vmatpush1.msra.mxu0 0.0
    %1118 = vmatprep.subr.mxu0 0.0
    %1119 = vmatpush1.msra.mxu0 0.0
    %1120 = vmatprep.subr.mxu0 0.0
    %1121 = vmatpush1.msra.mxu0 0.0
    %1122 = vmatprep.subr.mxu0 0.0
    %1123 = vmatpush1.msra.mxu0 0.0
    %1124 = vmatprep.subr.mxu0 0.0
    %1125 = vmatpush1.msra.mxu0 0.0
    %1126 = vmatprep.subr.mxu0 0.0
    %1127 = vmatpush1.msra.mxu0 0.0
    %1128 = vmatprep.subr.mxu0 0.0
    %1129 = vmatpush1.msra.mxu0 0.0
    %1130 = vmatprep.subr.mxu0 0.0
    %1131 = vmatpush1.msra.mxu0 0.0
    %1132 = vmatprep.subr.mxu0 0.0
    %1133 = vmatpush1.msra.mxu0 0.0
    %1134 = vmatprep.subr.mxu0 0.0
    %1135 = vmatpush1.msra.mxu0 0.0
    %1136 = vmatprep.mubr.f32.mxu0 0.0
    %1137 = vmatmul.mubr.f32.gmra.mrb[0].mxu0 %v362
    %v1138 = vpop.f32.mrb[0].mxu0
    %v1139 = vadd.f32 0.0, %v1138
    %v1140 = vpop.f32.mrb[0].mxu0
    %1141 = vmatprep.mubr.f32.mxu0 0.0
    %1142 = vmatmul.mubr.f32.gmra.mrb[0].mxu0 %v365
    %v1143 = vpop.f32.mrb[0].mxu0
    %v1144 = vadd.f32 0.0, %v1143
    %v1145 = vpop.f32.mrb[0].mxu0
    %1146 = vmatprep.mubr.f32.mxu0 0.0
    %1147 = vmatmul.mubr.f32.gmra.mrb[0].mxu0 %v368
    %v1148 = vpop.f32.mrb[0].mxu0
    %v1149 = vadd.f32 0.0, %v1148
    %v1150 = vpop.f32.mrb[0].mxu0
    %1151 = vdwg.mxu0
    %1153 = vrot.lane.b32.xlu0 %v1139, 64
    %v1154 = vpop.permute.xlu0 %1153
    %v1156 = vadd.f32 %v455, %v1154
    %v1157 = vxor.u32 %v1156, 2147483648
    %v1158 = vmul.f32 %v1157, 1.442695
    %v1159 = vpow.pop %v1158
    %v1160 = vadd.f32 %v1159, 1.0
    %v1161 = vrcp.pop %v1160
    %v1162 = vmul.f32 1.0, %v1161
    %1164 = vrot.lane.b32.xlu0 %v1144, 64
    %v1165 = vpop.permute.xlu0 %1164
    %v1167 = vadd.f32 %v468, %v1165
    %v1168 = vxor.u32 %v1167, 2147483648
    %v1169 = vmul.f32 %v1168, 1.442695
    %v1170 = vpow.pop %v1169
    %v1171 = vadd.f32 %v1170, 1.0
    %v1172 = vrcp.pop %v1171
    %v1173 = vmul.f32 1.0, %v1172
    %v1174 = vadd.f32 %v1149, %v485
    %1176 = vrot.lane.b32.xlu0 %v1174, 64
    %v1177 = vpop.permute.xlu0 %1176
    %v1179 = vmul.f32 %v1162, %v1177
    %v1180 = vadd.f32 %v481, %v1179
    %v1181 = vtanh.pop %v1180
    %v1182 = vsub.f32 1.0, %v1173
    %v1183 = vmul.f32 %v1182, %v1181
    %1184 = vrot.lane.b32.xlu0 %v1014, 16
    %v1185 = vpop.permute.xlu0 %1184
    %v1187 = vmul.f32 %v1173, %v1185
    %v1188 = vadd.f32 %v1183, %v1187
    %v1189 = vpack.c.bf16 %v1188, %v1188
    %1191 = vrot.lane.b32.xlu0 %v1189, 64
    %v1192 = vpop.permute.xlu0 %1191
    %v1194 = vsel %vm290, %v1192, 0
    %1196 = vmatprep.subr.bf16.mxu0 0
    %1197 = vmatpush1.bf16.msra.mxu0 %v1194
    %1198 = vmatprep.subr.bf16.mxu0 0
    %1199 = vmatpush1.bf16.msra.mxu0 0
    %1200 = vmatprep.subr.bf16.mxu0 0
    %1201 = vmatpush1.bf16.msra.mxu0 0
    %1202 = vmatprep.subr.bf16.mxu0 0
    %1203 = vmatpush1.bf16.msra.mxu0 0
    %1204 = vmatprep.subr.bf16.mxu0 0
    %1205 = vmatpush1.bf16.msra.mxu0 0
    %1206 = vmatprep.subr.bf16.mxu0 0
    %1207 = vmatpush1.bf16.msra.mxu0 0
    %1208 = vmatprep.subr.bf16.mxu0 0
    %1209 = vmatpush1.bf16.msra.mxu0 0
    %1210 = vmatprep.subr.bf16.mxu0 0
    %1211 = vmatpush1.bf16.msra.mxu0 0
    %1212 = vmatprep.subr.bf16.mxu0 0
    %1213 = vmatpush1.bf16.msra.mxu0 0
    %1214 = vmatprep.subr.bf16.mxu0 0
    %1215 = vmatpush1.bf16.msra.mxu0 0
    %1216 = vmatprep.subr.bf16.mxu0 0
    %1217 = vmatpush1.bf16.msra.mxu0 0
    %1218 = vmatprep.subr.bf16.mxu0 0
    %1219 = vmatpush1.bf16.msra.mxu0 0
    %1220 = vmatprep.subr.bf16.mxu0 0
    %1221 = vmatpush1.bf16.msra.mxu0 0
    %1222 = vmatprep.subr.bf16.mxu0 0
    %1223 = vmatpush1.bf16.msra.mxu0 0
    %1224 = vmatprep.subr.bf16.mxu0 0
    %1225 = vmatpush1.bf16.msra.mxu0 0
    %1226 = vmatprep.subr.bf16.mxu0 0
    %1227 = vmatpush1.bf16.msra.mxu0 0
    %1228 = vmatprep.mubr.bf16.mxu0 0
    %1229 = vmatmul.mubr.bf16.gmra.mrb[0].mxu0 %v502
    %v1230 = vpop.f32.mrb[0].mxu0
    %v1231 = vadd.f32 %v499, %v1230
    %v1232 = vpop.f32.mrb[0].mxu0
    %v1233 = vpop.f32.mrb[0].mxu0
    %v1234 = vpop.f32.mrb[0].mxu0
    %1235 = vdwg.mxu0
    %1237 = vrot.lane.b32.xlu0 %v1231, 64
    %v1238 = vpop.permute.xlu0 %1237
    %vm1240 = vcmask 654848
    %1241 = vst.msk [vmem:[#allocation2] sm:$0xff] %vm1240, %v1238
    %1243 = vrot.lane.b32.xlu0 %v1188, 64
    %v1244 = vpop.permute.xlu0 %1243
    %1246 = vmatprep.subr.mxu0 0.0
    %1247 = vmatpush1.msra.mxu0 %v1244
    %1248 = vmatprep.subr.mxu0 0.0
    %1249 = vmatpush1.msra.mxu0 0.0
    %1250 = vmatprep.subr.mxu0 0.0
    %1251 = vmatpush1.msra.mxu0 0.0
    %1252 = vmatprep.subr.mxu0 0.0
    %1253 = vmatpush1.msra.mxu0 0.0
    %1254 = vmatprep.subr.mxu0 0.0
    %1255 = vmatpush1.msra.mxu0 0.0
    %1256 = vmatprep.subr.mxu0 0.0
    %1257 = vmatpush1.msra.mxu0 0.0
    %1258 = vmatprep.subr.mxu0 0.0
    %1259 = vmatpush1.msra.mxu0 0.0
    %1260 = vmatprep.subr.mxu0 0.0
    %1261 = vmatpush1.msra.mxu0 0.0
    %1262 = vmatprep.subr.mxu0 0.0
    %1263 = vmatpush1.msra.mxu0 0.0
    %1264 = vmatprep.subr.mxu0 0.0
    %1265 = vmatpush1.msra.mxu0 0.0
    %1266 = vmatprep.subr.mxu0 0.0
    %1267 = vmatpush1.msra.mxu0 0.0
    %1268 = vmatprep.subr.mxu0 0.0
    %1269 = vmatpush1.msra.mxu0 0.0
    %1270 = vmatprep.subr.mxu0 0.0
    %1271 = vmatpush1.msra.mxu0 0.0
    %1272 = vmatprep.subr.mxu0 0.0
    %1273 = vmatpush1.msra.mxu0 0.0
    %1274 = vmatprep.subr.mxu0 0.0
    %1275 = vmatpush1.msra.mxu0 0.0
    %1276 = vmatprep.subr.mxu0 0.0
    %1277 = vmatpush1.msra.mxu0 0.0
    %1278 = vmatprep.subr.mxu0 0.0
    %1279 = vmatpush1.msra.mxu0 0.0
    %1280 = vmatprep.subr.mxu0 0.0
    %1281 = vmatpush1.msra.mxu0 0.0
    %1282 = vmatprep.subr.mxu0 0.0
    %1283 = vmatpush1.msra.mxu0 0.0
    %1284 = vmatprep.subr.mxu0 0.0
    %1285 = vmatpush1.msra.mxu0 0.0
    %1286 = vmatprep.subr.mxu0 0.0
    %1287 = vmatpush1.msra.mxu0 0.0
    %1288 = vmatprep.subr.mxu0 0.0
    %1289 = vmatpush1.msra.mxu0 0.0
    %1290 = vmatprep.subr.mxu0 0.0
    %1291 = vmatpush1.msra.mxu0 0.0
    %1292 = vmatprep.subr.mxu0 0.0
    %1293 = vmatpush1.msra.mxu0 0.0
    %1294 = vmatprep.subr.mxu0 0.0
    %1295 = vmatpush1.msra.mxu0 0.0
    %1296 = vmatprep.subr.mxu0 0.0
    %1297 = vmatpush1.msra.mxu0 0.0
    %1298 = vmatprep.subr.mxu0 0.0
    %1299 = vmatpush1.msra.mxu0 0.0
    %1300 = vmatprep.subr.mxu0 0.0
    %1301 = vmatpush1.msra.mxu0 0.0
    %1302 = vmatprep.subr.mxu0 0.0
    %1303 = vmatpush1.msra.mxu0 0.0
    %1304 = vmatprep.subr.mxu0 0.0
    %1305 = vmatpush1.msra.mxu0 0.0
    %1306 = vmatprep.subr.mxu0 0.0
    %1307 = vmatpush1.msra.mxu0 0.0
    %1308 = vmatprep.subr.mxu0 0.0
    %1309 = vmatpush1.msra.mxu0 0.0
    %1310 = vmatprep.mubr.f32.mxu0 0.0
    %1311 = vmatmul.mubr.f32.gmra.mrb[0].mxu0 %v362
    %v1312 = vpop.f32.mrb[0].mxu0
    %v1313 = vadd.f32 0.0, %v1312
    %v1314 = vpop.f32.mrb[0].mxu0
    %1315 = vmatprep.mubr.f32.mxu0 0.0
    %1316 = vmatmul.mubr.f32.gmra.mrb[0].mxu0 %v365
    %v1317 = vpop.f32.mrb[0].mxu0
    %v1318 = vadd.f32 0.0, %v1317
    %v1319 = vpop.f32.mrb[0].mxu0
    %1320 = vmatprep.mubr.f32.mxu0 0.0
    %1321 = vmatmul.mubr.f32.gmra.mrb[0].mxu0 %v368
    %v1322 = vpop.f32.mrb[0].mxu0
    %v1323 = vadd.f32 0.0, %v1322
    %v1324 = vpop.f32.mrb[0].mxu0
    %1325 = vdwg.mxu0
    %1327 = vrot.lane.b32.xlu0 %v1313, 80
    %v1328 = vpop.permute.xlu0 %1327
    %v1330 = vadd.f32 %v455, %v1328
    %v1331 = vxor.u32 %v1330, 2147483648
    %v1332 = vmul.f32 %v1331, 1.442695
    %v1333 = vpow.pop %v1332
    %v1334 = vadd.f32 %v1333, 1.0
    %v1335 = vrcp.pop %v1334
    %v1336 = vmul.f32 1.0, %v1335
    %1338 = vrot.lane.b32.xlu0 %v1318, 80
    %v1339 = vpop.permute.xlu0 %1338
    %v1341 = vadd.f32 %v468, %v1339
    %v1342 = vxor.u32 %v1341, 2147483648
    %v1343 = vmul.f32 %v1342, 1.442695
    %v1344 = vpow.pop %v1343
    %v1345 = vadd.f32 %v1344, 1.0
    %v1346 = vrcp.pop %v1345
    %v1347 = vmul.f32 1.0, %v1346
    %v1348 = vadd.f32 %v1323, %v485
    %1350 = vrot.lane.b32.xlu0 %v1348, 80
    %v1351 = vpop.permute.xlu0 %1350
    %v1353 = vmul.f32 %v1336, %v1351
    %v1354 = vadd.f32 %v481, %v1353
    %v1355 = vtanh.pop %v1354
    %v1356 = vsub.f32 1.0, %v1347
    %v1357 = vmul.f32 %v1356, %v1355
    %1358 = vrot.lane.b32.xlu0 %v1188, 16
    %v1359 = vpop.permute.xlu0 %1358
    %v1361 = vmul.f32 %v1347, %v1359
    %v1362 = vadd.f32 %v1357, %v1361
    %v1363 = vpack.c.bf16 %v1362, %v1362
    %1365 = vrot.lane.b32.xlu0 %v1363, 48
    %v1366 = vpop.permute.xlu0 %1365
    %v1368 = vsel %vm290, %v1366, 0
    %1370 = vmatprep.subr.bf16.mxu0 0
    %1371 = vmatpush1.bf16.msra.mxu0 %v1368
    %1372 = vmatprep.subr.bf16.mxu0 0
    %1373 = vmatpush1.bf16.msra.mxu0 0
    %1374 = vmatprep.subr.bf16.mxu0 0
    %1375 = vmatpush1.bf16.msra.mxu0 0
    %1376 = vmatprep.subr.bf16.mxu0 0
    %1377 = vmatpush1.bf16.msra.mxu0 0
    %1378 = vmatprep.subr.bf16.mxu0 0
    %1379 = vmatpush1.bf16.msra.mxu0 0
    %1380 = vmatprep.subr.bf16.mxu0 0
    %1381 = vmatpush1.bf16.msra.mxu0 0
    %1382 = vmatprep.subr.bf16.mxu0 0
    %1383 = vmatpush1.bf16.msra.mxu0 0
    %1384 = vmatprep.subr.bf16.mxu0 0
    %1385 = vmatpush1.bf16.msra.mxu0 0
    %1386 = vmatprep.subr.bf16.mxu0 0
    %1387 = vmatpush1.bf16.msra.mxu0 0
    %1388 = vmatprep.subr.bf16.mxu0 0
    %1389 = vmatpush1.bf16.msra.mxu0 0
    %1390 = vmatprep.subr.bf16.mxu0 0
    %1391 = vmatpush1.bf16.msra.mxu0 0
    %1392 = vmatprep.subr.bf16.mxu0 0
    %1393 = vmatpush1.bf16.msra.mxu0 0
    %1394 = vmatprep.subr.bf16.mxu0 0
    %1395 = vmatpush1.bf16.msra.mxu0 0
    %1396 = vmatprep.subr.bf16.mxu0 0
    %1397 = vmatpush1.bf16.msra.mxu0 0
    %1398 = vmatprep.subr.bf16.mxu0 0
    %1399 = vmatpush1.bf16.msra.mxu0 0
    %1400 = vmatprep.subr.bf16.mxu0 0
    %1401 = vmatpush1.bf16.msra.mxu0 0
    %1402 = vmatprep.mubr.bf16.mxu0 0
    %1403 = vmatmul.mubr.bf16.gmra.mrb[0].mxu0 %v502
    %v1404 = vpop.f32.mrb[0].mxu0
    %v1405 = vadd.f32 %v499, %v1404
    %v1406 = vpop.f32.mrb[0].mxu0
    %v1407 = vpop.f32.mrb[0].mxu0
    %v1408 = vpop.f32.mrb[0].mxu0
    %1409 = vdwg.mxu0
    %1411 = vrot.lane.b32.xlu0 %v1405, 80
    %v1412 = vpop.permute.xlu0 %1411
    %vm1414 = vcmask 786048
    %1415 = vst.msk [vmem:[#allocation2] sm:$0xff] %vm1414, %v1412
    %1417 = vrot.lane.b32.xlu0 %v1362, 48
    %v1418 = vpop.permute.xlu0 %1417
    %1420 = vmatprep.subr.mxu0 0.0
    %1421 = vmatpush1.msra.mxu0 %v1418
    %1422 = vmatprep.subr.mxu0 0.0
    %1423 = vmatpush1.msra.mxu0 0.0
    %1424 = vmatprep.subr.mxu0 0.0
    %1425 = vmatpush1.msra.mxu0 0.0
    %1426 = vmatprep.subr.mxu0 0.0
    %1427 = vmatpush1.msra.mxu0 0.0
    %1428 = vmatprep.subr.mxu0 0.0
    %1429 = vmatpush1.msra.mxu0 0.0
    %1430 = vmatprep.subr.mxu0 0.0
    %1431 = vmatpush1.msra.mxu0 0.0
    %1432 = vmatprep.subr.mxu0 0.0
    %1433 = vmatpush1.msra.mxu0 0.0
    %1434 = vmatprep.subr.mxu0 0.0
    %1435 = vmatpush1.msra.mxu0 0.0
    %1436 = vmatprep.subr.mxu0 0.0
    %1437 = vmatpush1.msra.mxu0 0.0
    %1438 = vmatprep.subr.mxu0 0.0
    %1439 = vmatpush1.msra.mxu0 0.0
    %1440 = vmatprep.subr.mxu0 0.0
    %1441 = vmatpush1.msra.mxu0 0.0
    %1442 = vmatprep.subr.mxu0 0.0
    %1443 = vmatpush1.msra.mxu0 0.0
    %1444 = vmatprep.subr.mxu0 0.0
    %1445 = vmatpush1.msra.mxu0 0.0
    %1446 = vmatprep.subr.mxu0 0.0
    %1447 = vmatpush1.msra.mxu0 0.0
    %1448 = vmatprep.subr.mxu0 0.0
    %1449 = vmatpush1.msra.mxu0 0.0
    %1450 = vmatprep.subr.mxu0 0.0
    %1451 = vmatpush1.msra.mxu0 0.0
    %1452 = vmatprep.subr.mxu0 0.0
    %1453 = vmatpush1.msra.mxu0 0.0
    %1454 = vmatprep.subr.mxu0 0.0
    %1455 = vmatpush1.msra.mxu0 0.0
    %1456 = vmatprep.subr.mxu0 0.0
    %1457 = vmatpush1.msra.mxu0 0.0
    %1458 = vmatprep.subr.mxu0 0.0
    %1459 = vmatpush1.msra.mxu0 0.0
    %1460 = vmatprep.subr.mxu0 0.0
    %1461 = vmatpush1.msra.mxu0 0.0
    %1462 = vmatprep.subr.mxu0 0.0
    %1463 = vmatpush1.msra.mxu0 0.0
    %1464 = vmatprep.subr.mxu0 0.0
    %1465 = vmatpush1.msra.mxu0 0.0
    %1466 = vmatprep.subr.mxu0 0.0
    %1467 = vmatpush1.msra.mxu0 0.0
    %1468 = vmatprep.subr.mxu0 0.0
    %1469 = vmatpush1.msra.mxu0 0.0
    %1470 = vmatprep.subr.mxu0 0.0
    %1471 = vmatpush1.msra.mxu0 0.0
    %1472 = vmatprep.subr.mxu0 0.0
    %1473 = vmatpush1.msra.mxu0 0.0
    %1474 = vmatprep.subr.mxu0 0.0
    %1475 = vmatpush1.msra.mxu0 0.0
    %1476 = vmatprep.subr.mxu0 0.0
    %1477 = vmatpush1.msra.mxu0 0.0
    %1478 = vmatprep.subr.mxu0 0.0
    %1479 = vmatpush1.msra.mxu0 0.0
    %1480 = vmatprep.subr.mxu0 0.0
    %1481 = vmatpush1.msra.mxu0 0.0
    %1482 = vmatprep.subr.mxu0 0.0
    %1483 = vmatpush1.msra.mxu0 0.0
    %1484 = vmatprep.mubr.f32.mxu0 0.0
    %1485 = vmatmul.mubr.f32.gmra.mrb[0].mxu0 %v362
    %v1486 = vpop.f32.mrb[0].mxu0
    %v1487 = vadd.f32 0.0, %v1486
    %v1488 = vpop.f32.mrb[0].mxu0
    %1489 = vmatprep.mubr.f32.mxu0 0.0
    %1490 = vmatmul.mubr.f32.gmra.mrb[0].mxu0 %v365
    %v1491 = vpop.f32.mrb[0].mxu0
    %v1492 = vadd.f32 0.0, %v1491
    %v1493 = vpop.f32.mrb[0].mxu0
    %1494 = vmatprep.mubr.f32.mxu0 0.0
    %1495 = vmatmul.mubr.f32.gmra.mrb[0].mxu0 %v368
    %v1496 = vpop.f32.mrb[0].mxu0
    %v1497 = vadd.f32 0.0, %v1496
    %v1498 = vpop.f32.mrb[0].mxu0
    %1499 = vdwg.mxu0
    %1501 = vrot.lane.b32.xlu0 %v1487, 96
    %v1502 = vpop.permute.xlu0 %1501
    %v1504 = vadd.f32 %v455, %v1502
    %v1505 = vxor.u32 %v1504, 2147483648
    %v1506 = vmul.f32 %v1505, 1.442695
    %v1507 = vpow.pop %v1506
    %v1508 = vadd.f32 %v1507, 1.0
    %v1509 = vrcp.pop %v1508
    %v1510 = vmul.f32 1.0, %v1509
    %1512 = vrot.lane.b32.xlu0 %v1492, 96
    %v1513 = vpop.permute.xlu0 %1512
    %v1515 = vadd.f32 %v468, %v1513
    %v1516 = vxor.u32 %v1515, 2147483648
    %v1517 = vmul.f32 %v1516, 1.442695
    %v1518 = vpow.pop %v1517
    %v1519 = vadd.f32 %v1518, 1.0
    %v1520 = vrcp.pop %v1519
    %v1521 = vmul.f32 1.0, %v1520
    %v1522 = vadd.f32 %v1497, %v485
    %1524 = vrot.lane.b32.xlu0 %v1522, 96
    %v1525 = vpop.permute.xlu0 %1524
    %v1527 = vmul.f32 %v1510, %v1525
    %v1528 = vadd.f32 %v481, %v1527
    %v1529 = vtanh.pop %v1528
    %v1530 = vsub.f32 1.0, %v1521
    %v1531 = vmul.f32 %v1530, %v1529
    %1532 = vrot.lane.b32.xlu0 %v1362, 16
    %v1533 = vpop.permute.xlu0 %1532
    %v1535 = vmul.f32 %v1521, %v1533
    %v1536 = vadd.f32 %v1531, %v1535
    %v1537 = vpack.c.bf16 %v1536, %v1536
    %1539 = vrot.lane.b32.xlu0 %v1537, 32
    %v1540 = vpop.permute.xlu0 %1539
    %v1542 = vsel %vm290, %v1540, 0
    %1544 = vmatprep.subr.bf16.mxu0 0
    %1545 = vmatpush1.bf16.msra.mxu0 %v1542
    %1546 = vmatprep.subr.bf16.mxu0 0
    %1547 = vmatpush1.bf16.msra.mxu0 0
    %1548 = vmatprep.subr.bf16.mxu0 0
    %1549 = vmatpush1.bf16.msra.mxu0 0
    %1550 = vmatprep.subr.bf16.mxu0 0
    %1551 = vmatpush1.bf16.msra.mxu0 0
    %1552 = vmatprep.subr.bf16.mxu0 0
    %1553 = vmatpush1.bf16.msra.mxu0 0
    %1554 = vmatprep.subr.bf16.mxu0 0
    %1555 = vmatpush1.bf16.msra.mxu0 0
    %1556 = vmatprep.subr.bf16.mxu0 0
    %1557 = vmatpush1.bf16.msra.mxu0 0
    %1558 = vmatprep.subr.bf16.mxu0 0
    %1559 = vmatpush1.bf16.msra.mxu0 0
    %1560 = vmatprep.subr.bf16.mxu0 0
    %1561 = vmatpush1.bf16.msra.mxu0 0
    %1562 = vmatprep.subr.bf16.mxu0 0
    %1563 = vmatpush1.bf16.msra.mxu0 0
    %1564 = vmatprep.subr.bf16.mxu0 0
    %1565 = vmatpush1.bf16.msra.mxu0 0
    %1566 = vmatprep.subr.bf16.mxu0 0
    %1567 = vmatpush1.bf16.msra.mxu0 0
    %1568 = vmatprep.subr.bf16.mxu0 0
    %1569 = vmatpush1.bf16.msra.mxu0 0
    %1570 = vmatprep.subr.bf16.mxu0 0
    %1571 = vmatpush1.bf16.msra.mxu0 0
    %1572 = vmatprep.subr.bf16.mxu0 0
    %1573 = vmatpush1.bf16.msra.mxu0 0
    %1574 = vmatprep.subr.bf16.mxu0 0
    %1575 = vmatpush1.bf16.msra.mxu0 0
    %1576 = vmatprep.mubr.bf16.mxu0 0
    %1577 = vmatmul.mubr.bf16.gmra.mrb[0].mxu0 %v502
    %v1578 = vpop.f32.mrb[0].mxu0
    %v1579 = vadd.f32 %v499, %v1578
    %v1580 = vpop.f32.mrb[0].mxu0
    %v1581 = vpop.f32.mrb[0].mxu0
    %v1582 = vpop.f32.mrb[0].mxu0
    %1583 = vdwg.mxu0
    %1585 = vrot.lane.b32.xlu0 %v1579, 96
    %v1586 = vpop.permute.xlu0 %1585
    %vm1588 = vcmask 917248
    %1589 = vst.msk [vmem:[#allocation2] sm:$0xff] %vm1588, %v1586
    %1591 = vrot.lane.b32.xlu0 %v1536, 32
    %v1592 = vpop.permute.xlu0 %1591
    %1594 = vmatprep.subr.mxu0 0.0
    %1595 = vmatpush1.msra.mxu0 %v1592
    %1596 = vmatprep.subr.mxu0 0.0
    %1597 = vmatpush1.msra.mxu0 0.0
    %1598 = vmatprep.subr.mxu0 0.0
    %1599 = vmatpush1.msra.mxu0 0.0
    %1600 = vmatprep.subr.mxu0 0.0
    %1601 = vmatpush1.msra.mxu0 0.0
    %1602 = vmatprep.subr.mxu0 0.0
    %1603 = vmatpush1.msra.mxu0 0.0
    %1604 = vmatprep.subr.mxu0 0.0
    %1605 = vmatpush1.msra.mxu0 0.0
    %1606 = vmatprep.subr.mxu0 0.0
    %1607 = vmatpush1.msra.mxu0 0.0
    %1608 = vmatprep.subr.mxu0 0.0
    %1609 = vmatpush1.msra.mxu0 0.0
    %1610 = vmatprep.subr.mxu0 0.0
    %1611 = vmatpush1.msra.mxu0 0.0
    %1612 = vmatprep.subr.mxu0 0.0
    %1613 = vmatpush1.msra.mxu0 0.0
    %1614 = vmatprep.subr.mxu0 0.0
    %1615 = vmatpush1.msra.mxu0 0.0
    %1616 = vmatprep.subr.mxu0 0.0
    %1617 = vmatpush1.msra.mxu0 0.0
    %1618 = vmatprep.subr.mxu0 0.0
    %1619 = vmatpush1.msra.mxu0 0.0
    %1620 = vmatprep.subr.mxu0 0.0
    %1621 = vmatpush1.msra.mxu0 0.0
    %1622 = vmatprep.subr.mxu0 0.0
    %1623 = vmatpush1.msra.mxu0 0.0
    %1624 = vmatprep.subr.mxu0 0.0
    %1625 = vmatpush1.msra.mxu0 0.0
    %1626 = vmatprep.subr.mxu0 0.0
    %1627 = vmatpush1.msra.mxu0 0.0
    %1628 = vmatprep.subr.mxu0 0.0
    %1629 = vmatpush1.msra.mxu0 0.0
    %1630 = vmatprep.subr.mxu0 0.0
    %1631 = vmatpush1.msra.mxu0 0.0
    %1632 = vmatprep.subr.mxu0 0.0
    %1633 = vmatpush1.msra.mxu0 0.0
    %1634 = vmatprep.subr.mxu0 0.0
    %1635 = vmatpush1.msra.mxu0 0.0
    %1636 = vmatprep.subr.mxu0 0.0
    %1637 = vmatpush1.msra.mxu0 0.0
    %1638 = vmatprep.subr.mxu0 0.0
    %1639 = vmatpush1.msra.mxu0 0.0
    %1640 = vmatprep.subr.mxu0 0.0
    %1641 = vmatpush1.msra.mxu0 0.0
    %1642 = vmatprep.subr.mxu0 0.0
    %1643 = vmatpush1.msra.mxu0 0.0
    %1644 = vmatprep.subr.mxu0 0.0
    %1645 = vmatpush1.msra.mxu0 0.0
    %1646 = vmatprep.subr.mxu0 0.0
    %1647 = vmatpush1.msra.mxu0 0.0
    %1648 = vmatprep.subr.mxu0 0.0
    %1649 = vmatpush1.msra.mxu0 0.0
    %1650 = vmatprep.subr.mxu0 0.0
    %1651 = vmatpush1.msra.mxu0 0.0
    %1652 = vmatprep.subr.mxu0 0.0
    %1653 = vmatpush1.msra.mxu0 0.0
    %1654 = vmatprep.subr.mxu0 0.0
    %1655 = vmatpush1.msra.mxu0 0.0
    %1656 = vmatprep.subr.mxu0 0.0
    %1657 = vmatpush1.msra.mxu0 0.0
    %1658 = vmatprep.mubr.f32.mxu0 0.0
    %1659 = vmatmul.mubr.f32.gmra.mrb[0].mxu0 %v362
    %v1660 = vpop.f32.mrb[0].mxu0
    %v1661 = vadd.f32 0.0, %v1660
    %v1662 = vpop.f32.mrb[0].mxu0
    %1663 = vmatprep.mubr.f32.mxu0 0.0
    %1664 = vmatmul.mubr.f32.gmra.mrb[0].mxu0 %v365
    %v1665 = vpop.f32.mrb[0].mxu0
    %v1666 = vadd.f32 0.0, %v1665
    %v1667 = vpop.f32.mrb[0].mxu0
    %1668 = vmatprep.mubr.f32.mxu0 0.0
    %1669 = vmatmul.mubr.f32.gmra.mrb[0].mxu0 %v368
    %v1670 = vpop.f32.mrb[0].mxu0
    %v1671 = vadd.f32 0.0, %v1670
    %v1672 = vpop.f32.mrb[0].mxu0
    %1673 = vdwg.mxu0
    %1675 = vrot.lane.b32.xlu0 %v1661, 112
    %v1676 = vpop.permute.xlu0 %1675
    %v1678 = vadd.f32 %v455, %v1676
    %v1679 = vxor.u32 %v1678, 2147483648
    %v1680 = vmul.f32 %v1679, 1.442695
    %v1681 = vpow.pop %v1680
    %v1682 = vadd.f32 %v1681, 1.0
    %v1683 = vrcp.pop %v1682
    %v1684 = vmul.f32 1.0, %v1683
    %1686 = vrot.lane.b32.xlu0 %v1666, 112
    %v1687 = vpop.permute.xlu0 %1686
    %v1689 = vadd.f32 %v468, %v1687
    %v1690 = vxor.u32 %v1689, 2147483648
    %v1691 = vmul.f32 %v1690, 1.442695
    %v1692 = vpow.pop %v1691
    %v1693 = vadd.f32 %v1692, 1.0
    %v1694 = vrcp.pop %v1693
    %v1695 = vmul.f32 1.0, %v1694
    %v1696 = vadd.f32 %v1671, %v485
    %1698 = vrot.lane.b32.xlu0 %v1696, 112
    %v1699 = vpop.permute.xlu0 %1698
    %v1701 = vmul.f32 %v1684, %v1699
    %v1702 = vadd.f32 %v481, %v1701
    %v1703 = vtanh.pop %v1702
    %v1704 = vsub.f32 1.0, %v1695
    %v1705 = vmul.f32 %v1704, %v1703
    %1706 = vrot.lane.b32.xlu0 %v1536, 16
    %v1707 = vpop.permute.xlu0 %1706
    %v1709 = vmul.f32 %v1695, %v1707
    %v1710 = vadd.f32 %v1705, %v1709
    %v1711 = vpack.c.bf16 %v1710, %v1710
    %1713 = vrot.lane.b32.xlu0 %v1711, 16
    %v1714 = vpop.permute.xlu0 %1713
    %v1716 = vsel %vm290, %v1714, 0
    %1718 = vmatprep.subr.bf16.mxu0 0
    %1719 = vmatpush1.bf16.msra.mxu0 %v1716
    %1720 = vmatprep.subr.bf16.mxu0 0
    %1721 = vmatpush1.bf16.msra.mxu0 0
    %1722 = vmatprep.subr.bf16.mxu0 0
    %1723 = vmatpush1.bf16.msra.mxu0 0
    %1724 = vmatprep.subr.bf16.mxu0 0
    %1725 = vmatpush1.bf16.msra.mxu0 0
    %1726 = vmatprep.subr.bf16.mxu0 0
    %1727 = vmatpush1.bf16.msra.mxu0 0
    %1728 = vmatprep.subr.bf16.mxu0 0
    %1729 = vmatpush1.bf16.msra.mxu0 0
    %1730 = vmatprep.subr.bf16.mxu0 0
    %1731 = vmatpush1.bf16.msra.mxu0 0
    %1732 = vmatprep.subr.bf16.mxu0 0
    %1733 = vmatpush1.bf16.msra.mxu0 0
    %1734 = vmatprep.subr.bf16.mxu0 0
    %1735 = vmatpush1.bf16.msra.mxu0 0
    %1736 = vmatprep.subr.bf16.mxu0 0
    %1737 = vmatpush1.bf16.msra.mxu0 0
    %1738 = vmatprep.subr.bf16.mxu0 0
    %1739 = vmatpush1.bf16.msra.mxu0 0
    %1740 = vmatprep.subr.bf16.mxu0 0
    %1741 = vmatpush1.bf16.msra.mxu0 0
    %1742 = vmatprep.subr.bf16.mxu0 0
    %1743 = vmatpush1.bf16.msra.mxu0 0
    %1744 = vmatprep.subr.bf16.mxu0 0
    %1745 = vmatpush1.bf16.msra.mxu0 0
    %1746 = vmatprep.subr.bf16.mxu0 0
    %1747 = vmatpush1.bf16.msra.mxu0 0
    %1748 = vmatprep.subr.bf16.mxu0 0
    %1749 = vmatpush1.bf16.msra.mxu0 0
    %1750 = vmatprep.mubr.bf16.mxu0 0
    %1751 = vmatmul.mubr.bf16.gmra.mrb[0].mxu0 %v502
    %v1752 = vpop.f32.mrb[0].mxu0
    %v1753 = vadd.f32 %v499, %v1752
    %v1754 = vpop.f32.mrb[0].mxu0
    %v1755 = vpop.f32.mrb[0].mxu0
    %v1756 = vpop.f32.mrb[0].mxu0
    %1757 = vdwg.mxu0
    %1759 = vrot.lane.b32.xlu0 %v1753, 112
    %v1760 = vpop.permute.xlu0 %1759
    %vm1762 = vcmask 1048448
    %1763 = vst.msk [vmem:[#allocation2] sm:$0xff] %vm1762, %v1760
    %1765 = vrot.lane.b32.xlu0 %v1710, 16
    %v1766 = vpop.permute.xlu0 %1765
    %1768 = vmatprep.subr.mxu0 0.0
    %1769 = vmatpush1.msra.mxu0 %v1766
    %1770 = vmatprep.subr.mxu0 0.0
    %1771 = vmatpush1.msra.mxu0 0.0
    %1772 = vmatprep.subr.mxu0 0.0
    %1773 = vmatpush1.msra.mxu0 0.0
    %1774 = vmatprep.subr.mxu0 0.0
    %1775 = vmatpush1.msra.mxu0 0.0
    %1776 = vmatprep.subr.mxu0 0.0
    %1777 = vmatpush1.msra.mxu0 0.0
    %1778 = vmatprep.subr.mxu0 0.0
    %1779 = vmatpush1.msra.mxu0 0.0
    %1780 = vmatprep.subr.mxu0 0.0
    %1781 = vmatpush1.msra.mxu0 0.0
    %1782 = vmatprep.subr.mxu0 0.0
    %1783 = vmatpush1.msra.mxu0 0.0
    %1784 = vmatprep.subr.mxu0 0.0
    %1785 = vmatpush1.msra.mxu0 0.0
    %1786 = vmatprep.subr.mxu0 0.0
    %1787 = vmatpush1.msra.mxu0 0.0
    %1788 = vmatprep.subr.mxu0 0.0
    %1789 = vmatpush1.msra.mxu0 0.0
    %1790 = vmatprep.subr.mxu0 0.0
    %1791 = vmatpush1.msra.mxu0 0.0
    %1792 = vmatprep.subr.mxu0 0.0
    %1793 = vmatpush1.msra.mxu0 0.0
    %1794 = vmatprep.subr.mxu0 0.0
    %1795 = vmatpush1.msra.mxu0 0.0
    %1796 = vmatprep.subr.mxu0 0.0
    %1797 = vmatpush1.msra.mxu0 0.0
    %1798 = vmatprep.subr.mxu0 0.0
    %1799 = vmatpush1.msra.mxu0 0.0
    %1800 = vmatprep.subr.mxu0 0.0
    %1801 = vmatpush1.msra.mxu0 0.0
    %1802 = vmatprep.subr.mxu0 0.0
    %1803 = vmatpush1.msra.mxu0 0.0
    %1804 = vmatprep.subr.mxu0 0.0
    %1805 = vmatpush1.msra.mxu0 0.0
    %1806 = vmatprep.subr.mxu0 0.0
    %1807 = vmatpush1.msra.mxu0 0.0
    %1808 = vmatprep.subr.mxu0 0.0
    %1809 = vmatpush1.msra.mxu0 0.0
    %1810 = vmatprep.subr.mxu0 0.0
    %1811 = vmatpush1.msra.mxu0 0.0
    %1812 = vmatprep.subr.mxu0 0.0
    %1813 = vmatpush1.msra.mxu0 0.0
    %1814 = vmatprep.subr.mxu0 0.0
    %1815 = vmatpush1.msra.mxu0 0.0
    %1816 = vmatprep.subr.mxu0 0.0
    %1817 = vmatpush1.msra.mxu0 0.0
    %1818 = vmatprep.subr.mxu0 0.0
    %1819 = vmatpush1.msra.mxu0 0.0
    %1820 = vmatprep.subr.mxu0 0.0
    %1821 = vmatpush1.msra.mxu0 0.0
    %1822 = vmatprep.subr.mxu0 0.0
    %1823 = vmatpush1.msra.mxu0 0.0
    %1824 = vmatprep.subr.mxu0 0.0
    %1825 = vmatpush1.msra.mxu0 0.0
    %1826 = vmatprep.subr.mxu0 0.0
    %1827 = vmatpush1.msra.mxu0 0.0
    %1828 = vmatprep.subr.mxu0 0.0
    %1829 = vmatpush1.msra.mxu0 0.0
    %1830 = vmatprep.subr.mxu0 0.0
    %1831 = vmatpush1.msra.mxu0 0.0
    %1832 = vmatprep.mubr.f32.mxu0 0.0
    %1833 = vmatmul.mubr.f32.gmra.mrb[0].mxu0 %v362
    %v1834 = vpop.f32.mrb[0].mxu0
    %v1835 = vadd.f32 0.0, %v1834
    %v1836 = vpop.f32.mrb[0].mxu0
    %1837 = vmatprep.mubr.f32.mxu0 0.0
    %1838 = vmatmul.mubr.f32.gmra.mrb[0].mxu0 %v365
    %v1839 = vpop.f32.mrb[0].mxu0
    %v1840 = vadd.f32 0.0, %v1839
    %v1841 = vpop.f32.mrb[0].mxu0
    %1842 = vmatprep.mubr.f32.mxu0 0.0
    %1843 = vmatmul.mubr.f32.gmra.mrb[0].mxu0 %v368
    %v1844 = vpop.f32.mrb[0].mxu0
    %v1845 = vadd.f32 0.0, %v1844
    %v1846 = vpop.f32.mrb[0].mxu0
    %1847 = vdwg.mxu0
    %v1848 = vadd.f32 %v334, %v453
    %v1849 = vadd.f32 %v1848, %v1835
    %v1850 = vxor.u32 %v1849, 2147483648
    %v1851 = vmul.f32 %v1850, 1.442695
    %v1852 = vpow.pop %v1851
    %v1853 = vadd.f32 %v1852, 1.0
    %v1854 = vrcp.pop %v1853
    %v1855 = vmul.f32 1.0, %v1854
    %v1856 = vadd.f32 %v338, %v466
    %v1857 = vadd.f32 %v1856, %v1840
    %v1858 = vxor.u32 %v1857, 2147483648
    %v1859 = vmul.f32 %v1858, 1.442695
    %v1860 = vpow.pop %v1859
    %v1861 = vadd.f32 %v1860, 1.0
    %v1862 = vrcp.pop %v1861
    %v1863 = vmul.f32 1.0, %v1862
    %v1864 = vadd.f32 %v344, %v479
    %v1865 = vadd.f32 %v1845, %v485
    %v1866 = vmul.f32 %v1855, %v1865
    %v1867 = vadd.f32 %v1864, %v1866
    %v1868 = vtanh.pop %v1867
    %v1869 = vsub.f32 1.0, %v1863
    %v1870 = vmul.f32 %v1869, %v1868
    %v1871 = vmul.f32 %v1863, %v1766
    %v1872 = vadd.f32 %v1870, %v1871
    %v1873 = vpack.c.bf16 %v1872, %v1872
    %v1875 = vsel %vm290, %v1873, 0
    %1877 = vmatprep.subr.bf16.mxu0 0
    %1878 = vmatpush1.bf16.msra.mxu0 %v1875
    %1879 = vmatprep.subr.bf16.mxu0 0
    %1880 = vmatpush1.bf16.msra.mxu0 0
    %1881 = vmatprep.subr.bf16.mxu0 0
    %1882 = vmatpush1.bf16.msra.mxu0 0
    %1883 = vmatprep.subr.bf16.mxu0 0
    %1884 = vmatpush1.bf16.msra.mxu0 0
    %1885 = vmatprep.subr.bf16.mxu0 0
    %1886 = vmatpush1.bf16.msra.mxu0 0
    %1887 = vmatprep.subr.bf16.mxu0 0
    %1888 = vmatpush1.bf16.msra.mxu0 0
    %1889 = vmatprep.subr.bf16.mxu0 0
    %1890 = vmatpush1.bf16.msra.mxu0 0
    %1891 = vmatprep.subr.bf16.mxu0 0
    %1892 = vmatpush1.bf16.msra.mxu0 0
    %1893 = vmatprep.subr.bf16.mxu0 0
    %1894 = vmatpush1.bf16.msra.mxu0 0
    %1895 = vmatprep.subr.bf16.mxu0 0
    %1896 = vmatpush1.bf16.msra.mxu0 0
    %1897 = vmatprep.subr.bf16.mxu0 0
    %1898 = vmatpush1.bf16.msra.mxu0 0
    %1899 = vmatprep.subr.bf16.mxu0 0
    %1900 = vmatpush1.bf16.msra.mxu0 0
    %1901 = vmatprep.subr.bf16.mxu0 0
    %1902 = vmatpush1.bf16.msra.mxu0 0
    %1903 = vmatprep.subr.bf16.mxu0 0
    %1904 = vmatpush1.bf16.msra.mxu0 0
    %1905 = vmatprep.subr.bf16.mxu0 0
    %1906 = vmatpush1.bf16.msra.mxu0 0
    %1907 = vmatprep.subr.bf16.mxu0 0
    %1908 = vmatpush1.bf16.msra.mxu0 0
    %1909 = vmatprep.mubr.bf16.mxu0 0
    %1910 = vmatmul.mubr.bf16.gmra.mrb[0].mxu0 %v502
    %v1911 = vpop.f32.mrb[0].mxu0
    %v1912 = vadd.f32 %v499, %v1911
    %v1913 = vpop.f32.mrb[0].mxu0
    %v1914 = vpop.f32.mrb[0].mxu0
    %v1915 = vpop.f32.mrb[0].mxu0
    %1916 = vdwg.mxu0
    %1917 = vst.msk [vmem:[#allocation2 + $0x8] sm:$0xff] %vm547, %v1912
    %1918 = vmatprep.subr.mxu0 0.0
    %1919 = vmatpush1.msra.mxu0 %v1872
    %1920 = vmatprep.subr.mxu0 0.0
    %1921 = vmatpush1.msra.mxu0 0.0
    %1922 = vmatprep.subr.mxu0 0.0
    %1923 = vmatpush1.msra.mxu0 0.0
    %1924 = vmatprep.subr.mxu0 0.0
    %1925 = vmatpush1.msra.mxu0 0.0
    %1926 = vmatprep.subr.mxu0 0.0
    %1927 = vmatpush1.msra.mxu0 0.0
    %1928 = vmatprep.subr.mxu0 0.0
    %1929 = vmatpush1.msra.mxu0 0.0
    %1930 = vmatprep.subr.mxu0 0.0
    %1931 = vmatpush1.msra.mxu0 0.0
    %1932 = vmatprep.subr.mxu0 0.0
    %1933 = vmatpush1.msra.mxu0 0.0
    %1934 = vmatprep.subr.mxu0 0.0
    %1935 = vmatpush1.msra.mxu0 0.0
    %1936 = vmatprep.subr.mxu0 0.0
    %1937 = vmatpush1.msra.mxu0 0.0
    %1938 = vmatprep.subr.mxu0 0.0
    %1939 = vmatpush1.msra.mxu0 0.0
    %1940 = vmatprep.subr.mxu0 0.0
    %1941 = vmatpush1.msra.mxu0 0.0
    %1942 = vmatprep.subr.mxu0 0.0
    %1943 = vmatpush1.msra.mxu0 0.0
    %1944 = vmatprep.subr.mxu0 0.0
    %1945 = vmatpush1.msra.mxu0 0.0
    %1946 = vmatprep.subr.mxu0 0.0
    %1947 = vmatpush1.msra.mxu0 0.0
    %1948 = vmatprep.subr.mxu0 0.0
    %1949 = vmatpush1.msra.mxu0 0.0
    %1950 = vmatprep.subr.mxu0 0.0
    %1951 = vmatpush1.msra.mxu0 0.0
    %1952 = vmatprep.subr.mxu0 0.0
    %1953 = vmatpush1.msra.mxu0 0.0
    %1954 = vmatprep.subr.mxu0 0.0
    %1955 = vmatpush1.msra.mxu0 0.0
    %1956 = vmatprep.subr.mxu0 0.0
    %1957 = vmatpush1.msra.mxu0 0.0
    %1958 = vmatprep.subr.mxu0 0.0
    %1959 = vmatpush1.msra.mxu0 0.0
    %1960 = vmatprep.subr.mxu0 0.0
    %1961 = vmatpush1.msra.mxu0 0.0
    %1962 = vmatprep.subr.mxu0 0.0
    %1963 = vmatpush1.msra.mxu0 0.0
    %1964 = vmatprep.subr.mxu0 0.0
    %1965 = vmatpush1.msra.mxu0 0.0
    %1966 = vmatprep.subr.mxu0 0.0
    %1967 = vmatpush1.msra.mxu0 0.0
    %1968 = vmatprep.subr.mxu0 0.0
    %1969 = vmatpush1.msra.mxu0 0.0
    %1970 = vmatprep.subr.mxu0 0.0
    %1971 = vmatpush1.msra.mxu0 0.0
    %1972 = vmatprep.subr.mxu0 0.0
    %1973 = vmatpush1.msra.mxu0 0.0
    %1974 = vmatprep.subr.mxu0 0.0
    %1975 = vmatpush1.msra.mxu0 0.0
    %1976 = vmatprep.subr.mxu0 0.0
    %1977 = vmatpush1.msra.mxu0 0.0
    %1978 = vmatprep.subr.mxu0 0.0
    %1979 = vmatpush1.msra.mxu0 0.0
    %1980 = vmatprep.subr.mxu0 0.0
    %1981 = vmatpush1.msra.mxu0 0.0
    %1982 = vmatprep.mubr.f32.mxu0 0.0
    %1983 = vmatmul.mubr.f32.gmra.mrb[0].mxu0 %v362
    %v1984 = vpop.f32.mrb[0].mxu0
    %v1985 = vadd.f32 0.0, %v1984
    %v1986 = vpop.f32.mrb[0].mxu0
    %1987 = vmatprep.mubr.f32.mxu0 0.0
    %1988 = vmatmul.mubr.f32.gmra.mrb[0].mxu0 %v365
    %v1989 = vpop.f32.mrb[0].mxu0
    %v1990 = vadd.f32 0.0, %v1989
    %v1991 = vpop.f32.mrb[0].mxu0
    %1992 = vmatprep.mubr.f32.mxu0 0.0
    %1993 = vmatmul.mubr.f32.gmra.mrb[0].mxu0 %v368
    %v1994 = vpop.f32.mrb[0].mxu0
    %v1995 = vadd.f32 0.0, %v1994
    %v1996 = vpop.f32.mrb[0].mxu0
    %1997 = vdwg.mxu0
    %1999 = vrot.lane.b32.xlu0 %v1985, 16
    %v2000 = vpop.permute.xlu0 %1999
    %v2002 = vadd.f32 %v1848, %v2000
    %v2003 = vxor.u32 %v2002, 2147483648
    %v2004 = vmul.f32 %v2003, 1.442695
    %v2005 = vpow.pop %v2004
    %v2006 = vadd.f32 %v2005, 1.0
    %v2007 = vrcp.pop %v2006
    %v2008 = vmul.f32 1.0, %v2007
    %2010 = vrot.lane.b32.xlu0 %v1990, 16
    %v2011 = vpop.permute.xlu0 %2010
    %v2013 = vadd.f32 %v1856, %v2011
    %v2014 = vxor.u32 %v2013, 2147483648
    %v2015 = vmul.f32 %v2014, 1.442695
    %v2016 = vpow.pop %v2015
    %v2017 = vadd.f32 %v2016, 1.0
    %v2018 = vrcp.pop %v2017
    %v2019 = vmul.f32 1.0, %v2018
    %v2020 = vadd.f32 %v1995, %v485
    %2022 = vrot.lane.b32.xlu0 %v2020, 16
    %v2023 = vpop.permute.xlu0 %2022
    %v2025 = vmul.f32 %v2008, %v2023
    %v2026 = vadd.f32 %v1864, %v2025
    %v2027 = vtanh.pop %v2026
    %v2028 = vsub.f32 1.0, %v2019
    %v2029 = vmul.f32 %v2028, %v2027
    %2031 = vrot.lane.b32.xlu0 %v1872, 16
    %v2032 = vpop.permute.xlu0 %2031
    %v2034 = vmul.f32 %v2019, %v2032
    %v2035 = vadd.f32 %v2029, %v2034
    %v2036 = vpack.c.bf16 %v2035, %v2035
    %2038 = vrot.lane.b32.xlu0 %v2036, 112
    %v2039 = vpop.permute.xlu0 %2038
    %v2041 = vsel %vm290, %v2039, 0
    %2043 = vmatprep.subr.bf16.mxu0 0
    %2044 = vmatpush1.bf16.msra.mxu0 %v2041
    %2045 = vmatprep.subr.bf16.mxu0 0
    %2046 = vmatpush1.bf16.msra.mxu0 0
    %2047 = vmatprep.subr.bf16.mxu0 0
    %2048 = vmatpush1.bf16.msra.mxu0 0
    %2049 = vmatprep.subr.bf16.mxu0 0
    %2050 = vmatpush1.bf16.msra.mxu0 0
    %2051 = vmatprep.subr.bf16.mxu0 0
    %2052 = vmatpush1.bf16.msra.mxu0 0
    %2053 = vmatprep.subr.bf16.mxu0 0
    %2054 = vmatpush1.bf16.msra.mxu0 0
    %2055 = vmatprep.subr.bf16.mxu0 0
    %2056 = vmatpush1.bf16.msra.mxu0 0
    %2057 = vmatprep.subr.bf16.mxu0 0
    %2058 = vmatpush1.bf16.msra.mxu0 0
    %2059 = vmatprep.subr.bf16.mxu0 0
    %2060 = vmatpush1.bf16.msra.mxu0 0
    %2061 = vmatprep.subr.bf16.mxu0 0
    %2062 = vmatpush1.bf16.msra.mxu0 0
    %2063 = vmatprep.subr.bf16.mxu0 0
    %2064 = vmatpush1.bf16.msra.mxu0 0
    %2065 = vmatprep.subr.bf16.mxu0 0
    %2066 = vmatpush1.bf16.msra.mxu0 0
    %2067 = vmatprep.subr.bf16.mxu0 0
    %2068 = vmatpush1.bf16.msra.mxu0 0
    %2069 = vmatprep.subr.bf16.mxu0 0
    %2070 = vmatpush1.bf16.msra.mxu0 0
    %2071 = vmatprep.subr.bf16.mxu0 0
    %2072 = vmatpush1.bf16.msra.mxu0 0
    %2073 = vmatprep.subr.bf16.mxu0 0
    %2074 = vmatpush1.bf16.msra.mxu0 0
    %2075 = vmatprep.mubr.bf16.mxu0 0
    %2076 = vmatmul.mubr.bf16.gmra.mrb[0].mxu0 %v502
    %v2077 = vpop.f32.mrb[0].mxu0
    %v2078 = vadd.f32 %v499, %v2077
    %v2079 = vpop.f32.mrb[0].mxu0
    %v2080 = vpop.f32.mrb[0].mxu0
    %v2081 = vpop.f32.mrb[0].mxu0
    %2082 = vdwg.mxu0
    %2084 = vrot.lane.b32.xlu0 %v2078, 16
    %v2085 = vpop.permute.xlu0 %2084
    %2087 = vst.msk [vmem:[#allocation2 + $0x8] sm:$0xff] %vm718, %v2085
    %2089 = vrot.lane.b32.xlu0 %v2035, 112
    %v2090 = vpop.permute.xlu0 %2089
    %2092 = vmatprep.subr.mxu0 0.0
    %2093 = vmatpush1.msra.mxu0 %v2090
    %2094 = vmatprep.subr.mxu0 0.0
    %2095 = vmatpush1.msra.mxu0 0.0
    %2096 = vmatprep.subr.mxu0 0.0
    %2097 = vmatpush1.msra.mxu0 0.0
    %2098 = vmatprep.subr.mxu0 0.0
    %2099 = vmatpush1.msra.mxu0 0.0
    %2100 = vmatprep.subr.mxu0 0.0
    %2101 = vmatpush1.msra.mxu0 0.0
    %2102 = vmatprep.subr.mxu0 0.0
    %2103 = vmatpush1.msra.mxu0 0.0
    %2104 = vmatprep.subr.mxu0 0.0
    %2105 = vmatpush1.msra.mxu0 0.0
    %2106 = vmatprep.subr.mxu0 0.0
    %2107 = vmatpush1.msra.mxu0 0.0
    %2108 = vmatprep.subr.mxu0 0.0
    %2109 = vmatpush1.msra.mxu0 0.0
    %2110 = vmatprep.subr.mxu0 0.0
    %2111 = vmatpush1.msra.mxu0 0.0
    %2112 = vmatprep.subr.mxu0 0.0
    %2113 = vmatpush1.msra.mxu0 0.0
    %2114 = vmatprep.subr.mxu0 0.0
    %2115 = vmatpush1.msra.mxu0 0.0
    %2116 = vmatprep.subr.mxu0 0.0
    %2117 = vmatpush1.msra.mxu0 0.0
    %2118 = vmatprep.subr.mxu0 0.0
    %2119 = vmatpush1.msra.mxu0 0.0
    %2120 = vmatprep.subr.mxu0 0.0
    %2121 = vmatpush1.msra.mxu0 0.0
    %2122 = vmatprep.subr.mxu0 0.0
    %2123 = vmatpush1.msra.mxu0 0.0
    %2124 = vmatprep.subr.mxu0 0.0
    %2125 = vmatpush1.msra.mxu0 0.0
    %2126 = vmatprep.subr.mxu0 0.0
    %2127 = vmatpush1.msra.mxu0 0.0
    %2128 = vmatprep.subr.mxu0 0.0
    %2129 = vmatpush1.msra.mxu0 0.0
    %2130 = vmatprep.subr.mxu0 0.0
    %2131 = vmatpush1.msra.mxu0 0.0
    %2132 = vmatprep.subr.mxu0 0.0
    %2133 = vmatpush1.msra.mxu0 0.0
    %2134 = vmatprep.subr.mxu0 0.0
    %2135 = vmatpush1.msra.mxu0 0.0
    %2136 = vmatprep.subr.mxu0 0.0
    %2137 = vmatpush1.msra.mxu0 0.0
    %2138 = vmatprep.subr.mxu0 0.0
    %2139 = vmatpush1.msra.mxu0 0.0
    %2140 = vmatprep.subr.mxu0 0.0
    %2141 = vmatpush1.msra.mxu0 0.0
    %2142 = vmatprep.subr.mxu0 0.0
    %2143 = vmatpush1.msra.mxu0 0.0
    %2144 = vmatprep.subr.mxu0 0.0
    %2145 = vmatpush1.msra.mxu0 0.0
    %2146 = vmatprep.subr.mxu0 0.0
    %2147 = vmatpush1.msra.mxu0 0.0
    %2148 = vmatprep.subr.mxu0 0.0
    %2149 = vmatpush1.msra.mxu0 0.0
    %2150 = vmatprep.subr.mxu0 0.0
    %2151 = vmatpush1.msra.mxu0 0.0
    %2152 = vmatprep.subr.mxu0 0.0
    %2153 = vmatpush1.msra.mxu0 0.0
    %2154 = vmatprep.subr.mxu0 0.0
    %2155 = vmatpush1.msra.mxu0 0.0
    %2156 = vmatprep.mubr.f32.mxu0 0.0
    %2157 = vmatmul.mubr.f32.gmra.mrb[0].mxu0 %v362
    %v2158 = vpop.f32.mrb[0].mxu0
    %v2159 = vadd.f32 0.0, %v2158
    %v2160 = vpop.f32.mrb[0].mxu0
    %2161 = vmatprep.mubr.f32.mxu0 0.0
    %2162 = vmatmul.mubr.f32.gmra.mrb[0].mxu0 %v365
    %v2163 = vpop.f32.mrb[0].mxu0
    %v2164 = vadd.f32 0.0, %v2163
    %v2165 = vpop.f32.mrb[0].mxu0
    %2166 = vmatprep.mubr.f32.mxu0 0.0
    %2167 = vmatmul.mubr.f32.gmra.mrb[0].mxu0 %v368
    %v2168 = vpop.f32.mrb[0].mxu0
    %v2169 = vadd.f32 0.0, %v2168
    %v2170 = vpop.f32.mrb[0].mxu0
    %2171 = vdwg.mxu0
    %2173 = vrot.lane.b32.xlu0 %v2159, 32
    %v2174 = vpop.permute.xlu0 %2173
    %v2176 = vadd.f32 %v1848, %v2174
    %v2177 = vxor.u32 %v2176, 2147483648
    %v2178 = vmul.f32 %v2177, 1.442695
    %v2179 = vpow.pop %v2178
    %v2180 = vadd.f32 %v2179, 1.0
    %v2181 = vrcp.pop %v2180
    %v2182 = vmul.f32 1.0, %v2181
    %2184 = vrot.lane.b32.xlu0 %v2164, 32
    %v2185 = vpop.permute.xlu0 %2184
    %v2187 = vadd.f32 %v1856, %v2185
    %v2188 = vxor.u32 %v2187, 2147483648
    %v2189 = vmul.f32 %v2188, 1.442695
    %v2190 = vpow.pop %v2189
    %v2191 = vadd.f32 %v2190, 1.0
    %v2192 = vrcp.pop %v2191
    %v2193 = vmul.f32 1.0, %v2192
    %v2194 = vadd.f32 %v2169, %v485
    %2196 = vrot.lane.b32.xlu0 %v2194, 32
    %v2197 = vpop.permute.xlu0 %2196
    %v2199 = vmul.f32 %v2182, %v2197
    %v2200 = vadd.f32 %v1864, %v2199
    %v2201 = vtanh.pop %v2200
    %v2202 = vsub.f32 1.0, %v2193
    %v2203 = vmul.f32 %v2202, %v2201
    %2204 = vrot.lane.b32.xlu0 %v2035, 16
    %v2205 = vpop.permute.xlu0 %2204
    %v2207 = vmul.f32 %v2193, %v2205
    %v2208 = vadd.f32 %v2203, %v2207
    %v2209 = vpack.c.bf16 %v2208, %v2208
    %2211 = vrot.lane.b32.xlu0 %v2209, 96
    %v2212 = vpop.permute.xlu0 %2211
    %v2214 = vsel %vm290, %v2212, 0
    %2216 = vmatprep.subr.bf16.mxu0 0
    %2217 = vmatpush1.bf16.msra.mxu0 %v2214
    %2218 = vmatprep.subr.bf16.mxu0 0
    %2219 = vmatpush1.bf16.msra.mxu0 0
    %2220 = vmatprep.subr.bf16.mxu0 0
    %2221 = vmatpush1.bf16.msra.mxu0 0
    %2222 = vmatprep.subr.bf16.mxu0 0
    %2223 = vmatpush1.bf16.msra.mxu0 0
    %2224 = vmatprep.subr.bf16.mxu0 0
    %2225 = vmatpush1.bf16.msra.mxu0 0
    %2226 = vmatprep.subr.bf16.mxu0 0
    %2227 = vmatpush1.bf16.msra.mxu0 0
    %2228 = vmatprep.subr.bf16.mxu0 0
    %2229 = vmatpush1.bf16.msra.mxu0 0
    %2230 = vmatprep.subr.bf16.mxu0 0
    %2231 = vmatpush1.bf16.msra.mxu0 0
    %2232 = vmatprep.subr.bf16.mxu0 0
    %2233 = vmatpush1.bf16.msra.mxu0 0
    %2234 = vmatprep.subr.bf16.mxu0 0
    %2235 = vmatpush1.bf16.msra.mxu0 0
    %2236 = vmatprep.subr.bf16.mxu0 0
    %2237 = vmatpush1.bf16.msra.mxu0 0
    %2238 = vmatprep.subr.bf16.mxu0 0
    %2239 = vmatpush1.bf16.msra.mxu0 0
    %2240 = vmatprep.subr.bf16.mxu0 0
    %2241 = vmatpush1.bf16.msra.mxu0 0
    %2242 = vmatprep.subr.bf16.mxu0 0
    %2243 = vmatpush1.bf16.msra.mxu0 0
    %2244 = vmatprep.subr.bf16.mxu0 0
    %2245 = vmatpush1.bf16.msra.mxu0 0
    %2246 = vmatprep.subr.bf16.mxu0 0
    %2247 = vmatpush1.bf16.msra.mxu0 0
    %2248 = vmatprep.mubr.bf16.mxu0 0
    %2249 = vmatmul.mubr.bf16.gmra.mrb[0].mxu0 %v502
    %v2250 = vpop.f32.mrb[0].mxu0
    %v2251 = vadd.f32 %v499, %v2250
    %v2252 = vpop.f32.mrb[0].mxu0
    %v2253 = vpop.f32.mrb[0].mxu0
    %v2254 = vpop.f32.mrb[0].mxu0
    %2255 = vdwg.mxu0
    %2257 = vrot.lane.b32.xlu0 %v2251, 32
    %v2258 = vpop.permute.xlu0 %2257
    %2260 = vst.msk [vmem:[#allocation2 + $0x8] sm:$0xff] %vm892, %v2258
    %2262 = vrot.lane.b32.xlu0 %v2208, 96
    %v2263 = vpop.permute.xlu0 %2262
    %2265 = vmatprep.subr.mxu0 0.0
    %2266 = vmatpush1.msra.mxu0 %v2263
    %2267 = vmatprep.subr.mxu0 0.0
    %2268 = vmatpush1.msra.mxu0 0.0
    %2269 = vmatprep.subr.mxu0 0.0
    %2270 = vmatpush1.msra.mxu0 0.0
    %2271 = vmatprep.subr.mxu0 0.0
    %2272 = vmatpush1.msra.mxu0 0.0
    %2273 = vmatprep.subr.mxu0 0.0
    %2274 = vmatpush1.msra.mxu0 0.0
    %2275 = vmatprep.subr.mxu0 0.0
    %2276 = vmatpush1.msra.mxu0 0.0
    %2277 = vmatprep.subr.mxu0 0.0
    %2278 = vmatpush1.msra.mxu0 0.0
    %2279 = vmatprep.subr.mxu0 0.0
    %2280 = vmatpush1.msra.mxu0 0.0
    %2281 = vmatprep.subr.mxu0 0.0
    %2282 = vmatpush1.msra.mxu0 0.0
    %2283 = vmatprep.subr.mxu0 0.0
    %2284 = vmatpush1.msra.mxu0 0.0
    %2285 = vmatprep.subr.mxu0 0.0
    %2286 = vmatpush1.msra.mxu0 0.0
    %2287 = vmatprep.subr.mxu0 0.0
    %2288 = vmatpush1.msra.mxu0 0.0
    %2289 = vmatprep.subr.mxu0 0.0
    %2290 = vmatpush1.msra.mxu0 0.0
    %2291 = vmatprep.subr.mxu0 0.0
    %2292 = vmatpush1.msra.mxu0 0.0
    %2293 = vmatprep.subr.mxu0 0.0
    %2294 = vmatpush1.msra.mxu0 0.0
    %2295 = vmatprep.subr.mxu0 0.0
    %2296 = vmatpush1.msra.mxu0 0.0
    %2297 = vmatprep.subr.mxu0 0.0
    %2298 = vmatpush1.msra.mxu0 0.0
    %2299 = vmatprep.subr.mxu0 0.0
    %2300 = vmatpush1.msra.mxu0 0.0
    %2301 = vmatprep.subr.mxu0 0.0
    %2302 = vmatpush1.msra.mxu0 0.0
    %2303 = vmatprep.subr.mxu0 0.0
    %2304 = vmatpush1.msra.mxu0 0.0
    %2305 = vmatprep.subr.mxu0 0.0
    %2306 = vmatpush1.msra.mxu0 0.0
    %2307 = vmatprep.subr.mxu0 0.0
    %2308 = vmatpush1.msra.mxu0 0.0
    %2309 = vmatprep.subr.mxu0 0.0
    %2310 = vmatpush1.msra.mxu0 0.0
    %2311 = vmatprep.subr.mxu0 0.0
    %2312 = vmatpush1.msra.mxu0 0.0
    %2313 = vmatprep.subr.mxu0 0.0
    %2314 = vmatpush1.msra.mxu0 0.0
    %2315 = vmatprep.subr.mxu0 0.0
    %2316 = vmatpush1.msra.mxu0 0.0
    %2317 = vmatprep.subr.mxu0 0.0
    %2318 = vmatpush1.msra.mxu0 0.0
    %2319 = vmatprep.subr.mxu0 0.0
    %2320 = vmatpush1.msra.mxu0 0.0
    %2321 = vmatprep.subr.mxu0 0.0
    %2322 = vmatpush1.msra.mxu0 0.0
    %2323 = vmatprep.subr.mxu0 0.0
    %2324 = vmatpush1.msra.mxu0 0.0
    %2325 = vmatprep.subr.mxu0 0.0
    %2326 = vmatpush1.msra.mxu0 0.0
    %2327 = vmatprep.subr.mxu0 0.0
    %2328 = vmatpush1.msra.mxu0 0.0
    %2329 = vmatprep.mubr.f32.mxu0 0.0
    %2330 = vmatmul.mubr.f32.gmra.mrb[0].mxu0 %v362
    %v2331 = vpop.f32.mrb[0].mxu0
    %v2332 = vadd.f32 0.0, %v2331
    %v2333 = vpop.f32.mrb[0].mxu0
    %2334 = vmatprep.mubr.f32.mxu0 0.0
    %2335 = vmatmul.mubr.f32.gmra.mrb[0].mxu0 %v365
    %v2336 = vpop.f32.mrb[0].mxu0
    %v2337 = vadd.f32 0.0, %v2336
    %v2338 = vpop.f32.mrb[0].mxu0
    %2339 = vmatprep.mubr.f32.mxu0 0.0
    %2340 = vmatmul.mubr.f32.gmra.mrb[0].mxu0 %v368
    %v2341 = vpop.f32.mrb[0].mxu0
    %v2342 = vadd.f32 0.0, %v2341
    %v2343 = vpop.f32.mrb[0].mxu0
    %2344 = vdwg.mxu0
    %2346 = vrot.lane.b32.xlu0 %v2332, 48
    %v2347 = vpop.permute.xlu0 %2346
    %v2349 = vadd.f32 %v1848, %v2347
    %v2350 = vxor.u32 %v2349, 2147483648
    %v2351 = vmul.f32 %v2350, 1.442695
    %v2352 = vpow.pop %v2351
    %v2353 = vadd.f32 %v2352, 1.0
    %v2354 = vrcp.pop %v2353
    %v2355 = vmul.f32 1.0, %v2354
    %2357 = vrot.lane.b32.xlu0 %v2337, 48
    %v2358 = vpop.permute.xlu0 %2357
    %v2360 = vadd.f32 %v1856, %v2358
    %v2361 = vxor.u32 %v2360, 2147483648
    %v2362 = vmul.f32 %v2361, 1.442695
    %v2363 = vpow.pop %v2362
    %v2364 = vadd.f32 %v2363, 1.0
    %v2365 = vrcp.pop %v2364
    %v2366 = vmul.f32 1.0, %v2365
    %v2367 = vadd.f32 %v2342, %v485
    %2369 = vrot.lane.b32.xlu0 %v2367, 48
    %v2370 = vpop.permute.xlu0 %2369
    %v2372 = vmul.f32 %v2355, %v2370
    %v2373 = vadd.f32 %v1864, %v2372
    %v2374 = vtanh.pop %v2373
    %v2375 = vsub.f32 1.0, %v2366
    %v2376 = vmul.f32 %v2375, %v2374
    %2377 = vrot.lane.b32.xlu0 %v2208, 16
    %v2378 = vpop.permute.xlu0 %2377
    %v2380 = vmul.f32 %v2366, %v2378
    %v2381 = vadd.f32 %v2376, %v2380
    %v2382 = vpack.c.bf16 %v2381, %v2381
    %2384 = vrot.lane.b32.xlu0 %v2382, 80
    %v2385 = vpop.permute.xlu0 %2384
    %v2387 = vsel %vm290, %v2385, 0
    %2389 = vmatprep.subr.bf16.mxu0 0
    %2390 = vmatpush1.bf16.msra.mxu0 %v2387
    %2391 = vmatprep.subr.bf16.mxu0 0
    %2392 = vmatpush1.bf16.msra.mxu0 0
    %2393 = vmatprep.subr.bf16.mxu0 0
    %2394 = vmatpush1.bf16.msra.mxu0 0
    %2395 = vmatprep.subr.bf16.mxu0 0
    %2396 = vmatpush1.bf16.msra.mxu0 0
    %2397 = vmatprep.subr.bf16.mxu0 0
    %2398 = vmatpush1.bf16.msra.mxu0 0
    %2399 = vmatprep.subr.bf16.mxu0 0
    %2400 = vmatpush1.bf16.msra.mxu0 0
    %2401 = vmatprep.subr.bf16.mxu0 0
    %2402 = vmatpush1.bf16.msra.mxu0 0
    %2403 = vmatprep.subr.bf16.mxu0 0
    %2404 = vmatpush1.bf16.msra.mxu0 0
    %2405 = vmatprep.subr.bf16.mxu0 0
    %2406 = vmatpush1.bf16.msra.mxu0 0
    %2407 = vmatprep.subr.bf16.mxu0 0
    %2408 = vmatpush1.bf16.msra.mxu0 0
    %2409 = vmatprep.subr.bf16.mxu0 0
    %2410 = vmatpush1.bf16.msra.mxu0 0
    %2411 = vmatprep.subr.bf16.mxu0 0
    %2412 = vmatpush1.bf16.msra.mxu0 0
    %2413 = vmatprep.subr.bf16.mxu0 0
    %2414 = vmatpush1.bf16.msra.mxu0 0
    %2415 = vmatprep.subr.bf16.mxu0 0
    %2416 = vmatpush1.bf16.msra.mxu0 0
    %2417 = vmatprep.subr.bf16.mxu0 0
    %2418 = vmatpush1.bf16.msra.mxu0 0
    %2419 = vmatprep.subr.bf16.mxu0 0
    %2420 = vmatpush1.bf16.msra.mxu0 0
    %2421 = vmatprep.mubr.bf16.mxu0 0
    %2422 = vmatmul.mubr.bf16.gmra.mrb[0].mxu0 %v502
    %v2423 = vpop.f32.mrb[0].mxu0
    %v2424 = vadd.f32 %v499, %v2423
    %v2425 = vpop.f32.mrb[0].mxu0
    %v2426 = vpop.f32.mrb[0].mxu0
    %v2427 = vpop.f32.mrb[0].mxu0
    %2428 = vdwg.mxu0
    %2430 = vrot.lane.b32.xlu0 %v2424, 48
    %v2431 = vpop.permute.xlu0 %2430
    %2433 = vst.msk [vmem:[#allocation2 + $0x8] sm:$0xff] %vm1066, %v2431
    // Predicated region
    $region38: #{tpu_custom_call.1} parent=1 // pred_check
      _
    $region39: #{tpu_custom_call.1} parent=1 // pred_check_branch
      %2435 = sbr.rel (0) target = $region41
    $region40: #{tpu_custom_call.1} parent=1 // pred_region
      %s2437 = ssub.s32 256, 256
      %2438 = vsyncadd [#allocation3], %s2437
      %s2440 = sshll.u32 [#allocation2], 4
      %s2441 = int_to_ptr.vmem [resolvable:$true] %s2440
      %2443 = dma.vmem_to_hbm [thread:$0]  %s2441, 256, %s9, [#allocation3]
    $region41: #{tpu_custom_call.1} parent=1 // pred_fallthru
      _
    // Predicated region
    $region42: #{tpu_custom_call.1} parent=1 // pred_check
      _
    $region43: #{tpu_custom_call.1} parent=1 // pred_check_branch
      %2445 = sbr.rel (0) target = $region45
    $region44: #{tpu_custom_call.1} parent=1 // pred_region
      %2446 = dma.done [#allocation3], 256
    $region45: #{tpu_custom_call.1} parent=1 // pred_fallthru
      _
    %2447 = vsyncpa [#allocation3], 1

</llo_original>
